<compile_context>
chip_gen: v6e
topology: v6e:2x2x1
jax: 0.10.0
libtpu: 0.0.40
codegen_flags: <defaults>
</compile_context>

<pallas_src>
import functools
import math

import jax
import jax.numpy as jnp
from jax.experimental import pallas as pl
from jax.experimental.pallas import tpu as pltpu

F32 = jnp.float32
BF16 = jnp.bfloat16
NEG_INF = -1e18          # matches torch masked_fill value in MultiHeadedAttention
LN_EPS = 1e-6            # module uses nn.LayerNorm(d_model, eps=1e-06)


# --------------------------------------------------------------------------
# helpers
# --------------------------------------------------------------------------

def _round_up(n, m):
    return ((n + m - 1) // m) * m


def _row_tiling(n, target=512, lower=256):
    """Pick (row_tile, padded_n).  Tiles are multiples of 8 in [lower, target]
    (or the full n when n <= target); rows are padded when nothing divides."""
    if n <= target:
        return n, n
    for t in range(target, lower - 1, -8):
        if n % t == 0:
            return t, n
    return lower, _round_up(n, lower)


def _seq_tile(t, target=256):
    """Query-sequence tile for attention (divisor of t, multiple of 8, or t)."""
    if t <= target:
        return t
    for tt in range(target, 7, -8):
        if t % tt == 0:
            return tt
    return t


def _col_tiling(n, target=1024, step=128):
    """d_ff chunk (divisor of n, multiple of 128, or full n)."""
    if n <= target:
        return n
    for t in range(target, step - 1, -step):
        if n % t == 0:
            return t
    return n


def _pad_rows(x, n_pad):
    if n_pad == x.shape[0]:
        return x
    return jnp.pad(x, ((0, n_pad - x.shape[0]), (0, 0)))


def _unpad_rows(x, n):
    return x if x.shape[0] == n else x[:n]


def _layer_norm_f32(x, g, b):
    x = x.astype(F32)
    mean = jnp.mean(x, axis=-1, keepdims=True)
    var = jnp.mean((x - mean) ** 2, axis=-1, keepdims=True)
    return (x - mean) * jax.lax.rsqrt(var + LN_EPS) * g + b


def _bf16(x):
    return x.astype(BF16)


# --------------------------------------------------------------------------
# fused LN + projection kernels (row-tiled, bf16 weights, bf16 activations out)
# --------------------------------------------------------------------------

def _ln_qkv_kernel(x_ref, g_ref, b_ref, w_ref, bias_ref, q_ref, kv_ref):
    xn = _layer_norm_f32(x_ref[...], g_ref[...], b_ref[...])
    y = jnp.dot(_bf16(xn), w_ref[...],
                preferred_element_type=jnp.float32) + bias_ref[...]
    D = q_ref.shape[-1]
    q_ref[...] = y[:, :D].astype(q_ref.dtype)       # Q (scale already folded in)
    kv_ref[...] = y[:, D:].astype(kv_ref.dtype)     # packed K|V


def ln_qkv(x2d, g, b, w_bf16, bias):
    """LayerNorm(x) @ Wqkv + b  ->  (q bf16 (N,D), kv bf16 (N,2D))."""
    N, Din = x2d.shape
    D = w_bf16.shape[1] // 3
    tile, n_pad = _row_tiling(N)
    xp = _pad_rows(x2d, n_pad)
    q, kv = pl.pallas_call(
        _ln_qkv_kernel,
        out_shape=(jax.ShapeDtypeStruct((n_pad, D), BF16),
                   jax.ShapeDtypeStruct((n_pad, 2 * D), BF16)),
        grid=(n_pad // tile,),
        in_specs=[pl.BlockSpec((tile, Din), lambda i: (i, 0)),
                  pl.BlockSpec((1, Din), lambda i: (0, 0)),
                  pl.BlockSpec((1, Din), lambda i: (0, 0)),
                  pl.BlockSpec((Din, 3 * D), lambda i: (0, 0)),
                  pl.BlockSpec((1, 3 * D), lambda i: (0, 0))],
        out_specs=(pl.BlockSpec((tile, D), lambda i: (i, 0)),
                   pl.BlockSpec((tile, 2 * D), lambda i: (i, 0))),
        compiler_params=pltpu.CompilerParams(dimension_semantics=("parallel",)),
        cost_estimate=pl.CostEstimate(
            flops=2 * N * Din * 3 * D, transcendentals=0,
            bytes_accessed=int(4 * N * Din + 2 * Din * 3 * D + 2 * N * 3 * D)),
    )(xp, g.reshape(1, Din), b.reshape(1, Din), w_bf16, bias.reshape(1, 3 * D))
    return _unpad_rows(q, N), _unpad_rows(kv, N)


def _ln_q_dual_kernel(x_ref, g_ref, b_ref, w_ref, bias_ref, xn_ref, q_ref):
    xn = _layer_norm_f32(x_ref[...], g_ref[...], b_ref[...])
    xn_ref[...] = xn                                  # query_norm (module output)
    q_ref[...] = (jnp.dot(_bf16(xn), w_ref[...],
                          preferred_element_type=jnp.float32)
                  + bias_ref[...]).astype(q_ref.dtype)


def ln_q_dual(x2d, g, b, w_bf16, bias):
    """Returns (LayerNorm(x) f32, LayerNorm(x) @ Wq + bq  bf16)."""
    N, Din = x2d.shape
    Dout = w_bf16.shape[1]
    tile, n_pad = _row_tiling(N)
    xp = _pad_rows(x2d, n_pad)
    xn, q = pl.pallas_call(
        _ln_q_dual_kernel,
        out_shape=(jax.ShapeDtypeStruct((n_pad, Din), F32),
                   jax.ShapeDtypeStruct((n_pad, Dout), BF16)),
        grid=(n_pad // tile,),
        in_specs=[pl.BlockSpec((tile, Din), lambda i: (i, 0)),
                  pl.BlockSpec((1, Din), lambda i: (0, 0)),
                  pl.BlockSpec((1, Din), lambda i: (0, 0)),
                  pl.BlockSpec((Din, Dout), lambda i: (0, 0)),
                  pl.BlockSpec((1, Dout), lambda i: (0, 0))],
        out_specs=(pl.BlockSpec((tile, Din), lambda i: (i, 0)),
                   pl.BlockSpec((tile, Dout), lambda i: (i, 0))),
        compiler_params=pltpu.CompilerParams(dimension_semantics=("parallel",)),
        cost_estimate=pl.CostEstimate(
            flops=2 * N * Din * Dout, transcendentals=0,
            bytes_accessed=int(4 * 2 * N * Din + 2 * Din * Dout + 2 * N * Dout)),
    )(xp, g.reshape(1, Din), b.reshape(1, Din), w_bf16, bias.reshape(1, Dout))
    return _unpad_rows(xn, N), _unpad_rows(q, N)


# --------------------------------------------------------------------------
# multi-head attention core (lane-dense heads, scratch-slice writes)
# --------------------------------------------------------------------------

def _mha_heads(q, k, v, bias, heads, ctx_ref):
    """q:(Tq,D) bf16 (scale folded), k/v:(Tk,D) bf16, bias:(1|Tq,Tk) f32 additive.
    Writes the (Tq, D) f32 lane-dense context into ctx_ref (VMEM scratch)."""
    Tq, D = q.shape
    dh = D // heads
    for h in range(heads):                            # heads is small & static
        lo = h * dh
        s = jax.lax.dot_general(q[:, lo:lo + dh], k[:, lo:lo + dh],
                                (((1,), (1,)), ((), ())),
                                preferred_element_type=jnp.float32)   # (Tq, Tk)
        s = s + bias
        s = s - jnp.max(s, axis=-1, keepdims=True)    # stable softmax (f32)
        p = jnp.exp(s)
        p = p * pl.reciprocal(jnp.sum(p, axis=-1, keepdims=True), approx=True)
        ctx_ref[:, lo:lo + dh] = jnp.dot(_bf16(p), v[:, lo:lo + dh],
                                         preferred_element_type=jnp.float32)


# --------------------------------------------------------------------------
# masked self-attention: per (batch, Tq-tile), fused Wo + residual
# --------------------------------------------------------------------------

def _self_mha_kernel(q_ref, kv_ref, m_ref, res_ref, wo_ref, bo_ref, o_ref,
                     ctx_scr, *, heads):
    tq, D = q_ref.shape
    T = kv_ref.shape[0]
    row0 = pl.program_id(1) * tq
    row = jax.lax.broadcasted_iota(jnp.int32, (tq, T), 0) + row0
    col = jax.lax.broadcasted_iota(jnp.int32, (tq, T), 1)
    masked = jnp.logical_or(m_ref[...] > 0, col > row)          # pad | future
    bias = jnp.where(masked, NEG_INF, 0.0).astype(F32)          # additive mask

    _mha_heads(q_ref[...], kv_ref[:, :D], kv_ref[:, D:], bias, heads, ctx_scr)
    out = jnp.dot(_bf16(ctx_scr[...]), wo_ref[...],
                  preferred_element_type=jnp.float32) + bo_ref[...]
    o_ref[...] = out + res_ref[...]                             # fused residual


def self_attention(q, kv, residual, pad_mask, wo_bf16, bo, heads):
    """q:(B,T,D) bf16, kv:(B,T,2D) bf16, residual:(B,T,D) f32, pad_mask:(B,1,T)."""
    B, T, D = q.shape
    tq = _seq_tile(T)
    nq = T // tq
    dh = D // heads
    kern = functools.partial(_self_mha_kernel, heads=heads)
    flops = B * (heads * 4 * T * T * dh + 2 * T * D * D)
    return pl.pallas_call(
        kern,
        out_shape=jax.ShapeDtypeStruct((B, T, D), F32),
        grid=(B, nq),
        in_specs=[pl.BlockSpec((None, tq, D), lambda b, i: (b, i, 0)),
                  pl.BlockSpec((None, T, 2 * D), lambda b, i: (b, 0, 0)),
                  pl.BlockSpec((None, 1, T), lambda b, i: (b, 0, 0)),
                  pl.BlockSpec((None, tq, D), lambda b, i: (b, i, 0)),
                  pl.BlockSpec((D, D), lambda b, i: (0, 0)),
                  pl.BlockSpec((1, D), lambda b, i: (0, 0))],
        out_specs=pl.BlockSpec((None, tq, D), lambda b, i: (b, i, 0)),
        scratch_shapes=[pltpu.VMEM((tq, D), F32)],
        compiler_params=pltpu.CompilerParams(
            dimension_semantics=("parallel", "parallel")),
        cost_estimate=pl.CostEstimate(
            flops=flops, transcendentals=B * heads * T * T,
            bytes_accessed=int(2 * B * T * 3 * D + 4 * 2 * B * T * D + 2 * D * D)),
    )(q, kv, pad_mask, residual, wo_bf16, bo.reshape(1, D))


# --------------------------------------------------------------------------
# dual cross-attention: fused ctx K|V projection + both banks + Wo
#                       + his/cur -> hc projection + residual  (per batch)
# --------------------------------------------------------------------------

def _cross_mha_kernel(q_ref, memh_ref, memc_ref, mh_ref, mc_ref, res_ref,
                      wkv_ref, bkv_ref, wo_ref, bo_ref, w1_ref, w2_ref, hcb_ref,
                      his_ref, cur_ref, mid_ref, ctx_scr, *, heads):
    D = q_ref.shape[-1]
    q = q_ref[...]                                   # (T, D) bf16, scale folded
    wkv, bkv = wkv_ref[...], bkv_ref[...]            # bf16 / f32
    wo, bo = wo_ref[...], bo_ref[...]

    def bank_attention(mem_ref, m_ref):
        # fused K|V projection of this batch's memory bank (no HBM round trip)
        kv = jnp.dot(_bf16(mem_ref[...]), wkv,
                     preferred_element_type=jnp.float32) + bkv
        kv = _bf16(kv)
        bias = jnp.where(m_ref[...] > 0, NEG_INF, 0.0).astype(F32)   # (1, L)
        _mha_heads(q, kv[:, :D], kv[:, D:], bias, heads, ctx_scr)
        return jnp.dot(_bf16(ctx_scr[...]), wo,
                       preferred_element_type=jnp.float32) + bo

    his = bank_attention(memh_ref, mh_ref)
    his_ref[...] = his
    cur = bank_attention(memc_ref, mc_ref)           # scratch reused
    cur_ref[...] = cur
    # his_cur_feed_forward on the (unmaterialized) concat: split weight halves.
    mid = (jnp.dot(_bf16(his), w1_ref[...], preferred_element_type=jnp.float32)
           + jnp.dot(_bf16(cur), w2_ref[...], preferred_element_type=jnp.float32)
           + hcb_ref[...])
    mid_ref[...] = mid + res_ref[...]                # fused residual (+query)


def cross_attention(q, mem_his, mem_cur, his_pad, cur_pad, residual,
                    wkv_bf16, bkv, wo_bf16, bo, hc_w1, hc_w2, hc_b, heads):
    B, T, D = q.shape
    Lh = mem_his.shape[1]
    Lc = mem_cur.shape[1]
    dh = D // heads
    kern = functools.partial(_cross_mha_kernel, heads=heads)
    flops = B * (4 * (Lh + Lc) * D * D + 4 * T * (Lh + Lc) * D + 8 * T * D * D)
    sds = jax.ShapeDtypeStruct((B, T, D), F32)
    # TODO(synk): for very long memory banks, stream K|V flash-style over an
    # inner grid axis instead of holding the projected (L, 2D) tile resident.
    return pl.pallas_call(
        kern,
        out_shape=(sds, sds, sds),
        grid=(B,),
        in_specs=[pl.BlockSpec((None, T, D), lambda b: (b, 0, 0)),
                  pl.BlockSpec((None, Lh, D), lambda b: (b, 0, 0)),
                  pl.BlockSpec((None, Lc, D), lambda b: (b, 0, 0)),
                  pl.BlockSpec((None, 1, Lh), lambda b: (b, 0, 0)),
                  pl.BlockSpec((None, 1, Lc), lambda b: (b, 0, 0)),
                  pl.BlockSpec((None, T, D), lambda b: (b, 0, 0)),
                  pl.BlockSpec((D, 2 * D), lambda b: (0, 0)),
                  pl.BlockSpec((1, 2 * D), lambda b: (0, 0)),
                  pl.BlockSpec((D, D), lambda b: (0, 0)),
                  pl.BlockSpec((1, D), lambda b: (0, 0)),
                  pl.BlockSpec((D, D), lambda b: (0, 0)),
                  pl.BlockSpec((D, D), lambda b: (0, 0)),
                  pl.BlockSpec((1, D), lambda b: (0, 0))],
        out_specs=(pl.BlockSpec((None, T, D), lambda b: (b, 0, 0)),
                   pl.BlockSpec((None, T, D), lambda b: (b, 0, 0)),
                   pl.BlockSpec((None, T, D), lambda b: (b, 0, 0))),
        scratch_shapes=[pltpu.VMEM((T, D), F32)],
        compiler_params=pltpu.CompilerParams(
            dimension_semantics=("parallel",),
            vmem_limit_bytes=40 * 1024 * 1024),
        cost_estimate=pl.CostEstimate(
            flops=flops, transcendentals=B * heads * T * (Lh + Lc),
            bytes_accessed=int(4 * B * (5 * T * D + (Lh + Lc) * D) + 2 * 5 * D * D)),
    )(q, mem_his, mem_cur, his_pad, cur_pad, residual,
      wkv_bf16, bkv.reshape(1, 2 * D), wo_bf16, bo.reshape(1, D),
      hc_w1, hc_w2, hc_b.reshape(1, D))


# --------------------------------------------------------------------------
# position-wise FFN: LN -> W1 -> relu -> W2 -> +residual, with d_ff chunking
# --------------------------------------------------------------------------

def _ffn_kernel(x_ref, g_ref, b_ref, w1_ref, b1_ref, w2_ref, b2_ref, o_ref,
                xn_scr, acc_scr):
    k = pl.program_id(1)

    @pl.when(k == 0)
    def _():
        x = x_ref[...]
        xn_scr[...] = _bf16(_layer_norm_f32(x, g_ref[...], b_ref[...]))
        acc_scr[...] = x + b2_ref[...]               # residual + final bias once

    h = jnp.dot(xn_scr[...], w1_ref[...],
                preferred_element_type=jnp.float32) + b1_ref[...]
    h = jnp.maximum(h, 0.0)                          # relu (f32)
    acc_scr[...] += jnp.dot(_bf16(h), w2_ref[...],
                            preferred_element_type=jnp.float32)

    @pl.when(k == pl.num_programs(1) - 1)
    def _():
        o_ref[...] = acc_scr[...]


def feed_forward(x2d, p):
    N, D = x2d.shape
    DFF = p["ffn_w1"].shape[1]
    tile, n_pad = _row_tiling(N)
    dff_t = _col_tiling(DFF)
    nk = DFF // dff_t
    xp = _pad_rows(x2d, n_pad)
    out = pl.pallas_call(
        _ffn_kernel,
        out_shape=jax.ShapeDtypeStruct((n_pad, D), F32),
        grid=(n_pad // tile, nk),
        in_specs=[pl.BlockSpec((tile, D), lambda i, k: (i, 0)),
                  pl.BlockSpec((1, D), lambda i, k: (0, 0)),
                  pl.BlockSpec((1, D), lambda i, k: (0, 0)),
                  pl.BlockSpec((D, dff_t), lambda i, k: (0, k)),
                  pl.BlockSpec((1, dff_t), lambda i, k: (0, k)),
                  pl.BlockSpec((dff_t, D), lambda i, k: (k, 0)),
                  pl.BlockSpec((1, D), lambda i, k: (0, 0))],
        out_specs=pl.BlockSpec((tile, D), lambda i, k: (i, 0)),
        scratch_shapes=[pltpu.VMEM((tile, D), BF16),
                        pltpu.VMEM((tile, D), F32)],
        compiler_params=pltpu.CompilerParams(
            dimension_semantics=("parallel", "arbitrary")),
        cost_estimate=pl.CostEstimate(
            flops=4 * N * D * DFF, transcendentals=0,
            bytes_accessed=int(4 * 2 * N * D + 2 * 2 * D * DFF)),
    )(xp, p["ffn_ln_g"].reshape(1, D), p["ffn_ln_b"].reshape(1, D),
      p["ffn_w1"], p["ffn_b1"].reshape(1, DFF),
      p["ffn_w2"], p["ffn_b2"].reshape(1, D))
    return _unpad_rows(out, N)


# --------------------------------------------------------------------------
# decoder layer forward (eval mode)
# --------------------------------------------------------------------------

def transformer_decoder_layer(params, inputs, history_memory_bank,
                              current_memory_bank, history_pad_mask,
                              current_pad_mask, tgt_pad_mask, heads):
    # TODO(synk): layer_cache / stepwise decoding (step != None), the
    # full_context_alignment second pass and the unused layer_norm_3 are not
    # exercised; dropout is identity (eval mode).
    B, T, D = inputs.shape

    tgt_pad = tgt_pad_mask.astype(jnp.int32)       # (B, 1, T)   True/1 = pad
    his_pad = history_pad_mask.astype(jnp.int32)   # (B, 1, Lh)
    cur_pad = current_pad_mask.astype(jnp.int32)   # (B, 1, Lc)

    # --- self-attention: LN1 + packed QKV (bf16 out), per-(batch,Tq) MHA + Wo
    q_self, kv_self = ln_qkv(inputs.reshape(B * T, D),
                             params["ln1_g"], params["ln1_b"],
                             params["self_wqkv"], params["self_bqkv"])
    query = self_attention(q_self.reshape(B, T, D), kv_self.reshape(B, T, 2 * D),
                           inputs, tgt_pad,
                           params["self_wo"], params["self_bo"], heads)

    # --- cross-attention: LN2 + shared ctx-Q once (query_norm is a module output)
    query_norm2d, q_ctx2d = ln_q_dual(query.reshape(B * T, D),
                                      params["ln2_g"], params["ln2_b"],
                                      params["ctx_wq"], params["ctx_bq"])
    query_norm = query_norm2d.reshape(B, T, D)
    q_ctx = q_ctx2d.reshape(B, T, D)

    his_mid, cur_mid, ffn_in = cross_attention(
        q_ctx, history_memory_bank, current_memory_bank, his_pad, cur_pad, query,
        params["ctx_wkv"], params["ctx_bkv"], params["ctx_wo"], params["ctx_bo"],
        params["hc_w1"], params["hc_w2"], params["hc_b"], heads)

    # --- position-wise FFN (LN + W1 + relu + W2 + residual)
    output = feed_forward(ffn_in.reshape(B * T, D), params).reshape(B, T, D)

    return output, query_norm, his_mid, cur_mid


# --------------------------------------------------------------------------
# deterministic synthetic parameters (torch-like layout) + packing
# --------------------------------------------------------------------------

def _attn_params(key, d_model):
    ks = jax.random.split(key, 4)
    w = lambda k, s: jax.random.normal(k, s, F32) * 0.02
    z = lambda: jnp.zeros((d_model,), F32)
    return {"wq": w(ks[0], (d_model, d_model)), "bq": z(),
            "wk": w(ks[1], (d_model, d_model)), "bk": z(),
            "wv": w(ks[2], (d_model, d_model)), "bv": z(),
            "wo": w(ks[3], (d_model, d_model)), "bo": z()}


def init_params(key, d_model, d_ff):
    ks = jax.random.split(key, 6)
    w = lambda k, s: jax.random.normal(k, s, F32) * 0.02
    return {
        "self_attn": _attn_params(ks[0], d_model),
        "ctx_attn": _attn_params(ks[1], d_model),
        "hc_w": w(ks[2], (2 * d_model, d_model)),
        "hc_b": jnp.zeros((d_model,), F32),
        "ln1_g": jnp.ones((d_model,), F32), "ln1_b": jnp.zeros((d_model,), F32),
        "ln2_g": jnp.ones((d_model,), F32), "ln2_b": jnp.zeros((d_model,), F32),
        "ffn_ln_g": jnp.ones((d_model,), F32), "ffn_ln_b": jnp.zeros((d_model,), F32),
        "ffn_w1": w(ks[3], (d_model, d_ff)), "ffn_b1": jnp.zeros((d_ff,), F32),
        "ffn_w2": w(ks[4], (d_ff, d_model)), "ffn_b2": jnp.zeros((d_model,), F32),
    }


def pack_params(p, heads):
    """One-time packing: fold 1/sqrt(d_head) into Q weights/biases, pack QKV /
    KV, pre-cast all weight matrices to bf16 (biases stay f32)."""
    D = p["ln1_g"].shape[0]
    scale = 1.0 / math.sqrt(D // heads)
    sa, ca = p["self_attn"], p["ctx_attn"]
    return {
        "ln1_g": p["ln1_g"], "ln1_b": p["ln1_b"],
        "self_wqkv": jnp.concatenate([sa["wq"] * scale, sa["wk"], sa["wv"]],
                                     axis=1).astype(BF16),
        "self_bqkv": jnp.concatenate([sa["bq"] * scale, sa["bk"], sa["bv"]]),
        "self_wo": sa["wo"].astype(BF16), "self_bo": sa["bo"],
        "ln2_g": p["ln2_g"], "ln2_b": p["ln2_b"],
        "ctx_wq": (ca["wq"] * scale).astype(BF16), "ctx_bq": ca["bq"] * scale,
        "ctx_wkv": jnp.concatenate([ca["wk"], ca["wv"]], axis=1).astype(BF16),
        "ctx_bkv": jnp.concatenate([ca["bk"], ca["bv"]]),
        "ctx_wo": ca["wo"].astype(BF16), "ctx_bo": ca["bo"],
        "hc_w1": p["hc_w"][:D].astype(BF16), "hc_w2": p["hc_w"][D:].astype(BF16),
        "hc_b": p["hc_b"],
        "ffn_ln_g": p["ffn_ln_g"], "ffn_ln_b": p["ffn_ln_b"],
        "ffn_w1": p["ffn_w1"].astype(BF16), "ffn_b1": p["ffn_b1"],
        "ffn_w2": p["ffn_w2"].astype(BF16), "ffn_b2": p["ffn_b2"],
    }


# --------------------------------------------------------------------------

if __name__ == "__main__":
    B, T, D_MODEL, HEADS, D_FF = 2, 8, 32, 4, 64
    HIS_LEN, CUR_LEN = 16, 8

    root = jax.random.PRNGKey(0)
    kp, ki, kh, kc = jax.random.split(root, 4)

    params = pack_params(init_params(kp, D_MODEL, D_FF), HEADS)

    inputs = jax.random.normal(ki, (B, T, D_MODEL), F32)
    history_memory_bank = jax.random.normal(kh, (B, HIS_LEN, D_MODEL), F32)
    current_memory_bank = jax.random.normal(kc, (B, CUR_LEN, D_MODEL), F32)

    # pad masks: True = padded position (OpenNMT convention)
    tgt_lens = jnp.array([T, T - 2])
    his_lens = jnp.array([HIS_LEN, HIS_LEN - 3])
    cur_lens = jnp.array([CUR_LEN, CUR_LEN - 1])
    tgt_pad_mask = (jnp.arange(T)[None, None, :] >= tgt_lens[:, None, None])
    history_pad_mask = (jnp.arange(HIS_LEN)[None, None, :] >= his_lens[:, None, None])
    current_pad_mask = (jnp.arange(CUR_LEN)[None, None, :] >= cur_lens[:, None, None])

    fwd = jax.jit(functools.partial(transformer_decoder_layer, heads=HEADS))
    output, output_m, his_mid, cur_mid = fwd(
        params, inputs, history_memory_bank, current_memory_bank,
        history_pad_mask, current_pad_mask, tgt_pad_mask)

    jax.block_until_ready((output, output_m, his_mid, cur_mid))

    assert output.shape == (B, T, D_MODEL)
    assert output_m.shape == (B, T, D_MODEL)
    assert his_mid.shape == (B, T, D_MODEL)
    assert cur_mid.shape == (B, T, D_MODEL)
    assert bool(jnp.isfinite(output).all())
    assert bool(jnp.isfinite(output_m).all())
    assert bool(jnp.isfinite(his_mid).all())
    assert bool(jnp.isfinite(cur_mid).all())
    print("KERNEL_OK")
</pallas_src>

<mosaic_0001>
module attributes {stable_mosaic.version = 11 : i64} {
  func.func @_ln_qkv_kernel(%arg0: i32, %arg1: memref<16x32xf32, #tpu.memory_space<vmem>>, %arg2: memref<1x32xf32, #tpu.memory_space<vmem>>, %arg3: memref<1x32xf32, #tpu.memory_space<vmem>>, %arg4: memref<32x96xbf16, #tpu.memory_space<vmem>>, %arg5: memref<1x96xf32, #tpu.memory_space<vmem>>, %arg6: memref<16x32xbf16, #tpu.memory_space<vmem>>, %arg7: memref<16x64xbf16, #tpu.memory_space<vmem>>) attributes {dimension_semantics = [#tpu.dimension_semantics<parallel>], iteration_bounds = array<i64: 1>, scalar_prefetch = 0 : i64, scratch_operands = 0 : i64, tpu.core_type = #tpu.core_type<tc>, window_params = [{transform_indices = @transform_0, window_bounds = array<i64: 16, 32>}, {pipeline_mode = #tpu.pipeline_mode<synchronous>, transform_indices = @transform_1, window_bounds = array<i64: 1, 32>}, {pipeline_mode = #tpu.pipeline_mode<synchronous>, transform_indices = @transform_2, window_bounds = array<i64: 1, 32>}, {pipeline_mode = #tpu.pipeline_mode<synchronous>, transform_indices = @transform_3, window_bounds = array<i64: 32, 96>}, {pipeline_mode = #tpu.pipeline_mode<synchronous>, transform_indices = @transform_4, window_bounds = array<i64: 1, 96>}, {transform_indices = @transform_5, window_bounds = array<i64: 16, 32>}, {transform_indices = @transform_6, window_bounds = array<i64: 16, 64>}]} {
    %c0 = arith.constant 0 : index
    %c0_0 = arith.constant 0 : index
    %0 = vector.load %arg1[%c0, %c0_0] : memref<16x32xf32, #tpu.memory_space<vmem>>, vector<16x32xf32>
    %c0_1 = arith.constant 0 : index
    %c0_2 = arith.constant 0 : index
    %1 = vector.load %arg2[%c0_1, %c0_2] : memref<1x32xf32, #tpu.memory_space<vmem>>, vector<1x32xf32>
    %c0_3 = arith.constant 0 : index
    %c0_4 = arith.constant 0 : index
    %2 = vector.load %arg3[%c0_3, %c0_4] : memref<1x32xf32, #tpu.memory_space<vmem>>, vector<1x32xf32>
    %cst = arith.constant dense<0.000000e+00> : vector<16xf32>
    %3 = vector.multi_reduction <add>, %0, %cst [1] : vector<16x32xf32> to vector<16xf32>
    %4 = vector.shape_cast %3 : vector<16xf32> to vector<16x1xf32>
    %cst_5 = arith.constant 3.200000e+01 : f32
    %5 = vector.broadcast %cst_5 : f32 to vector<16x1xf32>
    %6 = arith.divf %4, %5 : vector<16x1xf32>
    %7 = vector.broadcast %6 : vector<16x1xf32> to vector<16x32xf32>
    %8 = arith.subf %0, %7 : vector<16x32xf32>
    %9 = arith.mulf %8, %8 : vector<16x32xf32>
    %cst_6 = arith.constant dense<0.000000e+00> : vector<16xf32>
    %10 = vector.multi_reduction <add>, %9, %cst_6 [1] : vector<16x32xf32> to vector<16xf32>
    %11 = vector.shape_cast %10 : vector<16xf32> to vector<16x1xf32>
    %cst_7 = arith.constant 3.200000e+01 : f32
    %12 = vector.broadcast %cst_7 : f32 to vector<16x1xf32>
    %13 = arith.divf %11, %12 : vector<16x1xf32>
    %14 = vector.broadcast %6 : vector<16x1xf32> to vector<16x32xf32>
    %15 = arith.subf %0, %14 : vector<16x32xf32>
    %cst_8 = arith.constant 9.99999997E-7 : f32
    %16 = vector.broadcast %cst_8 : f32 to vector<16x1xf32>
    %17 = arith.addf %13, %16 : vector<16x1xf32>
    %18 = math.rsqrt %17 : vector<16x1xf32>
    %19 = vector.broadcast %18 : vector<16x1xf32> to vector<16x32xf32>
    %20 = arith.mulf %15, %19 : vector<16x32xf32>
    %21 = vector.broadcast %1 : vector<1x32xf32> to vector<16x32xf32>
    %22 = arith.mulf %20, %21 : vector<16x32xf32>
    %23 = vector.broadcast %2 : vector<1x32xf32> to vector<16x32xf32>
    %24 = arith.addf %22, %23 : vector<16x32xf32>
    %25 = arith.truncf %24 : vector<16x32xf32> to vector<16x32xbf16>
    %c0_9 = arith.constant 0 : index
    %c0_10 = arith.constant 0 : index
    %26 = vector.load %arg4[%c0_9, %c0_10] : memref<32x96xbf16, #tpu.memory_space<vmem>>, vector<32x96xbf16>
    %cst_11 = arith.constant dense<0.000000e+00> : vector<16x96xf32>
    %27 = tpu.matmul %25, %26, %cst_11 {dimension_numbers = #tpu.dot_dimension_numbers<[1], [0], [0], [1], [0, 0, 1, 1], [], []>} : vector<16x32xbf16>, vector<32x96xbf16>, vector<16x96xf32> -> vector<16x96xf32>
    %c0_12 = arith.constant 0 : index
    %c0_13 = arith.constant 0 : index
    %28 = vector.load %arg5[%c0_12, %c0_13] : memref<1x96xf32, #tpu.memory_space<vmem>>, vector<1x96xf32>
    %29 = vector.broadcast %28 : vector<1x96xf32> to vector<16x96xf32>
    %30 = arith.addf %27, %29 : vector<16x96xf32>
    %31 = vector.extract_strided_slice %30 {offsets = [0, 0], sizes = [16, 32], strides = [1, 1]} : vector<16x96xf32> to vector<16x32xf32>
    %32 = arith.truncf %31 : vector<16x32xf32> to vector<16x32xbf16>
    %c0_14 = arith.constant 0 : index
    %c0_15 = arith.constant 0 : index
    %33 = vector.load %arg6[%c0_14, %c0_15] : memref<16x32xbf16, #tpu.memory_space<vmem>>, vector<16x32xbf16>
    tpu.vector_store %arg6[%c0_14, %c0_15], %32 {strides = array<i32>} : memref<16x32xbf16, #tpu.memory_space<vmem>>, vector<16x32xbf16>,
    %34 = vector.extract_strided_slice %30 {offsets = [0, 32], sizes = [16, 64], strides = [1, 1]} : vector<16x96xf32> to vector<16x64xf32>
    %35 = arith.truncf %34 : vector<16x64xf32> to vector<16x64xbf16>
    %c0_16 = arith.constant 0 : index
    %c0_17 = arith.constant 0 : index
    %36 = vector.load %arg7[%c0_16, %c0_17] : memref<16x64xbf16, #tpu.memory_space<vmem>>, vector<16x64xbf16>
    tpu.vector_store %arg7[%c0_16, %c0_17], %35 {strides = array<i32>} : memref<16x64xbf16, #tpu.memory_space<vmem>>, vector<16x64xbf16>,
    return
  }
  func.func @transform_0(%arg0: i32) -> (i32, i32) {
    %c0_i32 = arith.constant 0 : i32
    %c0_i32_0 = arith.constant 0 : i32
    return %arg0, %c0_i32 : i32, i32
  }
  func.func @transform_1(%arg0: i32) -> (i32, i32) {
    %c0_i32 = arith.constant 0 : i32
    %c0_i32_0 = arith.constant 0 : i32
    %c0_i32_1 = arith.constant 0 : i32
    return %c0_i32, %c0_i32_0 : i32, i32
  }
  func.func @transform_2(%arg0: i32) -> (i32, i32) {
    %c0_i32 = arith.constant 0 : i32
    %c0_i32_0 = arith.constant 0 : i32
    %c0_i32_1 = arith.constant 0 : i32
    return %c0_i32, %c0_i32_0 : i32, i32
  }
  func.func @transform_3(%arg0: i32) -> (i32, i32) {
    %c0_i32 = arith.constant 0 : i32
    %c0_i32_0 = arith.constant 0 : i32
    %c0_i32_1 = arith.constant 0 : i32
    return %c0_i32, %c0_i32_0 : i32, i32
  }
  func.func @transform_4(%arg0: i32) -> (i32, i32) {
    %c0_i32 = arith.constant 0 : i32
    %c0_i32_0 = arith.constant 0 : i32
    %c0_i32_1 = arith.constant 0 : i32
    return %c0_i32, %c0_i32_0 : i32, i32
  }
  func.func @transform_5(%arg0: i32) -> (i32, i32) {
    %c0_i32 = arith.constant 0 : i32
    %c0_i32_0 = arith.constant 0 : i32
    return %arg0, %c0_i32 : i32, i32
  }
  func.func @transform_6(%arg0: i32) -> (i32, i32) {
    %c0_i32 = arith.constant 0 : i32
    %c0_i32_0 = arith.constant 0 : i32
    return %arg0, %c0_i32 : i32, i32
  }
}

module attributes {stable_mosaic.version = 11 : i64} {
  func.func @_self_mha_kernel(%arg0: i32, %arg1: i32, %arg2: memref<1x8x32xbf16, #tpu.memory_space<vmem>>, %arg3: memref<1x8x64xbf16, #tpu.memory_space<vmem>>, %arg4: memref<1x1x8xi32, #tpu.memory_space<vmem>>, %arg5: memref<1x8x32xf32, #tpu.memory_space<vmem>>, %arg6: memref<32x32xbf16, #tpu.memory_space<vmem>>, %arg7: memref<1x32xf32, #tpu.memory_space<vmem>>, %arg8: memref<1x8x32xf32, #tpu.memory_space<vmem>>, %arg9: memref<8x32xf32, #tpu.memory_space<vmem>>) attributes {dimension_semantics = [#tpu.dimension_semantics<parallel>, #tpu.dimension_semantics<parallel>], iteration_bounds = array<i64: 2, 1>, scalar_prefetch = 0 : i64, scratch_operands = 1 : i64, tpu.core_type = #tpu.core_type<tc>, window_params = [{transform_indices = @transform_0, window_bounds = array<i64: 1, 8, 32>}, {transform_indices = @transform_1, window_bounds = array<i64: 1, 8, 64>}, {transform_indices = @transform_2, window_bounds = array<i64: 1, 1, 8>}, {transform_indices = @transform_3, window_bounds = array<i64: 1, 8, 32>}, {pipeline_mode = #tpu.pipeline_mode<synchronous>, transform_indices = @transform_4, window_bounds = array<i64: 32, 32>}, {pipeline_mode = #tpu.pipeline_mode<synchronous>, transform_indices = @transform_5, window_bounds = array<i64: 1, 32>}, {transform_indices = @transform_6, window_bounds = array<i64: 1, 8, 32>}]} {
    %c8_i32 = arith.constant 8 : i32
    %0 = arith.muli %arg1, %c8_i32 : i32
    %1 = tpu.iota {dimensions = array<i32: 0>} : vector<8x8xi32>
    %2 = vector.broadcast %0 : i32 to vector<8x8xi32>
    %3 = arith.addi %1, %2 : vector<8x8xi32>
    %4 = tpu.iota {dimensions = array<i32: 1>} : vector<8x8xi32>
    %c0 = arith.constant 0 : index
    %c0_0 = arith.constant 0 : index
    %c0_1 = arith.constant 0 : index
    %5 = vector.load %arg4[%c0, %c0_0, %c0_1] : memref<1x1x8xi32, #tpu.memory_space<vmem>>, vector<1x1x8xi32>
    %6 = vector.shape_cast %5 : vector<1x1x8xi32> to vector<1x8xi32>
    %c0_i32 = arith.constant 0 : i32
    %7 = vector.broadcast %c0_i32 : i32 to vector<1x8xi32>
    %8 = arith.cmpi sgt, %6, %7 : vector<1x8xi32>
    %9 = arith.cmpi sgt, %4, %3 : vector<8x8xi32>
    %10 = vector.broadcast %8 : vector<1x8xi1> to vector<8x8xi1>
    %11 = arith.ori %10, %9 : vector<8x8xi1>
    %cst = arith.constant -9.99999984E+17 : f32
    %cst_2 = arith.constant 0.000000e+00 : f32
    %12 = vector.broadcast %cst : f32 to vector<8x8xf32>
    %13 = vector.broadcast %cst_2 : f32 to vector<8x8xf32>
    %14 = arith.select %11, %12, %13 : vector<8x8xi1>, vector<8x8xf32>
    %c0_3 = arith.constant 0 : index
    %c0_4 = arith.constant 0 : index
    %c0_5 = arith.constant 0 : index
    %15 = vector.load %arg2[%c0_3, %c0_4, %c0_5] : memref<1x8x32xbf16, #tpu.memory_space<vmem>>, vector<1x8x32xbf16>
    %16 = vector.shape_cast %15 : vector<1x8x32xbf16> to vector<8x32xbf16>
    %c0_6 = arith.constant 0 : index
    %c0_7 = arith.constant 0 : index
    %c0_8 = arith.constant 0 : index
    %17 = vector.load %arg3[%c0_6, %c0_7, %c0_8] : memref<1x8x64xbf16, #tpu.memory_space<vmem>>, vector<1x8x32xbf16>
    %18 = vector.shape_cast %17 : vector<1x8x32xbf16> to vector<8x32xbf16>
    %c0_9 = arith.constant 0 : index
    %c0_10 = arith.constant 0 : index
    %c32 = arith.constant 32 : index
    %19 = vector.load %arg3[%c0_9, %c0_10, %c32] : memref<1x8x64xbf16, #tpu.memory_space<vmem>>, vector<1x8x32xbf16>
    %20 = vector.shape_cast %19 : vector<1x8x32xbf16> to vector<8x32xbf16>
    %21 = vector.extract_strided_slice %16 {offsets = [0, 0], sizes = [8, 8], strides = [1, 1]} : vector<8x32xbf16> to vector<8x8xbf16>
    %22 = vector.extract_strided_slice %18 {offsets = [0, 0], sizes = [8, 8], strides = [1, 1]} : vector<8x32xbf16> to vector<8x8xbf16>
    %cst_11 = arith.constant dense<0.000000e+00> : vector<8x8xf32>
    %23 = tpu.matmul %21, %22, %cst_11 {dimension_numbers = #tpu.dot_dimension_numbers<[1], [1], [0], [0], [0, 0, 1, 0], [], []>} : vector<8x8xbf16>, vector<8x8xbf16>, vector<8x8xf32> -> vector<8x8xf32>
    %24 = arith.addf %23, %14 : vector<8x8xf32>
    %cst_12 = arith.constant dense<0xFF800000> : vector<8xf32>
    %25 = vector.multi_reduction <maximumf>, %24, %cst_12 [1] : vector<8x8xf32> to vector<8xf32>
    %26 = vector.shape_cast %25 : vector<8xf32> to vector<8x1xf32>
    %27 = vector.broadcast %26 : vector<8x1xf32> to vector<8x8xf32>
    %28 = arith.subf %24, %27 : vector<8x8xf32>
    %29 = math.exp %28 : vector<8x8xf32>
    %cst_13 = arith.constant dense<0.000000e+00> : vector<8xf32>
    %30 = vector.multi_reduction <add>, %29, %cst_13 [1] : vector<8x8xf32> to vector<8xf32>
    %31 = vector.shape_cast %30 : vector<8xf32> to vector<8x1xf32>
    %32 = tpu.reciprocal %31 {approx = true} : vector<8x1xf32> -> vector<8x1xf32>
    %33 = vector.broadcast %32 : vector<8x1xf32> to vector<8x8xf32>
    %34 = arith.mulf %29, %33 : vector<8x8xf32>
    %35 = arith.truncf %34 : vector<8x8xf32> to vector<8x8xbf16>
    %36 = vector.extract_strided_slice %20 {offsets = [0, 0], sizes = [8, 8], strides = [1, 1]} : vector<8x32xbf16> to vector<8x8xbf16>
    %cst_14 = arith.constant dense<0.000000e+00> : vector<8x8xf32>
    %37 = tpu.matmul %35, %36, %cst_14 {dimension_numbers = #tpu.dot_dimension_numbers<[1], [0], [0], [1], [0, 0, 1, 1], [], []>} : vector<8x8xbf16>, vector<8x8xbf16>, vector<8x8xf32> -> vector<8x8xf32>
    %c0_15 = arith.constant 0 : index
    %c0_16 = arith.constant 0 : index
    %38 = vector.load %arg9[%c0_15, %c0_16] : memref<8x32xf32, #tpu.memory_space<vmem>>, vector<8x8xf32>
    tpu.vector_store %arg9[%c0_15, %c0_16], %37 {strides = array<i32>} : memref<8x32xf32, #tpu.memory_space<vmem>>, vector<8x8xf32>,
    %39 = vector.extract_strided_slice %16 {offsets = [0, 8], sizes = [8, 8], strides = [1, 1]} : vector<8x32xbf16> to vector<8x8xbf16>
    %40 = vector.extract_strided_slice %18 {offsets = [0, 8], sizes = [8, 8], strides = [1, 1]} : vector<8x32xbf16> to vector<8x8xbf16>
    %cst_17 = arith.constant dense<0.000000e+00> : vector<8x8xf32>
    %41 = tpu.matmul %39, %40, %cst_17 {dimension_numbers = #tpu.dot_dimension_numbers<[1], [1], [0], [0], [0, 0, 1, 0], [], []>} : vector<8x8xbf16>, vector<8x8xbf16>, vector<8x8xf32> -> vector<8x8xf32>
    %42 = arith.addf %41, %14 : vector<8x8xf32>
    %cst_18 = arith.constant dense<0xFF800000> : vector<8xf32>
    %43 = vector.multi_reduction <maximumf>, %42, %cst_18 [1] : vector<8x8xf32> to vector<8xf32>
    %44 = vector.shape_cast %43 : vector<8xf32> to vector<8x1xf32>
    %45 = vector.broadcast %44 : vector<8x1xf32> to vector<8x8xf32>
    %46 = arith.subf %42, %45 : vector<8x8xf32>
    %47 = math.exp %46 : vector<8x8xf32>
    %cst_19 = arith.constant dense<0.000000e+00> : vector<8xf32>
    %48 = vector.multi_reduction <add>, %47, %cst_19 [1] : vector<8x8xf32> to vector<8xf32>
    %49 = vector.shape_cast %48 : vector<8xf32> to vector<8x1xf32>
    %50 = tpu.reciprocal %49 {approx = true} : vector<8x1xf32> -> vector<8x1xf32>
    %51 = vector.broadcast %50 : vector<8x1xf32> to vector<8x8xf32>
    %52 = arith.mulf %47, %51 : vector<8x8xf32>
    %53 = arith.truncf %52 : vector<8x8xf32> to vector<8x8xbf16>
    %54 = vector.extract_strided_slice %20 {offsets = [0, 8], sizes = [8, 8], strides = [1, 1]} : vector<8x32xbf16> to vector<8x8xbf16>
    %cst_20 = arith.constant dense<0.000000e+00> : vector<8x8xf32>
    %55 = tpu.matmul %53, %54, %cst_20 {dimension_numbers = #tpu.dot_dimension_numbers<[1], [0], [0], [1], [0, 0, 1, 1], [], []>} : vector<8x8xbf16>, vector<8x8xbf16>, vector<8x8xf32> -> vector<8x8xf32>
    %c0_21 = arith.constant 0 : index
    %c8 = arith.constant 8 : index
    %56 = vector.load %arg9[%c0_21, %c8] : memref<8x32xf32, #tpu.memory_space<vmem>>, vector<8x8xf32>
    tpu.vector_store %arg9[%c0_21, %c8], %55 {strides = array<i32>} : memref<8x32xf32, #tpu.memory_space<vmem>>, vector<8x8xf32>,
    %57 = vector.extract_strided_slice %16 {offsets = [0, 16], sizes = [8, 8], strides = [1, 1]} : vector<8x32xbf16> to vector<8x8xbf16>
    %58 = vector.extract_strided_slice %18 {offsets = [0, 16], sizes = [8, 8], strides = [1, 1]} : vector<8x32xbf16> to vector<8x8xbf16>
    %cst_22 = arith.constant dense<0.000000e+00> : vector<8x8xf32>
    %59 = tpu.matmul %57, %58, %cst_22 {dimension_numbers = #tpu.dot_dimension_numbers<[1], [1], [0], [0], [0, 0, 1, 0], [], []>} : vector<8x8xbf16>, vector<8x8xbf16>, vector<8x8xf32> -> vector<8x8xf32>
    %60 = arith.addf %59, %14 : vector<8x8xf32>
    %cst_23 = arith.constant dense<0xFF800000> : vector<8xf32>
    %61 = vector.multi_reduction <maximumf>, %60, %cst_23 [1] : vector<8x8xf32> to vector<8xf32>
    %62 = vector.shape_cast %61 : vector<8xf32> to vector<8x1xf32>
    %63 = vector.broadcast %62 : vector<8x1xf32> to vector<8x8xf32>
    %64 = arith.subf %60, %63 : vector<8x8xf32>
    %65 = math.exp %64 : vector<8x8xf32>
    %cst_24 = arith.constant dense<0.000000e+00> : vector<8xf32>
    %66 = vector.multi_reduction <add>, %65, %cst_24 [1] : vector<8x8xf32> to vector<8xf32>
    %67 = vector.shape_cast %66 : vector<8xf32> to vector<8x1xf32>
    %68 = tpu.reciprocal %67 {approx = true} : vector<8x1xf32> -> vector<8x1xf32>
    %69 = vector.broadcast %68 : vector<8x1xf32> to vector<8x8xf32>
    %70 = arith.mulf %65, %69 : vector<8x8xf32>
    %71 = arith.truncf %70 : vector<8x8xf32> to vector<8x8xbf16>
    %72 = vector.extract_strided_slice %20 {offsets = [0, 16], sizes = [8, 8], strides = [1, 1]} : vector<8x32xbf16> to vector<8x8xbf16>
    %cst_25 = arith.constant dense<0.000000e+00> : vector<8x8xf32>
    %73 = tpu.matmul %71, %72, %cst_25 {dimension_numbers = #tpu.dot_dimension_numbers<[1], [0], [0], [1], [0, 0, 1, 1], [], []>} : vector<8x8xbf16>, vector<8x8xbf16>, vector<8x8xf32> -> vector<8x8xf32>
    %c0_26 = arith.constant 0 : index
    %c16 = arith.constant 16 : index
    %74 = vector.load %arg9[%c0_26, %c16] : memref<8x32xf32, #tpu.memory_space<vmem>>, vector<8x8xf32>
    tpu.vector_store %arg9[%c0_26, %c16], %73 {strides = array<i32>} : memref<8x32xf32, #tpu.memory_space<vmem>>, vector<8x8xf32>,
    %75 = vector.extract_strided_slice %16 {offsets = [0, 24], sizes = [8, 8], strides = [1, 1]} : vector<8x32xbf16> to vector<8x8xbf16>
    %76 = vector.extract_strided_slice %18 {offsets = [0, 24], sizes = [8, 8], strides = [1, 1]} : vector<8x32xbf16> to vector<8x8xbf16>
    %cst_27 = arith.constant dense<0.000000e+00> : vector<8x8xf32>
    %77 = tpu.matmul %75, %76, %cst_27 {dimension_numbers = #tpu.dot_dimension_numbers<[1], [1], [0], [0], [0, 0, 1, 0], [], []>} : vector<8x8xbf16>, vector<8x8xbf16>, vector<8x8xf32> -> vector<8x8xf32>
    %78 = arith.addf %77, %14 : vector<8x8xf32>
    %cst_28 = arith.constant dense<0xFF800000> : vector<8xf32>
    %79 = vector.multi_reduction <maximumf>, %78, %cst_28 [1] : vector<8x8xf32> to vector<8xf32>
    %80 = vector.shape_cast %79 : vector<8xf32> to vector<8x1xf32>
    %81 = vector.broadcast %80 : vector<8x1xf32> to vector<8x8xf32>
    %82 = arith.subf %78, %81 : vector<8x8xf32>
    %83 = math.exp %82 : vector<8x8xf32>
    %cst_29 = arith.constant dense<0.000000e+00> : vector<8xf32>
    %84 = vector.multi_reduction <add>, %83, %cst_29 [1] : vector<8x8xf32> to vector<8xf32>
    %85 = vector.shape_cast %84 : vector<8xf32> to vector<8x1xf32>
    %86 = tpu.reciprocal %85 {approx = true} : vector<8x1xf32> -> vector<8x1xf32>
    %87 = vector.broadcast %86 : vector<8x1xf32> to vector<8x8xf32>
    %88 = arith.mulf %83, %87 : vector<8x8xf32>
    %89 = arith.truncf %88 : vector<8x8xf32> to vector<8x8xbf16>
    %90 = vector.extract_strided_slice %20 {offsets = [0, 24], sizes = [8, 8], strides = [1, 1]} : vector<8x32xbf16> to vector<8x8xbf16>
    %cst_30 = arith.constant dense<0.000000e+00> : vector<8x8xf32>
    %91 = tpu.matmul %89, %90, %cst_30 {dimension_numbers = #tpu.dot_dimension_numbers<[1], [0], [0], [1], [0, 0, 1, 1], [], []>} : vector<8x8xbf16>, vector<8x8xbf16>, vector<8x8xf32> -> vector<8x8xf32>
    %c0_31 = arith.constant 0 : index
    %c24 = arith.constant 24 : index
    %92 = vector.load %arg9[%c0_31, %c24] : memref<8x32xf32, #tpu.memory_space<vmem>>, vector<8x8xf32>
    tpu.vector_store %arg9[%c0_31, %c24], %91 {strides = array<i32>} : memref<8x32xf32, #tpu.memory_space<vmem>>, vector<8x8xf32>,
    %c0_32 = arith.constant 0 : index
    %c0_33 = arith.constant 0 : index
    %93 = vector.load %arg9[%c0_32, %c0_33] : memref<8x32xf32, #tpu.memory_space<vmem>>, vector<8x32xf32>
    %94 = arith.truncf %93 : vector<8x32xf32> to vector<8x32xbf16>
    %c0_34 = arith.constant 0 : index
    %c0_35 = arith.constant 0 : index
    %95 = vector.load %arg6[%c0_34, %c0_35] : memref<32x32xbf16, #tpu.memory_space<vmem>>, vector<32x32xbf16>
    %cst_36 = arith.constant dense<0.000000e+00> : vector<8x32xf32>
    %96 = tpu.matmul %94, %95, %cst_36 {dimension_numbers = #tpu.dot_dimension_numbers<[1], [0], [0], [1], [0, 0, 1, 1], [], []>} : vector<8x32xbf16>, vector<32x32xbf16>, vector<8x32xf32> -> vector<8x32xf32>
    %c0_37 = arith.constant 0 : index
    %c0_38 = arith.constant 0 : index
    %97 = vector.load %arg7[%c0_37, %c0_38] : memref<1x32xf32, #tpu.memory_space<vmem>>, vector<1x32xf32>
    %98 = vector.broadcast %97 : vector<1x32xf32> to vector<8x32xf32>
    %99 = arith.addf %96, %98 : vector<8x32xf32>
    %c0_39 = arith.constant 0 : index
    %c0_40 = arith.constant 0 : index
    %c0_41 = arith.constant 0 : index
    %100 = vector.load %arg5[%c0_39, %c0_40, %c0_41] : memref<1x8x32xf32, #tpu.memory_space<vmem>>, vector<1x8x32xf32>
    %101 = vector.shape_cast %100 : vector<1x8x32xf32> to vector<8x32xf32>
    %102 = arith.addf %99, %101 : vector<8x32xf32>
    %c0_42 = arith.constant 0 : index
    %c0_43 = arith.constant 0 : index
    %c0_44 = arith.constant 0 : index
    %103 = vector.load %arg8[%c0_42, %c0_43, %c0_44] : memref<1x8x32xf32, #tpu.memory_space<vmem>>, vector<1x8x32xf32>
    %104 = vector.shape_cast %103 : vector<1x8x32xf32> to vector<8x32xf32>
    %105 = vector.shape_cast %102 : vector<8x32xf32> to vector<1x8x32xf32>
    tpu.vector_store %arg8[%c0_42, %c0_43, %c0_44], %105 {strides = array<i32>} : memref<1x8x32xf32, #tpu.memory_space<vmem>>, vector<1x8x32xf32>,
    return
  }
  func.func @transform_0(%arg0: i32, %arg1: i32) -> (i32, i32, i32) {
    %c0_i32 = arith.constant 0 : i32
    %c0_i32_0 = arith.constant 0 : i32
    return %arg0, %arg1, %c0_i32 : i32, i32, i32
  }
  func.func @transform_1(%arg0: i32, %arg1: i32) -> (i32, i32, i32) {
    %c0_i32 = arith.constant 0 : i32
    %c0_i32_0 = arith.constant 0 : i32
    %c0_i32_1 = arith.constant 0 : i32
    return %arg0, %c0_i32, %c0_i32_0 : i32, i32, i32
  }
  func.func @transform_2(%arg0: i32, %arg1: i32) -> (i32, i32, i32) {
    %c0_i32 = arith.constant 0 : i32
    %c0_i32_0 = arith.constant 0 : i32
    %c0_i32_1 = arith.constant 0 : i32
    return %arg0, %c0_i32, %c0_i32_0 : i32, i32, i32
  }
  func.func @transform_3(%arg0: i32, %arg1: i32) -> (i32, i32, i32) {
    %c0_i32 = arith.constant 0 : i32
    %c0_i32_0 = arith.constant 0 : i32
    return %arg0, %arg1, %c0_i32 : i32, i32, i32
  }
  func.func @transform_4(%arg0: i32, %arg1: i32) -> (i32, i32) {
    %c0_i32 = arith.constant 0 : i32
    %c0_i32_0 = arith.constant 0 : i32
    %c0_i32_1 = arith.constant 0 : i32
    return %c0_i32, %c0_i32_0 : i32, i32
  }
  func.func @transform_5(%arg0: i32, %arg1: i32) -> (i32, i32) {
    %c0_i32 = arith.constant 0 : i32
    %c0_i32_0 = arith.constant 0 : i32
    %c0_i32_1 = arith.constant 0 : i32
    return %c0_i32, %c0_i32_0 : i32, i32
  }
  func.func @transform_6(%arg0: i32, %arg1: i32) -> (i32, i32, i32) {
    %c0_i32 = arith.constant 0 : i32
    %c0_i32_0 = arith.constant 0 : i32
    return %arg0, %arg1, %c0_i32 : i32, i32, i32
  }
}

module attributes {stable_mosaic.version = 11 : i64} {
  func.func @_ln_q_dual_kernel(%arg0: i32, %arg1: memref<16x32xf32, #tpu.memory_space<vmem>>, %arg2: memref<1x32xf32, #tpu.memory_space<vmem>>, %arg3: memref<1x32xf32, #tpu.memory_space<vmem>>, %arg4: memref<32x32xbf16, #tpu.memory_space<vmem>>, %arg5: memref<1x32xf32, #tpu.memory_space<vmem>>, %arg6: memref<16x32xf32, #tpu.memory_space<vmem>>, %arg7: memref<16x32xbf16, #tpu.memory_space<vmem>>) attributes {dimension_semantics = [#tpu.dimension_semantics<parallel>], iteration_bounds = array<i64: 1>, scalar_prefetch = 0 : i64, scratch_operands = 0 : i64, tpu.core_type = #tpu.core_type<tc>, window_params = [{transform_indices = @transform_0, window_bounds = array<i64: 16, 32>}, {pipeline_mode = #tpu.pipeline_mode<synchronous>, transform_indices = @transform_1, window_bounds = array<i64: 1, 32>}, {pipeline_mode = #tpu.pipeline_mode<synchronous>, transform_indices = @transform_2, window_bounds = array<i64: 1, 32>}, {pipeline_mode = #tpu.pipeline_mode<synchronous>, transform_indices = @transform_3, window_bounds = array<i64: 32, 32>}, {pipeline_mode = #tpu.pipeline_mode<synchronous>, transform_indices = @transform_4, window_bounds = array<i64: 1, 32>}, {transform_indices = @transform_5, window_bounds = array<i64: 16, 32>}, {transform_indices = @transform_6, window_bounds = array<i64: 16, 32>}]} {
    %c0 = arith.constant 0 : index
    %c0_0 = arith.constant 0 : index
    %0 = vector.load %arg1[%c0, %c0_0] : memref<16x32xf32, #tpu.memory_space<vmem>>, vector<16x32xf32>
    %c0_1 = arith.constant 0 : index
    %c0_2 = arith.constant 0 : index
    %1 = vector.load %arg2[%c0_1, %c0_2] : memref<1x32xf32, #tpu.memory_space<vmem>>, vector<1x32xf32>
    %c0_3 = arith.constant 0 : index
    %c0_4 = arith.constant 0 : index
    %2 = vector.load %arg3[%c0_3, %c0_4] : memref<1x32xf32, #tpu.memory_space<vmem>>, vector<1x32xf32>
    %cst = arith.constant dense<0.000000e+00> : vector<16xf32>
    %3 = vector.multi_reduction <add>, %0, %cst [1] : vector<16x32xf32> to vector<16xf32>
    %4 = vector.shape_cast %3 : vector<16xf32> to vector<16x1xf32>
    %cst_5 = arith.constant 3.200000e+01 : f32
    %5 = vector.broadcast %cst_5 : f32 to vector<16x1xf32>
    %6 = arith.divf %4, %5 : vector<16x1xf32>
    %7 = vector.broadcast %6 : vector<16x1xf32> to vector<16x32xf32>
    %8 = arith.subf %0, %7 : vector<16x32xf32>
    %9 = arith.mulf %8, %8 : vector<16x32xf32>
    %cst_6 = arith.constant dense<0.000000e+00> : vector<16xf32>
    %10 = vector.multi_reduction <add>, %9, %cst_6 [1] : vector<16x32xf32> to vector<16xf32>
    %11 = vector.shape_cast %10 : vector<16xf32> to vector<16x1xf32>
    %cst_7 = arith.constant 3.200000e+01 : f32
    %12 = vector.broadcast %cst_7 : f32 to vector<16x1xf32>
    %13 = arith.divf %11, %12 : vector<16x1xf32>
    %14 = vector.broadcast %6 : vector<16x1xf32> to vector<16x32xf32>
    %15 = arith.subf %0, %14 : vector<16x32xf32>
    %cst_8 = arith.constant 9.99999997E-7 : f32
    %16 = vector.broadcast %cst_8 : f32 to vector<16x1xf32>
    %17 = arith.addf %13, %16 : vector<16x1xf32>
    %18 = math.rsqrt %17 : vector<16x1xf32>
    %19 = vector.broadcast %18 : vector<16x1xf32> to vector<16x32xf32>
    %20 = arith.mulf %15, %19 : vector<16x32xf32>
    %21 = vector.broadcast %1 : vector<1x32xf32> to vector<16x32xf32>
    %22 = arith.mulf %20, %21 : vector<16x32xf32>
    %23 = vector.broadcast %2 : vector<1x32xf32> to vector<16x32xf32>
    %24 = arith.addf %22, %23 : vector<16x32xf32>
    %c0_9 = arith.constant 0 : index
    %c0_10 = arith.constant 0 : index
    %25 = vector.load %arg6[%c0_9, %c0_10] : memref<16x32xf32, #tpu.memory_space<vmem>>, vector<16x32xf32>
    tpu.vector_store %arg6[%c0_9, %c0_10], %24 {strides = array<i32>} : memref<16x32xf32, #tpu.memory_space<vmem>>, vector<16x32xf32>,
    %26 = arith.truncf %24 : vector<16x32xf32> to vector<16x32xbf16>
    %c0_11 = arith.constant 0 : index
    %c0_12 = arith.constant 0 : index
    %27 = vector.load %arg4[%c0_11, %c0_12] : memref<32x32xbf16, #tpu.memory_space<vmem>>, vector<32x32xbf16>
    %cst_13 = arith.constant dense<0.000000e+00> : vector<16x32xf32>
    %28 = tpu.matmul %26, %27, %cst_13 {dimension_numbers = #tpu.dot_dimension_numbers<[1], [0], [0], [1], [0, 0, 1, 1], [], []>} : vector<16x32xbf16>, vector<32x32xbf16>, vector<16x32xf32> -> vector<16x32xf32>
    %c0_14 = arith.constant 0 : index
    %c0_15 = arith.constant 0 : index
    %29 = vector.load %arg5[%c0_14, %c0_15] : memref<1x32xf32, #tpu.memory_space<vmem>>, vector<1x32xf32>
    %30 = vector.broadcast %29 : vector<1x32xf32> to vector<16x32xf32>
    %31 = arith.addf %28, %30 : vector<16x32xf32>
    %32 = arith.truncf %31 : vector<16x32xf32> to vector<16x32xbf16>
    %c0_16 = arith.constant 0 : index
    %c0_17 = arith.constant 0 : index
    %33 = vector.load %arg7[%c0_16, %c0_17] : memref<16x32xbf16, #tpu.memory_space<vmem>>, vector<16x32xbf16>
    tpu.vector_store %arg7[%c0_16, %c0_17], %32 {strides = array<i32>} : memref<16x32xbf16, #tpu.memory_space<vmem>>, vector<16x32xbf16>,
    return
  }
  func.func @transform_0(%arg0: i32) -> (i32, i32) {
    %c0_i32 = arith.constant 0 : i32
    %c0_i32_0 = arith.constant 0 : i32
    return %arg0, %c0_i32 : i32, i32
  }
  func.func @transform_1(%arg0: i32) -> (i32, i32) {
    %c0_i32 = arith.constant 0 : i32
    %c0_i32_0 = arith.constant 0 : i32
    %c0_i32_1 = arith.constant 0 : i32
    return %c0_i32, %c0_i32_0 : i32, i32
  }
  func.func @transform_2(%arg0: i32) -> (i32, i32) {
    %c0_i32 = arith.constant 0 : i32
    %c0_i32_0 = arith.constant 0 : i32
    %c0_i32_1 = arith.constant 0 : i32
    return %c0_i32, %c0_i32_0 : i32, i32
  }
  func.func @transform_3(%arg0: i32) -> (i32, i32) {
    %c0_i32 = arith.constant 0 : i32
    %c0_i32_0 = arith.constant 0 : i32
    %c0_i32_1 = arith.constant 0 : i32
    return %c0_i32, %c0_i32_0 : i32, i32
  }
  func.func @transform_4(%arg0: i32) -> (i32, i32) {
    %c0_i32 = arith.constant 0 : i32
    %c0_i32_0 = arith.constant 0 : i32
    %c0_i32_1 = arith.constant 0 : i32
    return %c0_i32, %c0_i32_0 : i32, i32
  }
  func.func @transform_5(%arg0: i32) -> (i32, i32) {
    %c0_i32 = arith.constant 0 : i32
    %c0_i32_0 = arith.constant 0 : i32
    return %arg0, %c0_i32 : i32, i32
  }
  func.func @transform_6(%arg0: i32) -> (i32, i32) {
    %c0_i32 = arith.constant 0 : i32
    %c0_i32_0 = arith.constant 0 : i32
    return %arg0, %c0_i32 : i32, i32
  }
}

module attributes {stable_mosaic.version = 11 : i64} {
  func.func @_cross_mha_kernel(%arg0: i32, %arg1: memref<1x8x32xbf16, #tpu.memory_space<vmem>>, %arg2: memref<1x16x32xf32, #tpu.memory_space<vmem>>, %arg3: memref<1x8x32xf32, #tpu.memory_space<vmem>>, %arg4: memref<1x1x16xi32, #tpu.memory_space<vmem>>, %arg5: memref<1x1x8xi32, #tpu.memory_space<vmem>>, %arg6: memref<1x8x32xf32, #tpu.memory_space<vmem>>, %arg7: memref<32x64xbf16, #tpu.memory_space<vmem>>, %arg8: memref<1x64xf32, #tpu.memory_space<vmem>>, %arg9: memref<32x32xbf16, #tpu.memory_space<vmem>>, %arg10: memref<1x32xf32, #tpu.memory_space<vmem>>, %arg11: memref<32x32xbf16, #tpu.memory_space<vmem>>, %arg12: memref<32x32xbf16, #tpu.memory_space<vmem>>, %arg13: memref<1x32xf32, #tpu.memory_space<vmem>>, %arg14: memref<1x8x32xf32, #tpu.memory_space<vmem>>, %arg15: memref<1x8x32xf32, #tpu.memory_space<vmem>>, %arg16: memref<1x8x32xf32, #tpu.memory_space<vmem>>, %arg17: memref<8x32xf32, #tpu.memory_space<vmem>>) attributes {dimension_semantics = [#tpu.dimension_semantics<parallel>], iteration_bounds = array<i64: 2>, scalar_prefetch = 0 : i64, scratch_operands = 1 : i64, tpu.core_type = #tpu.core_type<tc>, window_params = [{transform_indices = @transform_0, window_bounds = array<i64: 1, 8, 32>}, {transform_indices = @transform_1, window_bounds = array<i64: 1, 16, 32>}, {transform_indices = @transform_2, window_bounds = array<i64: 1, 8, 32>}, {transform_indices = @transform_3, window_bounds = array<i64: 1, 1, 16>}, {transform_indices = @transform_4, window_bounds = array<i64: 1, 1, 8>}, {transform_indices = @transform_5, window_bounds = array<i64: 1, 8, 32>}, {pipeline_mode = #tpu.pipeline_mode<synchronous>, transform_indices = @transform_6, window_bounds = array<i64: 32, 64>}, {pipeline_mode = #tpu.pipeline_mode<synchronous>, transform_indices = @transform_7, window_bounds = array<i64: 1, 64>}, {pipeline_mode = #tpu.pipeline_mode<synchronous>, transform_indices = @transform_8, window_bounds = array<i64: 32, 32>}, {pipeline_mode = #tpu.pipeline_mode<synchronous>, transform_indices = @transform_9, window_bounds = array<i64: 1, 32>}, {pipeline_mode = #tpu.pipeline_mode<synchronous>, transform_indices = @transform_10, window_bounds = array<i64: 32, 32>}, {pipeline_mode = #tpu.pipeline_mode<synchronous>, transform_indices = @transform_11, window_bounds = array<i64: 32, 32>}, {pipeline_mode = #tpu.pipeline_mode<synchronous>, transform_indices = @transform_12, window_bounds = array<i64: 1, 32>}, {transform_indices = @transform_13, window_bounds = array<i64: 1, 8, 32>}, {transform_indices = @transform_14, window_bounds = array<i64: 1, 8, 32>}, {transform_indices = @transform_15, window_bounds = array<i64: 1, 8, 32>}]} {
    %c0 = arith.constant 0 : index
    %c0_0 = arith.constant 0 : index
    %c0_1 = arith.constant 0 : index
    %0 = vector.load %arg1[%c0, %c0_0, %c0_1] : memref<1x8x32xbf16, #tpu.memory_space<vmem>>, vector<1x8x32xbf16>
    %1 = vector.shape_cast %0 : vector<1x8x32xbf16> to vector<8x32xbf16>
    %c0_2 = arith.constant 0 : index
    %c0_3 = arith.constant 0 : index
    %2 = vector.load %arg7[%c0_2, %c0_3] : memref<32x64xbf16, #tpu.memory_space<vmem>>, vector<32x64xbf16>
    %c0_4 = arith.constant 0 : index
    %c0_5 = arith.constant 0 : index
    %3 = vector.load %arg8[%c0_4, %c0_5] : memref<1x64xf32, #tpu.memory_space<vmem>>, vector<1x64xf32>
    %c0_6 = arith.constant 0 : index
    %c0_7 = arith.constant 0 : index
    %4 = vector.load %arg9[%c0_6, %c0_7] : memref<32x32xbf16, #tpu.memory_space<vmem>>, vector<32x32xbf16>
    %c0_8 = arith.constant 0 : index
    %c0_9 = arith.constant 0 : index
    %5 = vector.load %arg10[%c0_8, %c0_9] : memref<1x32xf32, #tpu.memory_space<vmem>>, vector<1x32xf32>
    %c0_10 = arith.constant 0 : index
    %c0_11 = arith.constant 0 : index
    %c0_12 = arith.constant 0 : index
    %6 = vector.load %arg2[%c0_10, %c0_11, %c0_12] : memref<1x16x32xf32, #tpu.memory_space<vmem>>, vector<1x16x32xf32>
    %7 = vector.shape_cast %6 : vector<1x16x32xf32> to vector<16x32xf32>
    %8 = arith.truncf %7 : vector<16x32xf32> to vector<16x32xbf16>
    %cst = arith.constant dense<0.000000e+00> : vector<16x64xf32>
    %9 = tpu.matmul %8, %2, %cst {dimension_numbers = #tpu.dot_dimension_numbers<[1], [0], [0], [1], [0, 0, 1, 1], [], []>} : vector<16x32xbf16>, vector<32x64xbf16>, vector<16x64xf32> -> vector<16x64xf32>
    %10 = vector.broadcast %3 : vector<1x64xf32> to vector<16x64xf32>
    %11 = arith.addf %9, %10 : vector<16x64xf32>
    %12 = arith.truncf %11 : vector<16x64xf32> to vector<16x64xbf16>
    %c0_13 = arith.constant 0 : index
    %c0_14 = arith.constant 0 : index
    %c0_15 = arith.constant 0 : index
    %13 = vector.load %arg4[%c0_13, %c0_14, %c0_15] : memref<1x1x16xi32, #tpu.memory_space<vmem>>, vector<1x1x16xi32>
    %14 = vector.shape_cast %13 : vector<1x1x16xi32> to vector<1x16xi32>
    %c0_i32 = arith.constant 0 : i32
    %15 = vector.broadcast %c0_i32 : i32 to vector<1x16xi32>
    %16 = arith.cmpi sgt, %14, %15 : vector<1x16xi32>
    %cst_16 = arith.constant -9.99999984E+17 : f32
    %cst_17 = arith.constant 0.000000e+00 : f32
    %17 = vector.broadcast %cst_16 : f32 to vector<1x16xf32>
    %18 = vector.broadcast %cst_17 : f32 to vector<1x16xf32>
    %19 = arith.select %16, %17, %18 : vector<1x16xi1>, vector<1x16xf32>
    %20 = vector.extract_strided_slice %12 {offsets = [0, 0], sizes = [16, 32], strides = [1, 1]} : vector<16x64xbf16> to vector<16x32xbf16>
    %21 = vector.extract_strided_slice %12 {offsets = [0, 32], sizes = [16, 32], strides = [1, 1]} : vector<16x64xbf16> to vector<16x32xbf16>
    %22 = vector.extract_strided_slice %1 {offsets = [0, 0], sizes = [8, 8], strides = [1, 1]} : vector<8x32xbf16> to vector<8x8xbf16>
    %23 = vector.extract_strided_slice %20 {offsets = [0, 0], sizes = [16, 8], strides = [1, 1]} : vector<16x32xbf16> to vector<16x8xbf16>
    %cst_18 = arith.constant dense<0.000000e+00> : vector<8x16xf32>
    %24 = tpu.matmul %22, %23, %cst_18 {dimension_numbers = #tpu.dot_dimension_numbers<[1], [1], [0], [0], [0, 0, 1, 0], [], []>} : vector<8x8xbf16>, vector<16x8xbf16>, vector<8x16xf32> -> vector<8x16xf32>
    %25 = vector.broadcast %19 : vector<1x16xf32> to vector<8x16xf32>
    %26 = arith.addf %24, %25 : vector<8x16xf32>
    %cst_19 = arith.constant dense<0xFF800000> : vector<8xf32>
    %27 = vector.multi_reduction <maximumf>, %26, %cst_19 [1] : vector<8x16xf32> to vector<8xf32>
    %28 = vector.shape_cast %27 : vector<8xf32> to vector<8x1xf32>
    %29 = vector.broadcast %28 : vector<8x1xf32> to vector<8x16xf32>
    %30 = arith.subf %26, %29 : vector<8x16xf32>
    %31 = math.exp %30 : vector<8x16xf32>
    %cst_20 = arith.constant dense<0.000000e+00> : vector<8xf32>
    %32 = vector.multi_reduction <add>, %31, %cst_20 [1] : vector<8x16xf32> to vector<8xf32>
    %33 = vector.shape_cast %32 : vector<8xf32> to vector<8x1xf32>
    %34 = tpu.reciprocal %33 {approx = true} : vector<8x1xf32> -> vector<8x1xf32>
    %35 = vector.broadcast %34 : vector<8x1xf32> to vector<8x16xf32>
    %36 = arith.mulf %31, %35 : vector<8x16xf32>
    %37 = arith.truncf %36 : vector<8x16xf32> to vector<8x16xbf16>
    %38 = vector.extract_strided_slice %21 {offsets = [0, 0], sizes = [16, 8], strides = [1, 1]} : vector<16x32xbf16> to vector<16x8xbf16>
    %cst_21 = arith.constant dense<0.000000e+00> : vector<8x8xf32>
    %39 = tpu.matmul %37, %38, %cst_21 {dimension_numbers = #tpu.dot_dimension_numbers<[1], [0], [0], [1], [0, 0, 1, 1], [], []>} : vector<8x16xbf16>, vector<16x8xbf16>, vector<8x8xf32> -> vector<8x8xf32>
    %c0_22 = arith.constant 0 : index
    %c0_23 = arith.constant 0 : index
    %40 = vector.load %arg17[%c0_22, %c0_23] : memref<8x32xf32, #tpu.memory_space<vmem>>, vector<8x8xf32>
    tpu.vector_store %arg17[%c0_22, %c0_23], %39 {strides = array<i32>} : memref<8x32xf32, #tpu.memory_space<vmem>>, vector<8x8xf32>,
    %41 = vector.extract_strided_slice %1 {offsets = [0, 8], sizes = [8, 8], strides = [1, 1]} : vector<8x32xbf16> to vector<8x8xbf16>
    %42 = vector.extract_strided_slice %20 {offsets = [0, 8], sizes = [16, 8], strides = [1, 1]} : vector<16x32xbf16> to vector<16x8xbf16>
    %cst_24 = arith.constant dense<0.000000e+00> : vector<8x16xf32>
    %43 = tpu.matmul %41, %42, %cst_24 {dimension_numbers = #tpu.dot_dimension_numbers<[1], [1], [0], [0], [0, 0, 1, 0], [], []>} : vector<8x8xbf16>, vector<16x8xbf16>, vector<8x16xf32> -> vector<8x16xf32>
    %44 = vector.broadcast %19 : vector<1x16xf32> to vector<8x16xf32>
    %45 = arith.addf %43, %44 : vector<8x16xf32>
    %cst_25 = arith.constant dense<0xFF800000> : vector<8xf32>
    %46 = vector.multi_reduction <maximumf>, %45, %cst_25 [1] : vector<8x16xf32> to vector<8xf32>
    %47 = vector.shape_cast %46 : vector<8xf32> to vector<8x1xf32>
    %48 = vector.broadcast %47 : vector<8x1xf32> to vector<8x16xf32>
    %49 = arith.subf %45, %48 : vector<8x16xf32>
    %50 = math.exp %49 : vector<8x16xf32>
    %cst_26 = arith.constant dense<0.000000e+00> : vector<8xf32>
    %51 = vector.multi_reduction <add>, %50, %cst_26 [1] : vector<8x16xf32> to vector<8xf32>
    %52 = vector.shape_cast %51 : vector<8xf32> to vector<8x1xf32>
    %53 = tpu.reciprocal %52 {approx = true} : vector<8x1xf32> -> vector<8x1xf32>
    %54 = vector.broadcast %53 : vector<8x1xf32> to vector<8x16xf32>
    %55 = arith.mulf %50, %54 : vector<8x16xf32>
    %56 = arith.truncf %55 : vector<8x16xf32> to vector<8x16xbf16>
    %57 = vector.extract_strided_slice %21 {offsets = [0, 8], sizes = [16, 8], strides = [1, 1]} : vector<16x32xbf16> to vector<16x8xbf16>
    %cst_27 = arith.constant dense<0.000000e+00> : vector<8x8xf32>
    %58 = tpu.matmul %56, %57, %cst_27 {dimension_numbers = #tpu.dot_dimension_numbers<[1], [0], [0], [1], [0, 0, 1, 1], [], []>} : vector<8x16xbf16>, vector<16x8xbf16>, vector<8x8xf32> -> vector<8x8xf32>
    %c0_28 = arith.constant 0 : index
    %c8 = arith.constant 8 : index
    %59 = vector.load %arg17[%c0_28, %c8] : memref<8x32xf32, #tpu.memory_space<vmem>>, vector<8x8xf32>
    tpu.vector_store %arg17[%c0_28, %c8], %58 {strides = array<i32>} : memref<8x32xf32, #tpu.memory_space<vmem>>, vector<8x8xf32>,
    %60 = vector.extract_strided_slice %1 {offsets = [0, 16], sizes = [8, 8], strides = [1, 1]} : vector<8x32xbf16> to vector<8x8xbf16>
    %61 = vector.extract_strided_slice %20 {offsets = [0, 16], sizes = [16, 8], strides = [1, 1]} : vector<16x32xbf16> to vector<16x8xbf16>
    %cst_29 = arith.constant dense<0.000000e+00> : vector<8x16xf32>
    %62 = tpu.matmul %60, %61, %cst_29 {dimension_numbers = #tpu.dot_dimension_numbers<[1], [1], [0], [0], [0, 0, 1, 0], [], []>} : vector<8x8xbf16>, vector<16x8xbf16>, vector<8x16xf32> -> vector<8x16xf32>
    %63 = vector.broadcast %19 : vector<1x16xf32> to vector<8x16xf32>
    %64 = arith.addf %62, %63 : vector<8x16xf32>
    %cst_30 = arith.constant dense<0xFF800000> : vector<8xf32>
    %65 = vector.multi_reduction <maximumf>, %64, %cst_30 [1] : vector<8x16xf32> to vector<8xf32>
    %66 = vector.shape_cast %65 : vector<8xf32> to vector<8x1xf32>
    %67 = vector.broadcast %66 : vector<8x1xf32> to vector<8x16xf32>
    %68 = arith.subf %64, %67 : vector<8x16xf32>
    %69 = math.exp %68 : vector<8x16xf32>
    %cst_31 = arith.constant dense<0.000000e+00> : vector<8xf32>
    %70 = vector.multi_reduction <add>, %69, %cst_31 [1] : vector<8x16xf32> to vector<8xf32>
    %71 = vector.shape_cast %70 : vector<8xf32> to vector<8x1xf32>
    %72 = tpu.reciprocal %71 {approx = true} : vector<8x1xf32> -> vector<8x1xf32>
    %73 = vector.broadcast %72 : vector<8x1xf32> to vector<8x16xf32>
    %74 = arith.mulf %69, %73 : vector<8x16xf32>
    %75 = arith.truncf %74 : vector<8x16xf32> to vector<8x16xbf16>
    %76 = vector.extract_strided_slice %21 {offsets = [0, 16], sizes = [16, 8], strides = [1, 1]} : vector<16x32xbf16> to vector<16x8xbf16>
    %cst_32 = arith.constant dense<0.000000e+00> : vector<8x8xf32>
    %77 = tpu.matmul %75, %76, %cst_32 {dimension_numbers = #tpu.dot_dimension_numbers<[1], [0], [0], [1], [0, 0, 1, 1], [], []>} : vector<8x16xbf16>, vector<16x8xbf16>, vector<8x8xf32> -> vector<8x8xf32>
    %c0_33 = arith.constant 0 : index
    %c16 = arith.constant 16 : index
    %78 = vector.load %arg17[%c0_33, %c16] : memref<8x32xf32, #tpu.memory_space<vmem>>, vector<8x8xf32>
    tpu.vector_store %arg17[%c0_33, %c16], %77 {strides = array<i32>} : memref<8x32xf32, #tpu.memory_space<vmem>>, vector<8x8xf32>,
    %79 = vector.extract_strided_slice %1 {offsets = [0, 24], sizes = [8, 8], strides = [1, 1]} : vector<8x32xbf16> to vector<8x8xbf16>
    %80 = vector.extract_strided_slice %20 {offsets = [0, 24], sizes = [16, 8], strides = [1, 1]} : vector<16x32xbf16> to vector<16x8xbf16>
    %cst_34 = arith.constant dense<0.000000e+00> : vector<8x16xf32>
    %81 = tpu.matmul %79, %80, %cst_34 {dimension_numbers = #tpu.dot_dimension_numbers<[1], [1], [0], [0], [0, 0, 1, 0], [], []>} : vector<8x8xbf16>, vector<16x8xbf16>, vector<8x16xf32> -> vector<8x16xf32>
    %82 = vector.broadcast %19 : vector<1x16xf32> to vector<8x16xf32>
    %83 = arith.addf %81, %82 : vector<8x16xf32>
    %cst_35 = arith.constant dense<0xFF800000> : vector<8xf32>
    %84 = vector.multi_reduction <maximumf>, %83, %cst_35 [1] : vector<8x16xf32> to vector<8xf32>
    %85 = vector.shape_cast %84 : vector<8xf32> to vector<8x1xf32>
    %86 = vector.broadcast %85 : vector<8x1xf32> to vector<8x16xf32>
    %87 = arith.subf %83, %86 : vector<8x16xf32>
    %88 = math.exp %87 : vector<8x16xf32>
    %cst_36 = arith.constant dense<0.000000e+00> : vector<8xf32>
    %89 = vector.multi_reduction <add>, %88, %cst_36 [1] : vector<8x16xf32> to vector<8xf32>
    %90 = vector.shape_cast %89 : vector<8xf32> to vector<8x1xf32>
    %91 = tpu.reciprocal %90 {approx = true} : vector<8x1xf32> -> vector<8x1xf32>
    %92 = vector.broadcast %91 : vector<8x1xf32> to vector<8x16xf32>
    %93 = arith.mulf %88, %92 : vector<8x16xf32>
    %94 = arith.truncf %93 : vector<8x16xf32> to vector<8x16xbf16>
    %95 = vector.extract_strided_slice %21 {offsets = [0, 24], sizes = [16, 8], strides = [1, 1]} : vector<16x32xbf16> to vector<16x8xbf16>
    %cst_37 = arith.constant dense<0.000000e+00> : vector<8x8xf32>
    %96 = tpu.matmul %94, %95, %cst_37 {dimension_numbers = #tpu.dot_dimension_numbers<[1], [0], [0], [1], [0, 0, 1, 1], [], []>} : vector<8x16xbf16>, vector<16x8xbf16>, vector<8x8xf32> -> vector<8x8xf32>
    %c0_38 = arith.constant 0 : index
    %c24 = arith.constant 24 : index
    %97 = vector.load %arg17[%c0_38, %c24] : memref<8x32xf32, #tpu.memory_space<vmem>>, vector<8x8xf32>
    tpu.vector_store %arg17[%c0_38, %c24], %96 {strides = array<i32>} : memref<8x32xf32, #tpu.memory_space<vmem>>, vector<8x8xf32>,
    %c0_39 = arith.constant 0 : index
    %c0_40 = arith.constant 0 : index
    %98 = vector.load %arg17[%c0_39, %c0_40] : memref<8x32xf32, #tpu.memory_space<vmem>>, vector<8x32xf32>
    %99 = arith.truncf %98 : vector<8x32xf32> to vector<8x32xbf16>
    %cst_41 = arith.constant dense<0.000000e+00> : vector<8x32xf32>
    %100 = tpu.matmul %99, %4, %cst_41 {dimension_numbers = #tpu.dot_dimension_numbers<[1], [0], [0], [1], [0, 0, 1, 1], [], []>} : vector<8x32xbf16>, vector<32x32xbf16>, vector<8x32xf32> -> vector<8x32xf32>
    %101 = vector.broadcast %5 : vector<1x32xf32> to vector<8x32xf32>
    %102 = arith.addf %100, %101 : vector<8x32xf32>
    %c0_42 = arith.constant 0 : index
    %c0_43 = arith.constant 0 : index
    %c0_44 = arith.constant 0 : index
    %103 = vector.load %arg14[%c0_42, %c0_43, %c0_44] : memref<1x8x32xf32, #tpu.memory_space<vmem>>, vector<1x8x32xf32>
    %104 = vector.shape_cast %103 : vector<1x8x32xf32> to vector<8x32xf32>
    %105 = vector.shape_cast %102 : vector<8x32xf32> to vector<1x8x32xf32>
    tpu.vector_store %arg14[%c0_42, %c0_43, %c0_44], %105 {strides = array<i32>} : memref<1x8x32xf32, #tpu.memory_space<vmem>>, vector<1x8x32xf32>,
    %c0_45 = arith.constant 0 : index
    %c0_46 = arith.constant 0 : index
    %c0_47 = arith.constant 0 : index
    %106 = vector.load %arg3[%c0_45, %c0_46, %c0_47] : memref<1x8x32xf32, #tpu.memory_space<vmem>>, vector<1x8x32xf32>
    %107 = vector.shape_cast %106 : vector<1x8x32xf32> to vector<8x32xf32>
    %108 = arith.truncf %107 : vector<8x32xf32> to vector<8x32xbf16>
    %cst_48 = arith.constant dense<0.000000e+00> : vector<8x64xf32>
    %109 = tpu.matmul %108, %2, %cst_48 {dimension_numbers = #tpu.dot_dimension_numbers<[1], [0], [0], [1], [0, 0, 1, 1], [], []>} : vector<8x32xbf16>, vector<32x64xbf16>, vector<8x64xf32> -> vector<8x64xf32>
    %110 = vector.broadcast %3 : vector<1x64xf32> to vector<8x64xf32>
    %111 = arith.addf %109, %110 : vector<8x64xf32>
    %112 = arith.truncf %111 : vector<8x64xf32> to vector<8x64xbf16>
    %c0_49 = arith.constant 0 : index
    %c0_50 = arith.constant 0 : index
    %c0_51 = arith.constant 0 : index
    %113 = vector.load %arg5[%c0_49, %c0_50, %c0_51] : memref<1x1x8xi32, #tpu.memory_space<vmem>>, vector<1x1x8xi32>
    %114 = vector.shape_cast %113 : vector<1x1x8xi32> to vector<1x8xi32>
    %c0_i32_52 = arith.constant 0 : i32
    %115 = vector.broadcast %c0_i32_52 : i32 to vector<1x8xi32>
    %116 = arith.cmpi sgt, %114, %115 : vector<1x8xi32>
    %cst_53 = arith.constant -9.99999984E+17 : f32
    %cst_54 = arith.constant 0.000000e+00 : f32
    %117 = vector.broadcast %cst_53 : f32 to vector<1x8xf32>
    %118 = vector.broadcast %cst_54 : f32 to vector<1x8xf32>
    %119 = arith.select %116, %117, %118 : vector<1x8xi1>, vector<1x8xf32>
    %120 = vector.extract_strided_slice %112 {offsets = [0, 0], sizes = [8, 32], strides = [1, 1]} : vector<8x64xbf16> to vector<8x32xbf16>
    %121 = vector.extract_strided_slice %112 {offsets = [0, 32], sizes = [8, 32], strides = [1, 1]} : vector<8x64xbf16> to vector<8x32xbf16>
    %122 = vector.extract_strided_slice %1 {offsets = [0, 0], sizes = [8, 8], strides = [1, 1]} : vector<8x32xbf16> to vector<8x8xbf16>
    %123 = vector.extract_strided_slice %120 {offsets = [0, 0], sizes = [8, 8], strides = [1, 1]} : vector<8x32xbf16> to vector<8x8xbf16>
    %cst_55 = arith.constant dense<0.000000e+00> : vector<8x8xf32>
    %124 = tpu.matmul %122, %123, %cst_55 {dimension_numbers = #tpu.dot_dimension_numbers<[1], [1], [0], [0], [0, 0, 1, 0], [], []>} : vector<8x8xbf16>, vector<8x8xbf16>, vector<8x8xf32> -> vector<8x8xf32>
    %125 = vector.broadcast %119 : vector<1x8xf32> to vector<8x8xf32>
    %126 = arith.addf %124, %125 : vector<8x8xf32>
    %cst_56 = arith.constant dense<0xFF800000> : vector<8xf32>
    %127 = vector.multi_reduction <maximumf>, %126, %cst_56 [1] : vector<8x8xf32> to vector<8xf32>
    %128 = vector.shape_cast %127 : vector<8xf32> to vector<8x1xf32>
    %129 = vector.broadcast %128 : vector<8x1xf32> to vector<8x8xf32>
    %130 = arith.subf %126, %129 : vector<8x8xf32>
    %131 = math.exp %130 : vector<8x8xf32>
    %cst_57 = arith.constant dense<0.000000e+00> : vector<8xf32>
    %132 = vector.multi_reduction <add>, %131, %cst_57 [1] : vector<8x8xf32> to vector<8xf32>
    %133 = vector.shape_cast %132 : vector<8xf32> to vector<8x1xf32>
    %134 = tpu.reciprocal %133 {approx = true} : vector<8x1xf32> -> vector<8x1xf32>
    %135 = vector.broadcast %134 : vector<8x1xf32> to vector<8x8xf32>
    %136 = arith.mulf %131, %135 : vector<8x8xf32>
    %137 = arith.truncf %136 : vector<8x8xf32> to vector<8x8xbf16>
    %138 = vector.extract_strided_slice %121 {offsets = [0, 0], sizes = [8, 8], strides = [1, 1]} : vector<8x32xbf16> to vector<8x8xbf16>
    %cst_58 = arith.constant dense<0.000000e+00> : vector<8x8xf32>
    %139 = tpu.matmul %137, %138, %cst_58 {dimension_numbers = #tpu.dot_dimension_numbers<[1], [0], [0], [1], [0, 0, 1, 1], [], []>} : vector<8x8xbf16>, vector<8x8xbf16>, vector<8x8xf32> -> vector<8x8xf32>
    %c0_59 = arith.constant 0 : index
    %c0_60 = arith.constant 0 : index
    %140 = vector.load %arg17[%c0_59, %c0_60] : memref<8x32xf32, #tpu.memory_space<vmem>>, vector<8x8xf32>
    tpu.vector_store %arg17[%c0_59, %c0_60], %139 {strides = array<i32>} : memref<8x32xf32, #tpu.memory_space<vmem>>, vector<8x8xf32>,
    %141 = vector.extract_strided_slice %1 {offsets = [0, 8], sizes = [8, 8], strides = [1, 1]} : vector<8x32xbf16> to vector<8x8xbf16>
    %142 = vector.extract_strided_slice %120 {offsets = [0, 8], sizes = [8, 8], strides = [1, 1]} : vector<8x32xbf16> to vector<8x8xbf16>
    %cst_61 = arith.constant dense<0.000000e+00> : vector<8x8xf32>
    %143 = tpu.matmul %141, %142, %cst_61 {dimension_numbers = #tpu.dot_dimension_numbers<[1], [1], [0], [0], [0, 0, 1, 0], [], []>} : vector<8x8xbf16>, vector<8x8xbf16>, vector<8x8xf32> -> vector<8x8xf32>
    %144 = vector.broadcast %119 : vector<1x8xf32> to vector<8x8xf32>
    %145 = arith.addf %143, %144 : vector<8x8xf32>
    %cst_62 = arith.constant dense<0xFF800000> : vector<8xf32>
    %146 = vector.multi_reduction <maximumf>, %145, %cst_62 [1] : vector<8x8xf32> to vector<8xf32>
    %147 = vector.shape_cast %146 : vector<8xf32> to vector<8x1xf32>
    %148 = vector.broadcast %147 : vector<8x1xf32> to vector<8x8xf32>
    %149 = arith.subf %145, %148 : vector<8x8xf32>
    %150 = math.exp %149 : vector<8x8xf32>
    %cst_63 = arith.constant dense<0.000000e+00> : vector<8xf32>
    %151 = vector.multi_reduction <add>, %150, %cst_63 [1] : vector<8x8xf32> to vector<8xf32>
    %152 = vector.shape_cast %151 : vector<8xf32> to vector<8x1xf32>
    %153 = tpu.reciprocal %152 {approx = true} : vector<8x1xf32> -> vector<8x1xf32>
    %154 = vector.broadcast %153 : vector<8x1xf32> to vector<8x8xf32>
    %155 = arith.mulf %150, %154 : vector<8x8xf32>
    %156 = arith.truncf %155 : vector<8x8xf32> to vector<8x8xbf16>
    %157 = vector.extract_strided_slice %121 {offsets = [0, 8], sizes = [8, 8], strides = [1, 1]} : vector<8x32xbf16> to vector<8x8xbf16>
    %cst_64 = arith.constant dense<0.000000e+00> : vector<8x8xf32>
    %158 = tpu.matmul %156, %157, %cst_64 {dimension_numbers = #tpu.dot_dimension_numbers<[1], [0], [0], [1], [0, 0, 1, 1], [], []>} : vector<8x8xbf16>, vector<8x8xbf16>, vector<8x8xf32> -> vector<8x8xf32>
    %c0_65 = arith.constant 0 : index
    %c8_66 = arith.constant 8 : index
    %159 = vector.load %arg17[%c0_65, %c8_66] : memref<8x32xf32, #tpu.memory_space<vmem>>, vector<8x8xf32>
    tpu.vector_store %arg17[%c0_65, %c8_66], %158 {strides = array<i32>} : memref<8x32xf32, #tpu.memory_space<vmem>>, vector<8x8xf32>,
    %160 = vector.extract_strided_slice %1 {offsets = [0, 16], sizes = [8, 8], strides = [1, 1]} : vector<8x32xbf16> to vector<8x8xbf16>
    %161 = vector.extract_strided_slice %120 {offsets = [0, 16], sizes = [8, 8], strides = [1, 1]} : vector<8x32xbf16> to vector<8x8xbf16>
    %cst_67 = arith.constant dense<0.000000e+00> : vector<8x8xf32>
    %162 = tpu.matmul %160, %161, %cst_67 {dimension_numbers = #tpu.dot_dimension_numbers<[1], [1], [0], [0], [0, 0, 1, 0], [], []>} : vector<8x8xbf16>, vector<8x8xbf16>, vector<8x8xf32> -> vector<8x8xf32>
    %163 = vector.broadcast %119 : vector<1x8xf32> to vector<8x8xf32>
    %164 = arith.addf %162, %163 : vector<8x8xf32>
    %cst_68 = arith.constant dense<0xFF800000> : vector<8xf32>
    %165 = vector.multi_reduction <maximumf>, %164, %cst_68 [1] : vector<8x8xf32> to vector<8xf32>
    %166 = vector.shape_cast %165 : vector<8xf32> to vector<8x1xf32>
    %167 = vector.broadcast %166 : vector<8x1xf32> to vector<8x8xf32>
    %168 = arith.subf %164, %167 : vector<8x8xf32>
    %169 = math.exp %168 : vector<8x8xf32>
    %cst_69 = arith.constant dense<0.000000e+00> : vector<8xf32>
    %170 = vector.multi_reduction <add>, %169, %cst_69 [1] : vector<8x8xf32> to vector<8xf32>
    %171 = vector.shape_cast %170 : vector<8xf32> to vector<8x1xf32>
    %172 = tpu.reciprocal %171 {approx = true} : vector<8x1xf32> -> vector<8x1xf32>
    %173 = vector.broadcast %172 : vector<8x1xf32> to vector<8x8xf32>
    %174 = arith.mulf %169, %173 : vector<8x8xf32>
    %175 = arith.truncf %174 : vector<8x8xf32> to vector<8x8xbf16>
    %176 = vector.extract_strided_slice %121 {offsets = [0, 16], sizes = [8, 8], strides = [1, 1]} : vector<8x32xbf16> to vector<8x8xbf16>
    %cst_70 = arith.constant dense<0.000000e+00> : vector<8x8xf32>
    %177 = tpu.matmul %175, %176, %cst_70 {dimension_numbers = #tpu.dot_dimension_numbers<[1], [0], [0], [1], [0, 0, 1, 1], [], []>} : vector<8x8xbf16>, vector<8x8xbf16>, vector<8x8xf32> -> vector<8x8xf32>
    %c0_71 = arith.constant 0 : index
    %c16_72 = arith.constant 16 : index
    %178 = vector.load %arg17[%c0_71, %c16_72] : memref<8x32xf32, #tpu.memory_space<vmem>>, vector<8x8xf32>
    tpu.vector_store %arg17[%c0_71, %c16_72], %177 {strides = array<i32>} : memref<8x32xf32, #tpu.memory_space<vmem>>, vector<8x8xf32>,
    %179 = vector.extract_strided_slice %1 {offsets = [0, 24], sizes = [8, 8], strides = [1, 1]} : vector<8x32xbf16> to vector<8x8xbf16>
    %180 = vector.extract_strided_slice %120 {offsets = [0, 24], sizes = [8, 8], strides = [1, 1]} : vector<8x32xbf16> to vector<8x8xbf16>
    %cst_73 = arith.constant dense<0.000000e+00> : vector<8x8xf32>
    %181 = tpu.matmul %179, %180, %cst_73 {dimension_numbers = #tpu.dot_dimension_numbers<[1], [1], [0], [0], [0, 0, 1, 0], [], []>} : vector<8x8xbf16>, vector<8x8xbf16>, vector<8x8xf32> -> vector<8x8xf32>
    %182 = vector.broadcast %119 : vector<1x8xf32> to vector<8x8xf32>
    %183 = arith.addf %181, %182 : vector<8x8xf32>
    %cst_74 = arith.constant dense<0xFF800000> : vector<8xf32>
    %184 = vector.multi_reduction <maximumf>, %183, %cst_74 [1] : vector<8x8xf32> to vector<8xf32>
    %185 = vector.shape_cast %184 : vector<8xf32> to vector<8x1xf32>
    %186 = vector.broadcast %185 : vector<8x1xf32> to vector<8x8xf32>
    %187 = arith.subf %183, %186 : vector<8x8xf32>
    %188 = math.exp %187 : vector<8x8xf32>
    %cst_75 = arith.constant dense<0.000000e+00> : vector<8xf32>
    %189 = vector.multi_reduction <add>, %188, %cst_75 [1] : vector<8x8xf32> to vector<8xf32>
    %190 = vector.shape_cast %189 : vector<8xf32> to vector<8x1xf32>
    %191 = tpu.reciprocal %190 {approx = true} : vector<8x1xf32> -> vector<8x1xf32>
    %192 = vector.broadcast %191 : vector<8x1xf32> to vector<8x8xf32>
    %193 = arith.mulf %188, %192 : vector<8x8xf32>
    %194 = arith.truncf %193 : vector<8x8xf32> to vector<8x8xbf16>
    %195 = vector.extract_strided_slice %121 {offsets = [0, 24], sizes = [8, 8], strides = [1, 1]} : vector<8x32xbf16> to vector<8x8xbf16>
    %cst_76 = arith.constant dense<0.000000e+00> : vector<8x8xf32>
    %196 = tpu.matmul %194, %195, %cst_76 {dimension_numbers = #tpu.dot_dimension_numbers<[1], [0], [0], [1], [0, 0, 1, 1], [], []>} : vector<8x8xbf16>, vector<8x8xbf16>, vector<8x8xf32> -> vector<8x8xf32>
    %c0_77 = arith.constant 0 : index
    %c24_78 = arith.constant 24 : index
    %197 = vector.load %arg17[%c0_77, %c24_78] : memref<8x32xf32, #tpu.memory_space<vmem>>, vector<8x8xf32>
    tpu.vector_store %arg17[%c0_77, %c24_78], %196 {strides = array<i32>} : memref<8x32xf32, #tpu.memory_space<vmem>>, vector<8x8xf32>,
    %c0_79 = arith.constant 0 : index
    %c0_80 = arith.constant 0 : index
    %198 = vector.load %arg17[%c0_79, %c0_80] : memref<8x32xf32, #tpu.memory_space<vmem>>, vector<8x32xf32>
    %199 = arith.truncf %198 : vector<8x32xf32> to vector<8x32xbf16>
    %cst_81 = arith.constant dense<0.000000e+00> : vector<8x32xf32>
    %200 = tpu.matmul %199, %4, %cst_81 {dimension_numbers = #tpu.dot_dimension_numbers<[1], [0], [0], [1], [0, 0, 1, 1], [], []>} : vector<8x32xbf16>, vector<32x32xbf16>, vector<8x32xf32> -> vector<8x32xf32>
    %201 = vector.broadcast %5 : vector<1x32xf32> to vector<8x32xf32>
    %202 = arith.addf %200, %201 : vector<8x32xf32>
    %c0_82 = arith.constant 0 : index
    %c0_83 = arith.constant 0 : index
    %c0_84 = arith.constant 0 : index
    %203 = vector.load %arg15[%c0_82, %c0_83, %c0_84] : memref<1x8x32xf32, #tpu.memory_space<vmem>>, vector<1x8x32xf32>
    %204 = vector.shape_cast %203 : vector<1x8x32xf32> to vector<8x32xf32>
    %205 = vector.shape_cast %202 : vector<8x32xf32> to vector<1x8x32xf32>
    tpu.vector_store %arg15[%c0_82, %c0_83, %c0_84], %205 {strides = array<i32>} : memref<1x8x32xf32, #tpu.memory_space<vmem>>, vector<1x8x32xf32>,
    %206 = arith.truncf %102 : vector<8x32xf32> to vector<8x32xbf16>
    %c0_85 = arith.constant 0 : index
    %c0_86 = arith.constant 0 : index
    %207 = vector.load %arg11[%c0_85, %c0_86] : memref<32x32xbf16, #tpu.memory_space<vmem>>, vector<32x32xbf16>
    %cst_87 = arith.constant dense<0.000000e+00> : vector<8x32xf32>
    %208 = tpu.matmul %206, %207, %cst_87 {dimension_numbers = #tpu.dot_dimension_numbers<[1], [0], [0], [1], [0, 0, 1, 1], [], []>} : vector<8x32xbf16>, vector<32x32xbf16>, vector<8x32xf32> -> vector<8x32xf32>
    %209 = arith.truncf %202 : vector<8x32xf32> to vector<8x32xbf16>
    %c0_88 = arith.constant 0 : index
    %c0_89 = arith.constant 0 : index
    %210 = vector.load %arg12[%c0_88, %c0_89] : memref<32x32xbf16, #tpu.memory_space<vmem>>, vector<32x32xbf16>
    %cst_90 = arith.constant dense<0.000000e+00> : vector<8x32xf32>
    %211 = tpu.matmul %209, %210, %cst_90 {dimension_numbers = #tpu.dot_dimension_numbers<[1], [0], [0], [1], [0, 0, 1, 1], [], []>} : vector<8x32xbf16>, vector<32x32xbf16>, vector<8x32xf32> -> vector<8x32xf32>
    %212 = arith.addf %208, %211 : vector<8x32xf32>
    %c0_91 = arith.constant 0 : index
    %c0_92 = arith.constant 0 : index
    %213 = vector.load %arg13[%c0_91, %c0_92] : memref<1x32xf32, #tpu.memory_space<vmem>>, vector<1x32xf32>
    %214 = vector.broadcast %213 : vector<1x32xf32> to vector<8x32xf32>
    %215 = arith.addf %212, %214 : vector<8x32xf32>
    %c0_93 = arith.constant 0 : index
    %c0_94 = arith.constant 0 : index
    %c0_95 = arith.constant 0 : index
    %216 = vector.load %arg6[%c0_93, %c0_94, %c0_95] : memref<1x8x32xf32, #tpu.memory_space<vmem>>, vector<1x8x32xf32>
    %217 = vector.shape_cast %216 : vector<1x8x32xf32> to vector<8x32xf32>
    %218 = arith.addf %215, %217 : vector<8x32xf32>
    %c0_96 = arith.constant 0 : index
    %c0_97 = arith.constant 0 : index
    %c0_98 = arith.constant 0 : index
    %219 = vector.load %arg16[%c0_96, %c0_97, %c0_98] : memref<1x8x32xf32, #tpu.memory_space<vmem>>, vector<1x8x32xf32>
    %220 = vector.shape_cast %219 : vector<1x8x32xf32> to vector<8x32xf32>
    %221 = vector.shape_cast %218 : vector<8x32xf32> to vector<1x8x32xf32>
    tpu.vector_store %arg16[%c0_96, %c0_97, %c0_98], %221 {strides = array<i32>} : memref<1x8x32xf32, #tpu.memory_space<vmem>>, vector<1x8x32xf32>,
    return
  }
  func.func @transform_0(%arg0: i32) -> (i32, i32, i32) {
    %c0_i32 = arith.constant 0 : i32
    %c0_i32_0 = arith.constant 0 : i32
    %c0_i32_1 = arith.constant 0 : i32
    return %arg0, %c0_i32, %c0_i32_0 : i32, i32, i32
  }
  func.func @transform_1(%arg0: i32) -> (i32, i32, i32) {
    %c0_i32 = arith.constant 0 : i32
    %c0_i32_0 = arith.constant 0 : i32
    %c0_i32_1 = arith.constant 0 : i32
    return %arg0, %c0_i32, %c0_i32_0 : i32, i32, i32
  }
  func.func @transform_2(%arg0: i32) -> (i32, i32, i32) {
    %c0_i32 = arith.constant 0 : i32
    %c0_i32_0 = arith.constant 0 : i32
    %c0_i32_1 = arith.constant 0 : i32
    return %arg0, %c0_i32, %c0_i32_0 : i32, i32, i32
  }
  func.func @transform_3(%arg0: i32) -> (i32, i32, i32) {
    %c0_i32 = arith.constant 0 : i32
    %c0_i32_0 = arith.constant 0 : i32
    %c0_i32_1 = arith.constant 0 : i32
    return %arg0, %c0_i32, %c0_i32_0 : i32, i32, i32
  }
  func.func @transform_4(%arg0: i32) -> (i32, i32, i32) {
    %c0_i32 = arith.constant 0 : i32
    %c0_i32_0 = arith.constant 0 : i32
    %c0_i32_1 = arith.constant 0 : i32
    return %arg0, %c0_i32, %c0_i32_0 : i32, i32, i32
  }
  func.func @transform_5(%arg0: i32) -> (i32, i32, i32) {
    %c0_i32 = arith.constant 0 : i32
    %c0_i32_0 = arith.constant 0 : i32
    %c0_i32_1 = arith.constant 0 : i32
    return %arg0, %c0_i32, %c0_i32_0 : i32, i32, i32
  }
  func.func @transform_6(%arg0: i32) -> (i32, i32) {
    %c0_i32 = arith.constant 0 : i32
    %c0_i32_0 = arith.constant 0 : i32
    %c0_i32_1 = arith.constant 0 : i32
    return %c0_i32, %c0_i32_0 : i32, i32
  }
  func.func @transform_7(%arg0: i32) -> (i32, i32) {
    %c0_i32 = arith.constant 0 : i32
    %c0_i32_0 = arith.constant 0 : i32
    %c0_i32_1 = arith.constant 0 : i32
    return %c0_i32, %c0_i32_0 : i32, i32
  }
  func.func @transform_8(%arg0: i32) -> (i32, i32) {
    %c0_i32 = arith.constant 0 : i32
    %c0_i32_0 = arith.constant 0 : i32
    %c0_i32_1 = arith.constant 0 : i32
    return %c0_i32, %c0_i32_0 : i32, i32
  }
  func.func @transform_9(%arg0: i32) -> (i32, i32) {
    %c0_i32 = arith.constant 0 : i32
    %c0_i32_0 = arith.constant 0 : i32
    %c0_i32_1 = arith.constant 0 : i32
    return %c0_i32, %c0_i32_0 : i32, i32
  }
  func.func @transform_10(%arg0: i32) -> (i32, i32) {
    %c0_i32 = arith.constant 0 : i32
    %c0_i32_0 = arith.constant 0 : i32
    %c0_i32_1 = arith.constant 0 : i32
    return %c0_i32, %c0_i32_0 : i32, i32
  }
  func.func @transform_11(%arg0: i32) -> (i32, i32) {
    %c0_i32 = arith.constant 0 : i32
    %c0_i32_0 = arith.constant 0 : i32
    %c0_i32_1 = arith.constant 0 : i32
    return %c0_i32, %c0_i32_0 : i32, i32
  }
  func.func @transform_12(%arg0: i32) -> (i32, i32) {
    %c0_i32 = arith.constant 0 : i32
    %c0_i32_0 = arith.constant 0 : i32
    %c0_i32_1 = arith.constant 0 : i32
    return %c0_i32, %c0_i32_0 : i32, i32
  }
  func.func @transform_13(%arg0: i32) -> (i32, i32, i32) {
    %c0_i32 = arith.constant 0 : i32
    %c0_i32_0 = arith.constant 0 : i32
    %c0_i32_1 = arith.constant 0 : i32
    return %arg0, %c0_i32, %c0_i32_0 : i32, i32, i32
  }
  func.func @transform_14(%arg0: i32) -> (i32, i32, i32) {
    %c0_i32 = arith.constant 0 : i32
    %c0_i32_0 = arith.constant 0 : i32
    %c0_i32_1 = arith.constant 0 : i32
    return %arg0, %c0_i32, %c0_i32_0 : i32, i32, i32
  }
  func.func @transform_15(%arg0: i32) -> (i32, i32, i32) {
    %c0_i32 = arith.constant 0 : i32
    %c0_i32_0 = arith.constant 0 : i32
    %c0_i32_1 = arith.constant 0 : i32
    return %arg0, %c0_i32, %c0_i32_0 : i32, i32, i32
  }
}

module attributes {stable_mosaic.version = 11 : i64} {
  func.func @_ffn_kernel(%arg0: i32, %arg1: i32, %arg2: memref<16x32xf32, #tpu.memory_space<vmem>>, %arg3: memref<1x32xf32, #tpu.memory_space<vmem>>, %arg4: memref<1x32xf32, #tpu.memory_space<vmem>>, %arg5: memref<32x64xbf16, #tpu.memory_space<vmem>>, %arg6: memref<1x64xf32, #tpu.memory_space<vmem>>, %arg7: memref<64x32xbf16, #tpu.memory_space<vmem>>, %arg8: memref<1x32xf32, #tpu.memory_space<vmem>>, %arg9: memref<16x32xf32, #tpu.memory_space<vmem>>, %arg10: memref<16x32xbf16, #tpu.memory_space<vmem>>, %arg11: memref<16x32xf32, #tpu.memory_space<vmem>>) attributes {dimension_semantics = [#tpu.dimension_semantics<parallel>, #tpu.dimension_semantics<arbitrary>], iteration_bounds = array<i64: 1, 1>, scalar_prefetch = 0 : i64, scratch_operands = 2 : i64, tpu.core_type = #tpu.core_type<tc>, window_params = [{transform_indices = @transform_0, window_bounds = array<i64: 16, 32>}, {pipeline_mode = #tpu.pipeline_mode<synchronous>, transform_indices = @transform_1, window_bounds = array<i64: 1, 32>}, {pipeline_mode = #tpu.pipeline_mode<synchronous>, transform_indices = @transform_2, window_bounds = array<i64: 1, 32>}, {transform_indices = @transform_3, window_bounds = array<i64: 32, 64>}, {transform_indices = @transform_4, window_bounds = array<i64: 1, 64>}, {transform_indices = @transform_5, window_bounds = array<i64: 64, 32>}, {pipeline_mode = #tpu.pipeline_mode<synchronous>, transform_indices = @transform_6, window_bounds = array<i64: 1, 32>}, {transform_indices = @transform_7, window_bounds = array<i64: 16, 32>}]} {
    %c0_i32 = arith.constant 0 : i32
    %0 = arith.cmpi eq, %arg1, %c0_i32 : i32
    %1 = arith.extui %0 : i1 to i32
    %c0_i32_0 = arith.constant 0 : i32
    %2 = arith.cmpi ne, %1, %c0_i32_0 : i32
    scf.if %2 {
      %c0_16 = arith.constant 0 : index
      %c0_17 = arith.constant 0 : index
      %20 = vector.load %arg2[%c0_16, %c0_17] : memref<16x32xf32, #tpu.memory_space<vmem>>, vector<16x32xf32>
      %c0_18 = arith.constant 0 : index
      %c0_19 = arith.constant 0 : index
      %21 = vector.load %arg3[%c0_18, %c0_19] : memref<1x32xf32, #tpu.memory_space<vmem>>, vector<1x32xf32>
      %c0_20 = arith.constant 0 : index
      %c0_21 = arith.constant 0 : index
      %22 = vector.load %arg4[%c0_20, %c0_21] : memref<1x32xf32, #tpu.memory_space<vmem>>, vector<1x32xf32>
      %cst_22 = arith.constant dense<0.000000e+00> : vector<16xf32>
      %23 = vector.multi_reduction <add>, %20, %cst_22 [1] : vector<16x32xf32> to vector<16xf32>
      %24 = vector.shape_cast %23 : vector<16xf32> to vector<16x1xf32>
      %cst_23 = arith.constant 3.200000e+01 : f32
      %25 = vector.broadcast %cst_23 : f32 to vector<16x1xf32>
      %26 = arith.divf %24, %25 : vector<16x1xf32>
      %27 = vector.broadcast %26 : vector<16x1xf32> to vector<16x32xf32>
      %28 = arith.subf %20, %27 : vector<16x32xf32>
      %29 = arith.mulf %28, %28 : vector<16x32xf32>
      %cst_24 = arith.constant dense<0.000000e+00> : vector<16xf32>
      %30 = vector.multi_reduction <add>, %29, %cst_24 [1] : vector<16x32xf32> to vector<16xf32>
      %31 = vector.shape_cast %30 : vector<16xf32> to vector<16x1xf32>
      %cst_25 = arith.constant 3.200000e+01 : f32
      %32 = vector.broadcast %cst_25 : f32 to vector<16x1xf32>
      %33 = arith.divf %31, %32 : vector<16x1xf32>
      %34 = vector.broadcast %26 : vector<16x1xf32> to vector<16x32xf32>
      %35 = arith.subf %20, %34 : vector<16x32xf32>
      %cst_26 = arith.constant 9.99999997E-7 : f32
      %36 = vector.broadcast %cst_26 : f32 to vector<16x1xf32>
      %37 = arith.addf %33, %36 : vector<16x1xf32>
      %38 = math.rsqrt %37 : vector<16x1xf32>
      %39 = vector.broadcast %38 : vector<16x1xf32> to vector<16x32xf32>
      %40 = arith.mulf %35, %39 : vector<16x32xf32>
      %41 = vector.broadcast %21 : vector<1x32xf32> to vector<16x32xf32>
      %42 = arith.mulf %40, %41 : vector<16x32xf32>
      %43 = vector.broadcast %22 : vector<1x32xf32> to vector<16x32xf32>
      %44 = arith.addf %42, %43 : vector<16x32xf32>
      %45 = arith.truncf %44 : vector<16x32xf32> to vector<16x32xbf16>
      %c0_27 = arith.constant 0 : index
      %c0_28 = arith.constant 0 : index
      %46 = vector.load %arg10[%c0_27, %c0_28] : memref<16x32xbf16, #tpu.memory_space<vmem>>, vector<16x32xbf16>
      tpu.vector_store %arg10[%c0_27, %c0_28], %45 {strides = array<i32>} : memref<16x32xbf16, #tpu.memory_space<vmem>>, vector<16x32xbf16>,
      %c0_29 = arith.constant 0 : index
      %c0_30 = arith.constant 0 : index
      %47 = vector.load %arg8[%c0_29, %c0_30] : memref<1x32xf32, #tpu.memory_space<vmem>>, vector<1x32xf32>
      %48 = vector.broadcast %47 : vector<1x32xf32> to vector<16x32xf32>
      %49 = arith.addf %20, %48 : vector<16x32xf32>
      %c0_31 = arith.constant 0 : index
      %c0_32 = arith.constant 0 : index
      %50 = vector.load %arg11[%c0_31, %c0_32] : memref<16x32xf32, #tpu.memory_space<vmem>>, vector<16x32xf32>
      tpu.vector_store %arg11[%c0_31, %c0_32], %49 {strides = array<i32>} : memref<16x32xf32, #tpu.memory_space<vmem>>, vector<16x32xf32>,
    } else {
    }
    %c0 = arith.constant 0 : index
    %c0_1 = arith.constant 0 : index
    %3 = vector.load %arg10[%c0, %c0_1] : memref<16x32xbf16, #tpu.memory_space<vmem>>, vector<16x32xbf16>
    %c0_2 = arith.constant 0 : index
    %c0_3 = arith.constant 0 : index
    %4 = vector.load %arg5[%c0_2, %c0_3] : memref<32x64xbf16, #tpu.memory_space<vmem>>, vector<32x64xbf16>
    %cst = arith.constant dense<0.000000e+00> : vector<16x64xf32>
    %5 = tpu.matmul %3, %4, %cst {dimension_numbers = #tpu.dot_dimension_numbers<[1], [0], [0], [1], [0, 0, 1, 1], [], []>} : vector<16x32xbf16>, vector<32x64xbf16>, vector<16x64xf32> -> vector<16x64xf32>
    %c0_4 = arith.constant 0 : index
    %c0_5 = arith.constant 0 : index
    %6 = vector.load %arg6[%c0_4, %c0_5] : memref<1x64xf32, #tpu.memory_space<vmem>>, vector<1x64xf32>
    %7 = vector.broadcast %6 : vector<1x64xf32> to vector<16x64xf32>
    %8 = arith.addf %5, %7 : vector<16x64xf32>
    %cst_6 = arith.constant 0.000000e+00 : f32
    %9 = vector.broadcast %cst_6 : f32 to vector<16x64xf32>
    %10 = arith.maximumf %8, %9 : vector<16x64xf32>
    %c0_7 = arith.constant 0 : index
    %c0_8 = arith.constant 0 : index
    %11 = vector.load %arg11[%c0_7, %c0_8] : memref<16x32xf32, #tpu.memory_space<vmem>>, vector<16x32xf32>
    %12 = arith.truncf %10 : vector<16x64xf32> to vector<16x64xbf16>
    %c0_9 = arith.constant 0 : index
    %c0_10 = arith.constant 0 : index
    %13 = vector.load %arg7[%c0_9, %c0_10] : memref<64x32xbf16, #tpu.memory_space<vmem>>, vector<64x32xbf16>
    %cst_11 = arith.constant dense<0.000000e+00> : vector<16x32xf32>
    %14 = tpu.matmul %12, %13, %cst_11 {dimension_numbers = #tpu.dot_dimension_numbers<[1], [0], [0], [1], [0, 0, 1, 1], [], []>} : vector<16x64xbf16>, vector<64x32xbf16>, vector<16x32xf32> -> vector<16x32xf32>
    %15 = arith.addf %11, %14 : vector<16x32xf32>
    %c0_12 = arith.constant 0 : index
    %c0_13 = arith.constant 0 : index
    %16 = vector.load %arg11[%c0_12, %c0_13] : memref<16x32xf32, #tpu.memory_space<vmem>>, vector<16x32xf32>
    tpu.vector_store %arg11[%c0_12, %c0_13], %15 {strides = array<i32>} : memref<16x32xf32, #tpu.memory_space<vmem>>, vector<16x32xf32>,
    %c0_i32_14 = arith.constant 0 : i32
    %17 = arith.cmpi eq, %arg1, %c0_i32_14 : i32
    %18 = arith.extui %17 : i1 to i32
    %c0_i32_15 = arith.constant 0 : i32
    %19 = arith.cmpi ne, %18, %c0_i32_15 : i32
    scf.if %19 {
      %c0_16 = arith.constant 0 : index
      %c0_17 = arith.constant 0 : index
      %20 = vector.load %arg11[%c0_16, %c0_17] : memref<16x32xf32, #tpu.memory_space<vmem>>, vector<16x32xf32>
      %c0_18 = arith.constant 0 : index
      %c0_19 = arith.constant 0 : index
      %21 = vector.load %arg9[%c0_18, %c0_19] : memref<16x32xf32, #tpu.memory_space<vmem>>, vector<16x32xf32>
      tpu.vector_store %arg9[%c0_18, %c0_19], %20 {strides = array<i32>} : memref<16x32xf32, #tpu.memory_space<vmem>>, vector<16x32xf32>,
    } else {
    }
    return
  }
  func.func @transform_0(%arg0: i32, %arg1: i32) -> (i32, i32) {
    %c0_i32 = arith.constant 0 : i32
    %c0_i32_0 = arith.constant 0 : i32
    return %arg0, %c0_i32 : i32, i32
  }
  func.func @transform_1(%arg0: i32, %arg1: i32) -> (i32, i32) {
    %c0_i32 = arith.constant 0 : i32
    %c0_i32_0 = arith.constant 0 : i32
    %c0_i32_1 = arith.constant 0 : i32
    return %c0_i32, %c0_i32_0 : i32, i32
  }
  func.func @transform_2(%arg0: i32, %arg1: i32) -> (i32, i32) {
    %c0_i32 = arith.constant 0 : i32
    %c0_i32_0 = arith.constant 0 : i32
    %c0_i32_1 = arith.constant 0 : i32
    return %c0_i32, %c0_i32_0 : i32, i32
  }
  func.func @transform_3(%arg0: i32, %arg1: i32) -> (i32, i32) {
    %c0_i32 = arith.constant 0 : i32
    %c0_i32_0 = arith.constant 0 : i32
    return %c0_i32, %arg1 : i32, i32
  }
  func.func @transform_4(%arg0: i32, %arg1: i32) -> (i32, i32) {
    %c0_i32 = arith.constant 0 : i32
    %c0_i32_0 = arith.constant 0 : i32
    return %c0_i32, %arg1 : i32, i32
  }
  func.func @transform_5(%arg0: i32, %arg1: i32) -> (i32, i32) {
    %c0_i32 = arith.constant 0 : i32
    %c0_i32_0 = arith.constant 0 : i32
    return %arg1, %c0_i32 : i32, i32
  }
  func.func @transform_6(%arg0: i32, %arg1: i32) -> (i32, i32) {
    %c0_i32 = arith.constant 0 : i32
    %c0_i32_0 = arith.constant 0 : i32
    %c0_i32_1 = arith.constant 0 : i32
    return %c0_i32, %c0_i32_0 : i32, i32
  }
  func.func @transform_7(%arg0: i32, %arg1: i32) -> (i32, i32) {
    %c0_i32 = arith.constant 0 : i32
    %c0_i32_0 = arith.constant 0 : i32
    return %arg0, %c0_i32 : i32, i32
  }
}

</mosaic_0001>

<llo_original>
// kernel: transformer_decoder_layer.5
$region0: #{transformer_decoder_layer.5}
  #allocation0 [shape = 'u32[]', space=smem, size = 0x4, offset = 0x4, fixed_abs, tag = 'smem constant byte address 0x4 - core index']
  #allocation1 [shape = 'u32[144,128]{1,0:T(1,128)}', space=vmem, size = 0x12000, scoped, tag = 'internal scratch']
  %s0 = inlined_call_operand.vmem [shape: f32[16,32], index: 0, kind: input, shape index: {}]
  %s1 = inlined_call_operand.vmem [shape: f32[1,32], index: 1, kind: input, shape index: {}]
  %s2 = inlined_call_operand.vmem [shape: f32[1,32], index: 2, kind: input, shape index: {}]
  %s3 = inlined_call_operand.vmem [shape: bf16[32,96], index: 3, kind: input, shape index: {}]
  %s4 = inlined_call_operand.vmem [shape: f32[1,96], index: 4, kind: input, shape index: {}]
  %s5 = inlined_call_operand.vmem [shape: bf16[16,32], index: 5, kind: output, shape index: {0}]
  %s6 = inlined_call_operand.vmem [shape: bf16[16,64], index: 6, kind: output, shape index: {1}]
  %7 = xla_tuple %s5, %s6
  %s8 = sld [smem:[#allocation0]]
  $region38: #{transformer_decoder_layer.5} parent=0
    _
  %s10 = ssub.s32 1, %s8
  %s11 = scalar_select 0, %s10, %s8
  // Predicated region
  $region2: #{transformer_decoder_layer.5} parent=0 // pred_check
    _
  $region3: #{transformer_decoder_layer.5} parent=0 // pred_check_branch
    %13 = sbr.rel (0) target = $region5
  $region4: #{transformer_decoder_layer.5} parent=0 // pred_region
    _
  $region5: #{transformer_decoder_layer.5} parent=0 // pred_fallthru
    _
  // Predicated region
  $region6: #{transformer_decoder_layer.5} parent=0 // pred_check
    _
  $region7: #{transformer_decoder_layer.5} parent=0 // pred_check_branch
    %15 = sbr.rel (0) target = $region9
  $region8: #{transformer_decoder_layer.5} parent=0 // pred_region
    _
  $region9: #{transformer_decoder_layer.5} parent=0 // pred_fallthru
    _
  // Predicated region
  $region10: #{transformer_decoder_layer.5} parent=0 // pred_check
    _
  $region11: #{transformer_decoder_layer.5} parent=0 // pred_check_branch
    %17 = sbr.rel (0) target = $region13
  $region12: #{transformer_decoder_layer.5} parent=0 // pred_region
    _
  $region13: #{transformer_decoder_layer.5} parent=0 // pred_fallthru
    _
  // Predicated region
  $region14: #{transformer_decoder_layer.5} parent=0 // pred_check
    _
  $region15: #{transformer_decoder_layer.5} parent=0 // pred_check_branch
    %19 = sbr.rel (0) target = $region17
  $region16: #{transformer_decoder_layer.5} parent=0 // pred_region
    _
  $region17: #{transformer_decoder_layer.5} parent=0 // pred_fallthru
    _
  // Predicated region
  $region18: #{transformer_decoder_layer.5} parent=0 // pred_check
    _
  $region19: #{transformer_decoder_layer.5} parent=0 // pred_check_branch
    %21 = sbr.rel (0) target = $region21
  $region20: #{transformer_decoder_layer.5} parent=0 // pred_region
    _
  $region21: #{transformer_decoder_layer.5} parent=0 // pred_fallthru
    _
  %v23 = vld [vmem:[%s0] sm:$0xff]
  %v24 = vld [vmem:[%s0 + $0x8] sm:$0xff]
  %v25 = vld [vmem:[%s1] sm:$0x1]
  %v26 = vld [vmem:[%s2] sm:$0x1]
  %vm27 = vcmask 261120
  %v28 = vsel %vm27, %v23, 0.0
  %29 = vadd.xlane.f32.xlu0 %v28
  %v30 = vpop.xlane.xlu0 %29
  %v31 = vsel %vm27, %v24, 0.0
  %32 = vadd.xlane.f32.xlu0 %v31
  %v33 = vpop.xlane.xlu0 %32
  %v34 = vrcp.pop 32.0
  %v35 = vmul.f32 %v30, %v34
  %v36 = vmul.f32 %v33, %v34
  %v37 = vsub.f32 %v23, %v35
  %v38 = vsub.f32 %v24, %v36
  %v39 = vmul.f32 %v37, %v37
  %v40 = vmul.f32 %v38, %v38
  %v41 = vsel %vm27, %v39, 0.0
  %42 = vadd.xlane.f32.xlu0 %v41
  %v43 = vpop.xlane.xlu0 %42
  %v44 = vsel %vm27, %v40, 0.0
  %45 = vadd.xlane.f32.xlu0 %v44
  %v46 = vpop.xlane.xlu0 %45
  %v47 = vmul.f32 %v43, %v34
  %v48 = vmul.f32 %v46, %v34
  %v49 = vadd.f32 %v47, 1e-06
  %v50 = vadd.f32 %v48, 1e-06
  %v51 = vrsqrt.pop %v49
  %v52 = vrsqrt.pop %v50
  %v53 = vmul.f32 %v37, %v51
  %v54 = vmul.f32 %v38, %v52
  %v56 = vlaneseq
  %v57 = vshrl.u32 %v56, 7
  %v58 = vsub.s32 0, %v57
  %v59 = vrot.slane %v25, %v58
  %v61 = vmul.f32 %v53, %v59
  %v62 = vmul.f32 %v54, %v59
  %v64 = vlaneseq
  %v65 = vshrl.u32 %v64, 7
  %v66 = vsub.s32 0, %v65
  %v67 = vrot.slane %v26, %v66
  %v69 = vadd.f32 %v61, %v67
  %v70 = vadd.f32 %v62, %v67
  %v71 = vpack.c.bf16 %v70, %v69
  %v72 = vld [vmem:[%s3] sm:$0xf]
  %v73 = vld [vmem:[%s3 + $0x4] sm:$0xf]
  %v74 = vld [vmem:[%s3 + $0x8] sm:$0xf]
  %v75 = vld [vmem:[%s3 + $0xc] sm:$0xf]
  %v76 = vld [vmem:[%s4] sm:$0x1]
  %v78 = vlaneseq
  %v79 = vshrl.u32 %v78, 7
  %v80 = vsub.s32 0, %v79
  %v81 = vrot.slane %v76, %v80
  %v87 = vunpack.c.l.b16 %v72
  %v88 = vunpack.c.l.b16 %v73
  %v89 = vunpack.c.l.b16 %v74
  %v90 = vunpack.c.l.b16 %v75
  %v91 = vpack.c.b16 %v88, %v87
  %v92 = vpack.c.b16 %v90, %v89
  %v96 = vsel %vm27, %v71, 0
  %98 = vmatprep.subr.bf16.mxu0 0
  %99 = vmatpush1.bf16.msra.mxu0 0
  %100 = vmatprep.subr.bf16.mxu0 0
  %101 = vmatpush1.bf16.msra.mxu0 0
  %102 = vmatprep.subr.bf16.mxu0 0
  %103 = vmatpush1.bf16.msra.mxu0 0
  %104 = vmatprep.subr.bf16.mxu0 0
  %105 = vmatpush1.bf16.msra.mxu0 0
  %106 = vmatprep.subr.bf16.mxu0 0
  %107 = vmatpush1.bf16.msra.mxu0 0
  %108 = vmatprep.subr.bf16.mxu0 0
  %109 = vmatpush1.bf16.msra.mxu0 0
  %110 = vmatprep.subr.bf16.mxu0 0
  %111 = vmatpush1.bf16.msra.mxu0 %v92
  %112 = vmatprep.subr.bf16.mxu0 0
  %113 = vmatpush1.bf16.msra.mxu0 %v91
  %114 = vmatprep.subr.bf16.mxu0 0
  %115 = vmatpush2.bf16.msra.mxu0 0
  %116 = vmatprep.subr.bf16.mxu0 0
  %117 = vmatpush2.bf16.msra.mxu0 0
  %118 = vmatprep.subr.bf16.mxu0 0
  %119 = vmatpush2.bf16.msra.mxu0 0
  %120 = vmatprep.subr.bf16.mxu0 0
  %121 = vmatpush2.bf16.msra.mxu0 0
  %122 = vmatprep.subr.bf16.mxu0 0
  %123 = vmatpush2.bf16.msra.mxu0 0
  %124 = vmatprep.subr.bf16.mxu0 0
  %125 = vmatpush2.bf16.msra.mxu0 0
  %126 = vmatprep.subr.bf16.mxu0 0
  %127 = vmatpush2.bf16.msra.mxu0 0
  %128 = vmatprep.subr.bf16.mxu0 0
  %129 = vmatpush2.bf16.msra.mxu0 0
  %130 = vmatprep.mubr.bf16.mxu0 0
  %131 = vmatmul.mubr.bf16.gmra.mxu0 %v96
  %v132 = vpop.f32.mrf.mxu0
  %v133 = vadd.f32 %v81, %v132
  %v134 = vpop.f32.mrf.mxu0
  %v135 = vpop.f32.mrf.mxu0
  %v136 = vadd.f32 %v81, %v135
  %v137 = vpop.f32.mrf.mxu0
  %138 = vdwg.mxu0
  %v139 = vpack.c.bf16 %v136, %v133
  %v141 = vunpack.c.l.b16 %v139
  %v142 = vunpack.c.h.b16 %v139
  %v143 = vpack.c.b16 %v141, %v141
  %v144 = vpack.c.b16 %v142, %v142
  %vm147 = vcmask 257024
  %148 = vst.msk [vmem:[%s5] sm:$0xf] %vm147, %v143
  %149 = vst.msk [vmem:[%s5 + $0x4] sm:$0xf] %vm147, %v144
  %150 = vrot.lane.b32.xlu0 %v143, 96
  %v151 = vpop.permute.xlu0 %150
  %152 = vrot.lane.b32.xlu0 %v144, 96
  %v153 = vpop.permute.xlu0 %152
  %vm156 = vcmask 519168
  %157 = vst.msk [vmem:[%s6] sm:$0xf] %vm156, %v151
  %158 = vst.msk [vmem:[%s6 + $0x4] sm:$0xf] %vm156, %v153
  // Predicated region
  $region22: #{transformer_decoder_layer.5} parent=0 // pred_check
    _
  $region23: #{transformer_decoder_layer.5} parent=0 // pred_check_branch
    %160 = sbr.rel (0) target = $region25
  $region24: #{transformer_decoder_layer.5} parent=0 // pred_region
    _
  $region25: #{transformer_decoder_layer.5} parent=0 // pred_fallthru
    _
  // Predicated region
  $region26: #{transformer_decoder_layer.5} parent=0 // pred_check
    _
  $region27: #{transformer_decoder_layer.5} parent=0 // pred_check_branch
    %162 = sbr.rel (0) target = $region29
  $region28: #{transformer_decoder_layer.5} parent=0 // pred_region
    _
  $region29: #{transformer_decoder_layer.5} parent=0 // pred_fallthru
    _
  // Predicated region
  $region30: #{transformer_decoder_layer.5} parent=0 // pred_check
    _
  $region31: #{transformer_decoder_layer.5} parent=0 // pred_check_branch
    %164 = sbr.rel (0) target = $region33
  $region32: #{transformer_decoder_layer.5} parent=0 // pred_region
    _
  $region33: #{transformer_decoder_layer.5} parent=0 // pred_fallthru
    _
  // Predicated region
  $region34: #{transformer_decoder_layer.5} parent=0 // pred_check
    _
  $region35: #{transformer_decoder_layer.5} parent=0 // pred_check_branch
    %166 = sbr.rel (0) target = $region37
  $region36: #{transformer_decoder_layer.5} parent=0 // pred_region
    _
  $region37: #{transformer_decoder_layer.5} parent=0 // pred_fallthru
    _

// kernel: transformer_decoder_layer.7
$region0: #{transformer_decoder_layer.7}
  #allocation0 [shape = 'u32[]', space=smem, size = 0x4, offset = 0x4, fixed_abs, tag = 'smem constant byte address 0x4 - core index']
  #allocation1 [shape = 'u32[144,128]{1,0:T(1,128)}', space=vmem, size = 0x12000, scoped, tag = 'internal scratch']
  %s0 = inlined_call_operand.vmem [shape: f32[16,32], index: 0, kind: input, shape index: {}]
  %s1 = inlined_call_operand.vmem [shape: f32[1,32], index: 1, kind: input, shape index: {}]
  %s2 = inlined_call_operand.vmem [shape: f32[1,32], index: 2, kind: input, shape index: {}]
  %s3 = inlined_call_operand.vmem [shape: bf16[32,32], index: 3, kind: input, shape index: {}]
  %s4 = inlined_call_operand.vmem [shape: f32[1,32], index: 4, kind: input, shape index: {}]
  %s5 = inlined_call_operand.hbm [shape: f32[16,32], index: 5, kind: output, shape index: {0}]
  %s6 = inlined_call_operand.vmem [shape: bf16[16,32], index: 6, kind: output, shape index: {1}]
  %7 = xla_tuple %s5, %s6
  %s8 = sld [smem:[#allocation0]]
  $region38: #{transformer_decoder_layer.7} parent=0
    _
  %s10 = ssub.s32 1, %s8
  %s11 = scalar_select 0, %s10, %s8
  $region1: #{transformer_decoder_layer.7} parent=0
    #allocation2 [shape = 'u8[8192]{0}', space=vmem, size = 0x2000, scoped, tag = 'output window, operand 0, single buffered']
    #allocation3 [shape = 's32[1]{0}', space=sflag, size = 0x4, scoped, tag = 'scoped memory for transformer_decoder_layer.7']
    %12 = vsyncpa [#allocation3], 0
    // Predicated region
    $region2: #{transformer_decoder_layer.7} parent=1 // pred_check
      _
    $region3: #{transformer_decoder_layer.7} parent=1 // pred_check_branch
      %14 = sbr.rel (0) target = $region5
    $region4: #{transformer_decoder_layer.7} parent=1 // pred_region
      _
    $region5: #{transformer_decoder_layer.7} parent=1 // pred_fallthru
      _
    // Predicated region
    $region6: #{transformer_decoder_layer.7} parent=1 // pred_check
      _
    $region7: #{transformer_decoder_layer.7} parent=1 // pred_check_branch
      %16 = sbr.rel (0) target = $region9
    $region8: #{transformer_decoder_layer.7} parent=1 // pred_region
      _
    $region9: #{transformer_decoder_layer.7} parent=1 // pred_fallthru
      _
    // Predicated region
    $region10: #{transformer_decoder_layer.7} parent=1 // pred_check
      _
    $region11: #{transformer_decoder_layer.7} parent=1 // pred_check_branch
      %18 = sbr.rel (0) target = $region13
    $region12: #{transformer_decoder_layer.7} parent=1 // pred_region
      _
    $region13: #{transformer_decoder_layer.7} parent=1 // pred_fallthru
      _
    // Predicated region
    $region14: #{transformer_decoder_layer.7} parent=1 // pred_check
      _
    $region15: #{transformer_decoder_layer.7} parent=1 // pred_check_branch
      %20 = sbr.rel (0) target = $region17
    $region16: #{transformer_decoder_layer.7} parent=1 // pred_region
      _
    $region17: #{transformer_decoder_layer.7} parent=1 // pred_fallthru
      _
    // Predicated region
    $region18: #{transformer_decoder_layer.7} parent=1 // pred_check
      _
    $region19: #{transformer_decoder_layer.7} parent=1 // pred_check_branch
      %22 = sbr.rel (0) target = $region21
    $region20: #{transformer_decoder_layer.7} parent=1 // pred_region
      _
    $region21: #{transformer_decoder_layer.7} parent=1 // pred_fallthru
      _
    %v24 = vld [vmem:[%s0] sm:$0xff]
    %v25 = vld [vmem:[%s0 + $0x8] sm:$0xff]
    %v26 = vld [vmem:[%s1] sm:$0x1]
    %v27 = vld [vmem:[%s2] sm:$0x1]
    %vm28 = vcmask 261120
    %v29 = vsel %vm28, %v24, 0.0
    %30 = vadd.xlane.f32.xlu0 %v29
    %v31 = vpop.xlane.xlu0 %30
    %v32 = vsel %vm28, %v25, 0.0
    %33 = vadd.xlane.f32.xlu0 %v32
    %v34 = vpop.xlane.xlu0 %33
    %v35 = vrcp.pop 32.0
    %v36 = vmul.f32 %v31, %v35
    %v37 = vmul.f32 %v34, %v35
    %v38 = vsub.f32 %v24, %v36
    %v39 = vsub.f32 %v25, %v37
    %v40 = vmul.f32 %v38, %v38
    %v41 = vmul.f32 %v39, %v39
    %v42 = vsel %vm28, %v40, 0.0
    %43 = vadd.xlane.f32.xlu0 %v42
    %v44 = vpop.xlane.xlu0 %43
    %v45 = vsel %vm28, %v41, 0.0
    %46 = vadd.xlane.f32.xlu0 %v45
    %v47 = vpop.xlane.xlu0 %46
    %v48 = vmul.f32 %v44, %v35
    %v49 = vmul.f32 %v47, %v35
    %v50 = vadd.f32 %v48, 1e-06
    %v51 = vadd.f32 %v49, 1e-06
    %v52 = vrsqrt.pop %v50
    %v53 = vrsqrt.pop %v51
    %v54 = vmul.f32 %v38, %v52
    %v55 = vmul.f32 %v39, %v53
    %v57 = vlaneseq
    %v58 = vshrl.u32 %v57, 7
    %v59 = vsub.s32 0, %v58
    %v60 = vrot.slane %v26, %v59
    %v62 = vmul.f32 %v54, %v60
    %v63 = vmul.f32 %v55, %v60
    %v65 = vlaneseq
    %v66 = vshrl.u32 %v65, 7
    %v67 = vsub.s32 0, %v66
    %v68 = vrot.slane %v27, %v67
    %v70 = vadd.f32 %v62, %v68
    %v71 = vadd.f32 %v63, %v68
    %72 = vst.msk [vmem:[#allocation2] sm:$0xff] %vm28, %v70
    %73 = vst.msk [vmem:[#allocation2 + $0x8] sm:$0xff] %vm28, %v71
    %v74 = vpack.c.bf16 %v71, %v70
    %v75 = vld [vmem:[%s3] sm:$0xf]
    %v76 = vld [vmem:[%s3 + $0x4] sm:$0xf]
    %v77 = vld [vmem:[%s3 + $0x8] sm:$0xf]
    %v78 = vld [vmem:[%s3 + $0xc] sm:$0xf]
    %v79 = vld [vmem:[%s4] sm:$0x1]
    %v81 = vlaneseq
    %v82 = vshrl.u32 %v81, 7
    %v83 = vsub.s32 0, %v82
    %v84 = vrot.slane %v79, %v83
    %v90 = vunpack.c.l.b16 %v75
    %v91 = vunpack.c.l.b16 %v76
    %v92 = vunpack.c.l.b16 %v77
    %v93 = vunpack.c.l.b16 %v78
    %v94 = vpack.c.b16 %v91, %v90
    %v95 = vpack.c.b16 %v93, %v92
    %v99 = vsel %vm28, %v74, 0
    %101 = vmatprep.subr.bf16.mxu0 0
    %102 = vmatpush1.bf16.msra.mxu0 0
    %103 = vmatprep.subr.bf16.mxu0 0
    %104 = vmatpush1.bf16.msra.mxu0 0
    %105 = vmatprep.subr.bf16.mxu0 0
    %106 = vmatpush1.bf16.msra.mxu0 0
    %107 = vmatprep.subr.bf16.mxu0 0
    %108 = vmatpush1.bf16.msra.mxu0 0
    %109 = vmatprep.subr.bf16.mxu0 0
    %110 = vmatpush1.bf16.msra.mxu0 0
    %111 = vmatprep.subr.bf16.mxu0 0
    %112 = vmatpush1.bf16.msra.mxu0 0
    %113 = vmatprep.subr.bf16.mxu0 0
    %114 = vmatpush1.bf16.msra.mxu0 %v95
    %115 = vmatprep.subr.bf16.mxu0 0
    %116 = vmatpush1.bf16.msra.mxu0 %v94
    %117 = vmatprep.subr.bf16.mxu0 0
    %118 = vmatpush2.bf16.msra.mxu0 0
    %119 = vmatprep.subr.bf16.mxu0 0
    %120 = vmatpush2.bf16.msra.mxu0 0
    %121 = vmatprep.subr.bf16.mxu0 0
    %122 = vmatpush2.bf16.msra.mxu0 0
    %123 = vmatprep.subr.bf16.mxu0 0
    %124 = vmatpush2.bf16.msra.mxu0 0
    %125 = vmatprep.subr.bf16.mxu0 0
    %126 = vmatpush2.bf16.msra.mxu0 0
    %127 = vmatprep.subr.bf16.mxu0 0
    %128 = vmatpush2.bf16.msra.mxu0 0
    %129 = vmatprep.subr.bf16.mxu0 0
    %130 = vmatpush2.bf16.msra.mxu0 0
    %131 = vmatprep.subr.bf16.mxu0 0
    %132 = vmatpush2.bf16.msra.mxu0 0
    %133 = vmatprep.mubr.bf16.mxu0 0
    %134 = vmatmul.mubr.bf16.gmra.mxu0 %v99
    %v135 = vpop.f32.mrf.mxu0
    %v136 = vadd.f32 %v84, %v135
    %v137 = vpop.f32.mrf.mxu0
    %v138 = vpop.f32.mrf.mxu0
    %v139 = vadd.f32 %v84, %v138
    %v140 = vpop.f32.mrf.mxu0
    %141 = vdwg.mxu0
    %v142 = vpack.c.bf16 %v139, %v136
    %v144 = vunpack.c.l.b16 %v142
    %v145 = vunpack.c.h.b16 %v142
    %v146 = vpack.c.b16 %v144, %v144
    %v147 = vpack.c.b16 %v145, %v145
    %vm150 = vcmask 257024
    %151 = vst.msk [vmem:[%s6] sm:$0xf] %vm150, %v146
    %152 = vst.msk [vmem:[%s6 + $0x4] sm:$0xf] %vm150, %v147
    // Predicated region
    $region22: #{transformer_decoder_layer.7} parent=1 // pred_check
      _
    $region23: #{transformer_decoder_layer.7} parent=1 // pred_check_branch
      %154 = sbr.rel (0) target = $region25
    $region24: #{transformer_decoder_layer.7} parent=1 // pred_region
      %s156 = ssub.s32 256, 256
      %157 = vsyncadd [#allocation3], %s156
      %s158 = sshll.u32 [#allocation2], 4
      %s159 = int_to_ptr.vmem [resolvable:$true] %s158
      %164 = dma.vmem_to_hbm [thread:$0]  %s159, 256, %s5, [#allocation3], 128, 128, 8
    $region25: #{transformer_decoder_layer.7} parent=1 // pred_fallthru
      _
    // Predicated region
    $region26: #{transformer_decoder_layer.7} parent=1 // pred_check
      _
    $region27: #{transformer_decoder_layer.7} parent=1 // pred_check_branch
      %166 = sbr.rel (0) target = $region29
    $region28: #{transformer_decoder_layer.7} parent=1 // pred_region
      _
    $region29: #{transformer_decoder_layer.7} parent=1 // pred_fallthru
      _
    // Predicated region
    $region30: #{transformer_decoder_layer.7} parent=1 // pred_check
      _
    $region31: #{transformer_decoder_layer.7} parent=1 // pred_check_branch
      %168 = sbr.rel (0) target = $region33
    $region32: #{transformer_decoder_layer.7} parent=1 // pred_region
      %169 = dma.done [#allocation3], 256
    $region33: #{transformer_decoder_layer.7} parent=1 // pred_fallthru
      _
    // Predicated region
    $region34: #{transformer_decoder_layer.7} parent=1 // pred_check
      _
    $region35: #{transformer_decoder_layer.7} parent=1 // pred_check_branch
      %171 = sbr.rel (0) target = $region37
    $region36: #{transformer_decoder_layer.7} parent=1 // pred_region
      _
    $region37: #{transformer_decoder_layer.7} parent=1 // pred_fallthru
      _
    %172 = vsyncpa [#allocation3], 1

// kernel: transformer_decoder_layer.6
$region0: #{transformer_decoder_layer.6}
  #allocation0 [shape = 'u32[]', space=smem, size = 0x4, offset = 0x4, fixed_abs, tag = 'smem constant byte address 0x4 - core index']
  #allocation1 [shape = 'u32[144,128]{1,0:T(1,128)}', space=vmem, size = 0x12000, scoped, tag = 'internal scratch']
  #allocation2 [shape = 'f32[8,32]{1,0:T(8,128)}', space=vmem, size = 0x1000, scoped, tag = 'scratch operand']
  %s0 = inlined_call_operand.vmem [shape: bf16[2,8,32], index: 0, kind: input, shape index: {}]
  %s1 = inlined_call_operand.vmem [shape: bf16[2,8,64], index: 1, kind: input, shape index: {}]
  %s2 = inlined_call_operand.vmem [shape: s32[2,1,8], index: 2, kind: input, shape index: {}]
  %s3 = inlined_call_operand.vmem [shape: f32[2,8,32], index: 3, kind: input, shape index: {}]
  %s4 = inlined_call_operand.vmem [shape: bf16[32,32], index: 4, kind: input, shape index: {}]
  %s5 = inlined_call_operand.vmem [shape: f32[1,32], index: 5, kind: input, shape index: {}]
  %s6 = inlined_call_operand.vmem [shape: f32[2,8,32], index: 6, kind: output, shape index: {}]
  %s7 = sld [smem:[#allocation0]]
  $region57: #{transformer_decoder_layer.6} parent=0
    _
  %s9 = ssub.s32 1, %s7
  %s10 = scalar_select 0, %s9, %s7
  loop: start=0, step=1, limit=4
  $region2: #{transformer_decoder_layer.6} parent=0 // loop_pre_header
    _
  $region3: #{transformer_decoder_layer.6} parent=0 // loop_header
    %s12 = sphi 0, %s16
    %p13 = scmp.ge.s32.totalorder %s12, 4
    %s19 = sphi 0, %s31
    %s20 = sphi 0, %s27
    %s21 = sphi 0, %s19
    %s22 = sphi 0, %s20
    %s23 = sphi 0, %s21
    %s24 = sphi 0, %s22
    %s36 = sphi 0, %s38
    %s39 = sphi 0, %s36
    %s40 = sphi 0, %s39
    %s56 = sphi 0, %s40
    %s62 = sphi 0, %s64
    %s65 = sphi 0, %s62
    %s66 = sphi 0, %s65
    %s82 = sphi 0, %s66
    %s88 = sphi 0, %s90
    %s91 = sphi 0, %s88
    %s92 = sphi 0, %s91
    %s108 = sphi 0, %s92
    %s116 = sphi 0, %s118
    %s119 = sphi 0, %s116
    %s120 = sphi 0, %s119
    %s136 = sphi 0, %s120
    %s140 = sphi 0, %s140
    %s142 = sphi 0, %s140
    %s143 = sphi 0, %s142
    %s157 = sphi 0, %s143
    %s161 = sphi 0, %s161
    %s163 = sphi 0, %s161
    %s164 = sphi 0, %s163
    %s178 = sphi 0, %s164
    %s186 = sphi 0, %s188
    %s189 = sphi 0, %s186
    %s190 = sphi 0, %s189
    %s206 = sphi 0, %s190
  $region4: #{transformer_decoder_layer.6} parent=0 // loop_header_branch
    %15 = sbr.rel (%p13) target = $region8
  $region5: #{transformer_decoder_layer.6} parent=0 // loop_body
    %s17 = ssub.s32 %s12, 1
    %s18 = ssub.s32 %s12, 2
    %s25 = sadd.s32 1, %s20
    %p26 = scmp.ge.s32.totalorder %s25, 1
    %s27 = scalar_select %p26, 0, %s25
    %s28 = sadd.s32 1, %s19
    %s29 = scalar_select %p26, %s28, %s19
    %p30 = scmp.ge.s32.totalorder %s29, 2
    %s31 = scalar_select %p30, 0, %s29
    %s32 = ssub.s32 %s19, %s31
    %s33 = ssub.s32 %s20, %s27
    %s34 = sor.u32 %s32, %s33
    %p35 = scmp.eq.s32.totalorder %s34, 0
    %s37 = sadd.s32 %s36, 1
    %s38 = scalar_select %p35, %s36, %s37
    %p41 = pneg %p35
    %p42 = scmp.eq.s32.totalorder %s12, 1
    %p43 = por %p41, %p42
    %p44 = scmp.ne.s32.totalorder %s36, %s39
    %p45 = scmp.eq.s32.totalorder %s12, 0
    %p46 = por %p44, %p45
    %p47 = scmp.ne.s32.totalorder %s36, %s39
    %p48 = scmp.eq.s32.totalorder %s17, 1
    %p49 = por %p47, %p48
    %p50 = scmp.ne.s32.totalorder %s39, %s40
    %p51 = scmp.eq.s32.totalorder %s17, 0
    %p52 = por %p50, %p51
    %p53 = scmp.ne.s32.totalorder %s39, %s40
    %p54 = scmp.eq.s32.totalorder %s18, 1
    %p55 = por %p53, %p54
    %p57 = scmp.ne.s32.totalorder %s40, %s56
    %p58 = scmp.eq.s32.totalorder %s18, 0
    %p59 = por %p57, %p58
    %s60 = ssub.s32 %s19, %s31
    %p61 = scmp.eq.s32.totalorder %s60, 0
    %s63 = sadd.s32 %s62, 1
    %s64 = scalar_select %p61, %s62, %s63
    %p67 = pneg %p61
    %p68 = scmp.eq.s32.totalorder %s12, 1
    %p69 = por %p67, %p68
    %p70 = scmp.ne.s32.totalorder %s62, %s65
    %p71 = scmp.eq.s32.totalorder %s12, 0
    %p72 = por %p70, %p71
    %p73 = scmp.ne.s32.totalorder %s62, %s65
    %p74 = scmp.eq.s32.totalorder %s17, 1
    %p75 = por %p73, %p74
    %p76 = scmp.ne.s32.totalorder %s65, %s66
    %p77 = scmp.eq.s32.totalorder %s17, 0
    %p78 = por %p76, %p77
    %p79 = scmp.ne.s32.totalorder %s65, %s66
    %p80 = scmp.eq.s32.totalorder %s18, 1
    %p81 = por %p79, %p80
    %p83 = scmp.ne.s32.totalorder %s66, %s82
    %p84 = scmp.eq.s32.totalorder %s18, 0
    %p85 = por %p83, %p84
    %s86 = ssub.s32 %s19, %s31
    %p87 = scmp.eq.s32.totalorder %s86, 0
    %s89 = sadd.s32 %s88, 1
    %s90 = scalar_select %p87, %s88, %s89
    %p93 = pneg %p87
    %p94 = scmp.eq.s32.totalorder %s12, 1
    %p95 = por %p93, %p94
    %p96 = scmp.ne.s32.totalorder %s88, %s91
    %p97 = scmp.eq.s32.totalorder %s12, 0
    %p98 = por %p96, %p97
    %p99 = scmp.ne.s32.totalorder %s88, %s91
    %p100 = scmp.eq.s32.totalorder %s17, 1
    %p101 = por %p99, %p100
    %p102 = scmp.ne.s32.totalorder %s91, %s92
    %p103 = scmp.eq.s32.totalorder %s17, 0
    %p104 = por %p102, %p103
    %p105 = scmp.ne.s32.totalorder %s91, %s92
    %p106 = scmp.eq.s32.totalorder %s18, 1
    %p107 = por %p105, %p106
    %p109 = scmp.ne.s32.totalorder %s92, %s108
    %p110 = scmp.eq.s32.totalorder %s18, 0
    %p111 = por %p109, %p110
    %s112 = ssub.s32 %s19, %s31
    %s113 = ssub.s32 %s20, %s27
    %s114 = sor.u32 %s112, %s113
    %p115 = scmp.eq.s32.totalorder %s114, 0
    %s117 = sadd.s32 %s116, 1
    %s118 = scalar_select %p115, %s116, %s117
    %p121 = pneg %p115
    %p122 = scmp.eq.s32.totalorder %s12, 1
    %p123 = por %p121, %p122
    %p124 = scmp.ne.s32.totalorder %s116, %s119
    %p125 = scmp.eq.s32.totalorder %s12, 0
    %p126 = por %p124, %p125
    %p127 = scmp.ne.s32.totalorder %s116, %s119
    %p128 = scmp.eq.s32.totalorder %s17, 1
    %p129 = por %p127, %p128
    %p130 = scmp.ne.s32.totalorder %s119, %s120
    %p131 = scmp.eq.s32.totalorder %s17, 0
    %p132 = por %p130, %p131
    %p133 = scmp.ne.s32.totalorder %s119, %s120
    %p134 = scmp.eq.s32.totalorder %s18, 1
    %p135 = por %p133, %p134
    %p137 = scmp.ne.s32.totalorder %s120, %s136
    %p138 = scmp.eq.s32.totalorder %s18, 0
    %p139 = por %p137, %p138
    %s141 = sadd.s32 %s140, 1
    %p144 = scmp.eq.s32.totalorder %s12, 1
    %p145 = scmp.ne.s32.totalorder %s140, %s142
    %p146 = scmp.eq.s32.totalorder %s12, 0
    %p147 = por %p145, %p146
    %p148 = scmp.ne.s32.totalorder %s140, %s142
    %p149 = scmp.eq.s32.totalorder %s17, 1
    %p150 = por %p148, %p149
    %p151 = scmp.ne.s32.totalorder %s142, %s143
    %p152 = scmp.eq.s32.totalorder %s17, 0
    %p153 = por %p151, %p152
    %p154 = scmp.ne.s32.totalorder %s142, %s143
    %p155 = scmp.eq.s32.totalorder %s18, 1
    %p156 = por %p154, %p155
    %p158 = scmp.ne.s32.totalorder %s143, %s157
    %p159 = scmp.eq.s32.totalorder %s18, 0
    %p160 = por %p158, %p159
    %s162 = sadd.s32 %s161, 1
    %p165 = scmp.eq.s32.totalorder %s12, 1
    %p166 = scmp.ne.s32.totalorder %s161, %s163
    %p167 = scmp.eq.s32.totalorder %s12, 0
    %p168 = por %p166, %p167
    %p169 = scmp.ne.s32.totalorder %s161, %s163
    %p170 = scmp.eq.s32.totalorder %s17, 1
    %p171 = por %p169, %p170
    %p172 = scmp.ne.s32.totalorder %s163, %s164
    %p173 = scmp.eq.s32.totalorder %s17, 0
    %p174 = por %p172, %p173
    %p175 = scmp.ne.s32.totalorder %s163, %s164
    %p176 = scmp.eq.s32.totalorder %s18, 1
    %p177 = por %p175, %p176
    %p179 = scmp.ne.s32.totalorder %s164, %s178
    %p180 = scmp.eq.s32.totalorder %s18, 0
    %p181 = por %p179, %p180
    %s182 = ssub.s32 %s19, %s31
    %s183 = ssub.s32 %s20, %s27
    %s184 = sor.u32 %s182, %s183
    %p185 = scmp.eq.s32.totalorder %s184, 0
    %s187 = sadd.s32 %s186, 1
    %s188 = scalar_select %p185, %s186, %s187
    %p191 = pneg %p185
    %p192 = scmp.eq.s32.totalorder %s12, 1
    %p193 = por %p191, %p192
    %p194 = scmp.ne.s32.totalorder %s186, %s189
    %p195 = scmp.eq.s32.totalorder %s12, 0
    %p196 = por %p194, %p195
    %p197 = scmp.ne.s32.totalorder %s186, %s189
    %p198 = scmp.eq.s32.totalorder %s17, 1
    %p199 = por %p197, %p198
    %p200 = scmp.ne.s32.totalorder %s189, %s190
    %p201 = scmp.eq.s32.totalorder %s17, 0
    %p202 = por %p200, %p201
    %p203 = scmp.ne.s32.totalorder %s189, %s190
    %p204 = scmp.eq.s32.totalorder %s18, 1
    %p205 = por %p203, %p204
    %p207 = scmp.ne.s32.totalorder %s190, %s206
    %p208 = scmp.eq.s32.totalorder %s18, 0
    %p209 = por %p207, %p208
    %p210 = scmp.le.s32.totalorder 1, %s12
    %p211 = scmp.lt.s32.totalorder %s12, 3
    %p212 = pnand %p210, %p211
    %p213 = pneg %p212
    // Predicated region
    $region9: #{transformer_decoder_layer.6} parent=5 // pred_check
      _
    $region10: #{transformer_decoder_layer.6} parent=5 // pred_check_branch
      %215 = sbr.rel (%p212) target = $region12
    $region11: #{transformer_decoder_layer.6} parent=5 // pred_region
      %s216 = ssub.s32 %s12, 1
      // Predicated region
      $region13: #{transformer_decoder_layer.6} parent=11 // pred_check
        %p217 = pneg %p153
      $region14: #{transformer_decoder_layer.6} parent=11 // pred_check_branch
        %219 = sbr.rel (%p217) target = $region16
      $region15: #{transformer_decoder_layer.6} parent=11 // pred_region
        _
      $region16: #{transformer_decoder_layer.6} parent=11 // pred_fallthru
        _
      // Predicated region
      $region17: #{transformer_decoder_layer.6} parent=11 // pred_check
        %p220 = pneg %p174
      $region18: #{transformer_decoder_layer.6} parent=11 // pred_check_branch
        %222 = sbr.rel (%p220) target = $region20
      $region19: #{transformer_decoder_layer.6} parent=11 // pred_region
        _
      $region20: #{transformer_decoder_layer.6} parent=11 // pred_fallthru
        _
    $region12: #{transformer_decoder_layer.6} parent=5 // pred_fallthru
      _
    %p223 = scmp.lt.s32.totalorder %s12, 2
    // Predicated region
    $region21: #{transformer_decoder_layer.6} parent=5 // pred_check
      %p224 = pneg %p223
    $region22: #{transformer_decoder_layer.6} parent=5 // pred_check_branch
      %226 = sbr.rel (%p224) target = $region24
    $region23: #{transformer_decoder_layer.6} parent=5 // pred_region
      // Predicated region
      $region25: #{transformer_decoder_layer.6} parent=23 // pred_check
        %p227 = pneg %p46
      $region26: #{transformer_decoder_layer.6} parent=23 // pred_check_branch
        %229 = sbr.rel (%p227) target = $region28
      $region27: #{transformer_decoder_layer.6} parent=23 // pred_region
        %p230 = scmp.lt.s32.totalorder %s19, 1
        %s231 = scalar_select %p230, %s19, 1
        %p232 = scmp.lt.s32.totalorder %s20, 0
        %s233 = scalar_select %p232, %s20, 0
        %s234 = sadd.s32 %s233, %s231
        %s235 = smul.addr %s234, 4
        %s236 = scalar_lea.vmem %s0, %s235
      $region28: #{transformer_decoder_layer.6} parent=23 // pred_fallthru
        _
      // Predicated region
      $region29: #{transformer_decoder_layer.6} parent=23 // pred_check
        %p237 = pneg %p72
      $region30: #{transformer_decoder_layer.6} parent=23 // pred_check_branch
        %239 = sbr.rel (%p237) target = $region32
      $region31: #{transformer_decoder_layer.6} parent=23 // pred_region
        %p240 = scmp.lt.s32.totalorder %s19, 1
        %s241 = scalar_select %p240, %s19, 1
        %s242 = smul.addr %s241, 4
        %s243 = scalar_lea.vmem %s1, %s242
      $region32: #{transformer_decoder_layer.6} parent=23 // pred_fallthru
        _
      // Predicated region
      $region33: #{transformer_decoder_layer.6} parent=23 // pred_check
        %p244 = pneg %p98
      $region34: #{transformer_decoder_layer.6} parent=23 // pred_check_branch
        %246 = sbr.rel (%p244) target = $region36
      $region35: #{transformer_decoder_layer.6} parent=23 // pred_region
        %p247 = scmp.lt.s32.totalorder %s19, 1
        %s248 = scalar_select %p247, %s19, 1
        %s249 = scalar_lea.vmem %s2, %s248
      $region36: #{transformer_decoder_layer.6} parent=23 // pred_fallthru
        _
      // Predicated region
      $region37: #{transformer_decoder_layer.6} parent=23 // pred_check
        %p250 = pneg %p126
      $region38: #{transformer_decoder_layer.6} parent=23 // pred_check_branch
        %252 = sbr.rel (%p250) target = $region40
      $region39: #{transformer_decoder_layer.6} parent=23 // pred_region
        %p253 = scmp.lt.s32.totalorder %s19, 1
        %s254 = scalar_select %p253, %s19, 1
        %p255 = scmp.lt.s32.totalorder %s20, 0
        %s256 = scalar_select %p255, %s20, 0
        %s257 = sadd.s32 %s256, %s254
        %s258 = smul.addr %s257, 8
        %s259 = scalar_lea.vmem %s3, %s258
      $region40: #{transformer_decoder_layer.6} parent=23 // pred_fallthru
        _
    $region24: #{transformer_decoder_layer.6} parent=5 // pred_fallthru
      _
    %p260 = scmp.le.s32.totalorder 1, %s12
    %p261 = scmp.lt.s32.totalorder %s12, 3
    %p262 = pnand %p260, %p261
    %p263 = pneg %p262
    // Predicated region
    $region41: #{transformer_decoder_layer.6} parent=5 // pred_check
      _
    $region42: #{transformer_decoder_layer.6} parent=5 // pred_check_branch
      %265 = sbr.rel (%p262) target = $region44
    $region43: #{transformer_decoder_layer.6} parent=5 // pred_region
      %s266 = ssub.s32 %s12, 1
      %p267 = scmp.lt.s32.totalorder %s21, 1
      %s268 = scalar_select %p267, %s21, 1
      %p269 = scmp.lt.s32.totalorder %s22, 0
      %s270 = scalar_select %p269, %s22, 0
      %s271 = sadd.s32 %s270, %s268
      %s272 = smul.addr %s271, 4
      %s273 = scalar_lea.vmem %s0, %s272
      %p274 = pneg %p52
      %p275 = pneg %p49
      %p276 = scmp.lt.s32.totalorder %s21, 1
      %s277 = scalar_select %p276, %s21, 1
      %s278 = smul.addr %s277, 4
      %s279 = scalar_lea.vmem %s1, %s278
      %p280 = pneg %p78
      %p281 = pneg %p75
      %p282 = scmp.lt.s32.totalorder %s21, 1
      %s283 = scalar_select %p282, %s21, 1
      %s284 = scalar_lea.vmem %s2, %s283
      %p285 = pneg %p104
      %p286 = pneg %p101
      %p287 = scmp.lt.s32.totalorder %s21, 1
      %s288 = scalar_select %p287, %s21, 1
      %p289 = scmp.lt.s32.totalorder %s22, 0
      %s290 = scalar_select %p289, %s22, 0
      %s291 = sadd.s32 %s290, %s288
      %s292 = smul.addr %s291, 8
      %s293 = scalar_lea.vmem %s3, %s292
      %p294 = pneg %p132
      %p295 = pneg %p129
      %p296 = pneg %p153
      %p297 = pneg %p150
      %p298 = pneg %p174
      %p299 = pneg %p171
      %p300 = pneg %p202
      %p301 = pneg %p199
      %p302 = scmp.lt.s32.totalorder %s21, 1
      %s303 = scalar_select %p302, %s21, 1
      %p304 = scmp.lt.s32.totalorder %s22, 0
      %s305 = scalar_select %p304, %s22, 0
      %s306 = sadd.s32 %s305, %s303
      %s307 = smul.addr %s306, 8
      %s308 = scalar_lea.vmem %s6, %s307
      %p309 = scmp.lt.s32.totalorder %s21, 1
      %s310 = scalar_select %p309, %s21, 1
      %p311 = scmp.lt.s32.totalorder %s22, 0
      %s312 = scalar_select %p311, %s22, 0
      %s313 = sadd.s32 %s312, %s310
      %s314 = smul.addr %s313, 4
      %s315 = scalar_lea.vmem %s0, %s314
      %p316 = scmp.lt.s32.totalorder %s21, 1
      %s317 = scalar_select %p316, %s21, 1
      %s318 = smul.addr %s317, 4
      %s319 = scalar_lea.vmem %s1, %s318
      %p320 = scmp.lt.s32.totalorder %s21, 1
      %s321 = scalar_select %p320, %s21, 1
      %s322 = scalar_lea.vmem %s2, %s321
      %p323 = scmp.lt.s32.totalorder %s21, 1
      %s324 = scalar_select %p323, %s21, 1
      %p325 = scmp.lt.s32.totalorder %s22, 0
      %s326 = scalar_select %p325, %s22, 0
      %s327 = sadd.s32 %s326, %s324
      %s328 = smul.addr %s327, 8
      %s329 = scalar_lea.vmem %s3, %s328
      %p330 = scmp.lt.s32.totalorder %s21, 1
      %s331 = scalar_select %p330, %s21, 1
      %p332 = scmp.lt.s32.totalorder %s22, 0
      %s333 = scalar_select %p332, %s22, 0
      %s334 = sadd.s32 %s333, %s331
      %s335 = smul.addr %s334, 8
      %s336 = scalar_lea.vmem %s6, %s335
      %s338 = smul.u32 %s22, 8
      %v339 = vlaneseq
      %v340 = vshrl.u32 %v339, 7
      %v341 = vstv %s338
      %v342 = vadd.s32 %v340, %v341
      %v343 = vlaneseq
      %v344 = vand.u32 %v343, 127
      %v345 = vld [vmem:[%s322] sm:$0x1]
      %vm346 = vcmp.gt.s32.totalorder %v345, 0
      %vm347 = vcmp.gt.s32.totalorder %v344, %v342
      %v348 = vsel %vm346, 1, 0
      %v349 = vlaneseq
      %v350 = vshrl.u32 %v349, 7
      %v351 = vsub.s32 0, %v350
      %v352 = vrot.slane %v348, %v351
      %vm353 = vcmp.eq.s32.totalorder %v352, 1
      %vm354 = vmor %vm353, %vm347
      %v355 = vsel %vm354, -1e+18, 0.0
      %v356 = vld [vmem:[%s315] sm:$0xf]
      %v357 = vld [vmem:[%s319] sm:$0xf]
      %vm358 = vcmask 64512
      %v360 = vsel %vm358, %v356, 0
      %v363 = vsel %vm358, %v357, 0
      %365 = vmatprep.subr.bf16.mxu0 0
      %366 = vmatpush1.bf16.xpose.msra.mxu0 0
      %367 = vmatprep.subr.bf16.mxu0 0
      %368 = vmatpush1.bf16.xpose.msra.mxu0 0
      %369 = vmatprep.subr.bf16.mxu0 0
      %370 = vmatpush1.bf16.xpose.msra.mxu0 0
      %371 = vmatprep.subr.bf16.mxu0 0
      %372 = vmatpush1.bf16.xpose.msra.mxu0 0
      %373 = vmatprep.subr.bf16.mxu0 0
      %374 = vmatpush1.bf16.xpose.msra.mxu0 0
      %375 = vmatprep.subr.bf16.mxu0 0
      %376 = vmatpush1.bf16.xpose.msra.mxu0 0
      %377 = vmatprep.subr.bf16.mxu0 0
      %378 = vmatpush1.bf16.xpose.msra.mxu0 0
      %379 = vmatprep.subr.bf16.mxu0 0
      %380 = vmatpush1.bf16.xpose.msra.mxu0 %v363
      %381 = vmatprep.subr.bf16.mxu0 0
      %382 = vmatpush2.bf16.xpose.msra.mxu0 0
      %383 = vmatprep.subr.bf16.mxu0 0
      %384 = vmatpush2.bf16.xpose.msra.mxu0 0
      %385 = vmatprep.subr.bf16.mxu0 0
      %386 = vmatpush2.bf16.xpose.msra.mxu0 0
      %387 = vmatprep.subr.bf16.mxu0 0
      %388 = vmatpush2.bf16.xpose.msra.mxu0 0
      %389 = vmatprep.subr.bf16.mxu0 0
      %390 = vmatpush2.bf16.xpose.msra.mxu0 0
      %391 = vmatprep.subr.bf16.mxu0 0
      %392 = vmatpush2.bf16.xpose.msra.mxu0 0
      %393 = vmatprep.subr.bf16.mxu0 0
      %394 = vmatpush2.bf16.xpose.msra.mxu0 0
      %395 = vmatprep.subr.bf16.mxu0 0
      %396 = vmatpush2.bf16.xpose.msra.mxu0 0
      %397 = vmatprep.mubr.bf16.mxu0 0
      %398 = vmatmul.mubr.bf16.gmra.mxu0 %v360
      %v399 = vpop.f32.mrf.mxu0
      %v400 = vadd.f32 %v355, %v399
      %v401 = vpop.f32.mrf.mxu0
      %v402 = vpop.f32.mrf.mxu0
      %v403 = vpop.f32.mrf.mxu0
      %404 = vdwg.mxu0
      %v405 = vsel %vm358, %v400, -inf
      %406 = vmax.xlane.f32.xlu0 %v405
      %v407 = vpop.xlane.xlu0 %406
      %v408 = vsub.f32 %v400, %v407
      %v409 = vmul.f32 %v408, 1.442695
      %v410 = vpow.pop %v409
      %v411 = vsel %vm358, %v410, 0.0
      %412 = vadd.xlane.f32.xlu0 %v411
      %v413 = vpop.xlane.xlu0 %412
      %v414 = vrcp.pop %v413
      %v415 = vmul.f32 %v410, %v414
      %v416 = vpack.c.bf16 %v415, %v415
      %v418 = vunpack.c.l.b16 %v357
      %v419 = vpack.c.b16 %v418, %v418
      %420 = vrot.lane.b32.xlu0 %v419, 96
      %v421 = vpop.permute.xlu0 %420
      %v423 = vsel %vm358, %v416, 0
      %vm425 = vcmask 1043456
      %v427 = vsel %vm425, %v421, 0
      %429 = vmatprep.subr.bf16.mxu0 0
      %430 = vmatpush1.bf16.msra.mxu0 0
      %431 = vmatprep.subr.bf16.mxu0 0
      %432 = vmatpush1.bf16.msra.mxu0 0
      %433 = vmatprep.subr.bf16.mxu0 0
      %434 = vmatpush1.bf16.msra.mxu0 0
      %435 = vmatprep.subr.bf16.mxu0 0
      %436 = vmatpush1.bf16.msra.mxu0 0
      %437 = vmatprep.subr.bf16.mxu0 0
      %438 = vmatpush1.bf16.msra.mxu0 0
      %439 = vmatprep.subr.bf16.mxu0 0
      %440 = vmatpush1.bf16.msra.mxu0 0
      %441 = vmatprep.subr.bf16.mxu0 0
      %442 = vmatpush1.bf16.msra.mxu0 0
      %443 = vmatprep.subr.bf16.mxu0 0
      %444 = vmatpush1.bf16.msra.mxu0 %v427
      %445 = vmatprep.subr.bf16.mxu0 0
      %446 = vmatpush2.bf16.msra.mxu0 0
      %447 = vmatprep.subr.bf16.mxu0 0
      %448 = vmatpush2.bf16.msra.mxu0 0
      %449 = vmatprep.subr.bf16.mxu0 0
      %450 = vmatpush2.bf16.msra.mxu0 0
      %451 = vmatprep.subr.bf16.mxu0 0
      %452 = vmatpush2.bf16.msra.mxu0 0
      %453 = vmatprep.subr.bf16.mxu0 0
      %454 = vmatpush2.bf16.msra.mxu0 0
      %455 = vmatprep.subr.bf16.mxu0 0
      %456 = vmatpush2.bf16.msra.mxu0 0
      %457 = vmatprep.subr.bf16.mxu0 0
      %458 = vmatpush2.bf16.msra.mxu0 0
      %459 = vmatprep.subr.bf16.mxu0 0
      %460 = vmatpush2.bf16.msra.mxu0 0
      %461 = vmatprep.mubr.bf16.mxu0 0
      %462 = vmatmul.mubr.bf16.gmra.mxu0 %v423
      %v463 = vpop.f32.mrf.mxu0
      %v464 = vadd.f32 0.0, %v463
      %v465 = vpop.f32.mrf.mxu0
      %v466 = vpop.f32.mrf.mxu0
      %v467 = vpop.f32.mrf.mxu0
      %468 = vdwg.mxu0
      %469 = vst.msk [vmem:[#allocation2] sm:$0xff] %vm358, %v464
      %v471 = vunpack.c.l.b16 %v356
      %v472 = vpack.c.b16 %v471, %v471
      %473 = vrot.lane.b32.xlu0 %v472, 120
      %v474 = vpop.permute.xlu0 %473
      %475 = vrot.lane.b32.xlu0 %v419, 120
      %v476 = vpop.permute.xlu0 %475
      %v478 = vsel %vm358, %v474, 0
      %v481 = vsel %vm358, %v476, 0
      %483 = vmatprep.subr.bf16.mxu0 0
      %484 = vmatpush1.bf16.xpose.msra.mxu0 0
      %485 = vmatprep.subr.bf16.mxu0 0
      %486 = vmatpush1.bf16.xpose.msra.mxu0 0
      %487 = vmatprep.subr.bf16.mxu0 0
      %488 = vmatpush1.bf16.xpose.msra.mxu0 0
      %489 = vmatprep.subr.bf16.mxu0 0
      %490 = vmatpush1.bf16.xpose.msra.mxu0 0
      %491 = vmatprep.subr.bf16.mxu0 0
      %492 = vmatpush1.bf16.xpose.msra.mxu0 0
      %493 = vmatprep.subr.bf16.mxu0 0
      %494 = vmatpush1.bf16.xpose.msra.mxu0 0
      %495 = vmatprep.subr.bf16.mxu0 0
      %496 = vmatpush1.bf16.xpose.msra.mxu0 0
      %497 = vmatprep.subr.bf16.mxu0 0
      %498 = vmatpush1.bf16.xpose.msra.mxu0 %v481
      %499 = vmatprep.subr.bf16.mxu0 0
      %500 = vmatpush2.bf16.xpose.msra.mxu0 0
      %501 = vmatprep.subr.bf16.mxu0 0
      %502 = vmatpush2.bf16.xpose.msra.mxu0 0
      %503 = vmatprep.subr.bf16.mxu0 0
      %504 = vmatpush2.bf16.xpose.msra.mxu0 0
      %505 = vmatprep.subr.bf16.mxu0 0
      %506 = vmatpush2.bf16.xpose.msra.mxu0 0
      %507 = vmatprep.subr.bf16.mxu0 0
      %508 = vmatpush2.bf16.xpose.msra.mxu0 0
      %509 = vmatprep.subr.bf16.mxu0 0
      %510 = vmatpush2.bf16.xpose.msra.mxu0 0
      %511 = vmatprep.subr.bf16.mxu0 0
      %512 = vmatpush2.bf16.xpose.msra.mxu0 0
      %513 = vmatprep.subr.bf16.mxu0 0
      %514 = vmatpush2.bf16.xpose.msra.mxu0 0
      %515 = vmatprep.mubr.bf16.mxu0 0
      %516 = vmatmul.mubr.bf16.gmra.mxu0 %v478
      %v517 = vpop.f32.mrf.mxu0
      %v518 = vadd.f32 %v355, %v517
      %v519 = vpop.f32.mrf.mxu0
      %v520 = vpop.f32.mrf.mxu0
      %v521 = vpop.f32.mrf.mxu0
      %522 = vdwg.mxu0
      %v523 = vsel %vm358, %v518, -inf
      %524 = vmax.xlane.f32.xlu0 %v523
      %v525 = vpop.xlane.xlu0 %524
      %v526 = vsub.f32 %v518, %v525
      %v527 = vmul.f32 %v526, 1.442695
      %v528 = vpow.pop %v527
      %v529 = vsel %vm358, %v528, 0.0
      %530 = vadd.xlane.f32.xlu0 %v529
      %v531 = vpop.xlane.xlu0 %530
      %v532 = vrcp.pop %v531
      %v533 = vmul.f32 %v528, %v532
      %v534 = vpack.c.bf16 %v533, %v533
      %535 = vrot.lane.b32.xlu0 %v419, 88
      %v536 = vpop.permute.xlu0 %535
      %v538 = vsel %vm358, %v534, 0
      %v541 = vsel %vm425, %v536, 0
      %543 = vmatprep.subr.bf16.mxu0 0
      %544 = vmatpush1.bf16.msra.mxu0 0
      %545 = vmatprep.subr.bf16.mxu0 0
      %546 = vmatpush1.bf16.msra.mxu0 0
      %547 = vmatprep.subr.bf16.mxu0 0
      %548 = vmatpush1.bf16.msra.mxu0 0
      %549 = vmatprep.subr.bf16.mxu0 0
      %550 = vmatpush1.bf16.msra.mxu0 0
      %551 = vmatprep.subr.bf16.mxu0 0
      %552 = vmatpush1.bf16.msra.mxu0 0
      %553 = vmatprep.subr.bf16.mxu0 0
      %554 = vmatpush1.bf16.msra.mxu0 0
      %555 = vmatprep.subr.bf16.mxu0 0
      %556 = vmatpush1.bf16.msra.mxu0 0
      %557 = vmatprep.subr.bf16.mxu0 0
      %558 = vmatpush1.bf16.msra.mxu0 %v541
      %559 = vmatprep.subr.bf16.mxu0 0
      %560 = vmatpush2.bf16.msra.mxu0 0
      %561 = vmatprep.subr.bf16.mxu0 0
      %562 = vmatpush2.bf16.msra.mxu0 0
      %563 = vmatprep.subr.bf16.mxu0 0
      %564 = vmatpush2.bf16.msra.mxu0 0
      %565 = vmatprep.subr.bf16.mxu0 0
      %566 = vmatpush2.bf16.msra.mxu0 0
      %567 = vmatprep.subr.bf16.mxu0 0
      %568 = vmatpush2.bf16.msra.mxu0 0
      %569 = vmatprep.subr.bf16.mxu0 0
      %570 = vmatpush2.bf16.msra.mxu0 0
      %571 = vmatprep.subr.bf16.mxu0 0
      %572 = vmatpush2.bf16.msra.mxu0 0
      %573 = vmatprep.subr.bf16.mxu0 0
      %574 = vmatpush2.bf16.msra.mxu0 0
      %575 = vmatprep.mubr.bf16.mxu0 0
      %576 = vmatmul.mubr.bf16.gmra.mxu0 %v538
      %v577 = vpop.f32.mrf.mxu0
      %v578 = vadd.f32 0.0, %v577
      %v579 = vpop.f32.mrf.mxu0
      %v580 = vpop.f32.mrf.mxu0
      %v581 = vpop.f32.mrf.mxu0
      %582 = vdwg.mxu0
      %584 = vrot.lane.b32.xlu0 %v578, 8
      %v585 = vpop.permute.xlu0 %584
      %vm587 = vcmask 130112
      %588 = vst.msk [vmem:[#allocation2] sm:$0xff] %vm587, %v585
      %589 = vrot.lane.b32.xlu0 %v472, 112
      %v590 = vpop.permute.xlu0 %589
      %591 = vrot.lane.b32.xlu0 %v419, 112
      %v592 = vpop.permute.xlu0 %591
      %v594 = vsel %vm358, %v590, 0
      %v597 = vsel %vm358, %v592, 0
      %599 = vmatprep.subr.bf16.mxu0 0
      %600 = vmatpush1.bf16.xpose.msra.mxu0 0
      %601 = vmatprep.subr.bf16.mxu0 0
      %602 = vmatpush1.bf16.xpose.msra.mxu0 0
      %603 = vmatprep.subr.bf16.mxu0 0
      %604 = vmatpush1.bf16.xpose.msra.mxu0 0
      %605 = vmatprep.subr.bf16.mxu0 0
      %606 = vmatpush1.bf16.xpose.msra.mxu0 0
      %607 = vmatprep.subr.bf16.mxu0 0
      %608 = vmatpush1.bf16.xpose.msra.mxu0 0
      %609 = vmatprep.subr.bf16.mxu0 0
      %610 = vmatpush1.bf16.xpose.msra.mxu0 0
      %611 = vmatprep.subr.bf16.mxu0 0
      %612 = vmatpush1.bf16.xpose.msra.mxu0 0
      %613 = vmatprep.subr.bf16.mxu0 0
      %614 = vmatpush1.bf16.xpose.msra.mxu0 %v597
      %615 = vmatprep.subr.bf16.mxu0 0
      %616 = vmatpush2.bf16.xpose.msra.mxu0 0
      %617 = vmatprep.subr.bf16.mxu0 0
      %618 = vmatpush2.bf16.xpose.msra.mxu0 0
      %619 = vmatprep.subr.bf16.mxu0 0
      %620 = vmatpush2.bf16.xpose.msra.mxu0 0
      %621 = vmatprep.subr.bf16.mxu0 0
      %622 = vmatpush2.bf16.xpose.msra.mxu0 0
      %623 = vmatprep.subr.bf16.mxu0 0
      %624 = vmatpush2.bf16.xpose.msra.mxu0 0
      %625 = vmatprep.subr.bf16.mxu0 0
      %626 = vmatpush2.bf16.xpose.msra.mxu0 0
      %627 = vmatprep.subr.bf16.mxu0 0
      %628 = vmatpush2.bf16.xpose.msra.mxu0 0
      %629 = vmatprep.subr.bf16.mxu0 0
      %630 = vmatpush2.bf16.xpose.msra.mxu0 0
      %631 = vmatprep.mubr.bf16.mxu0 0
      %632 = vmatmul.mubr.bf16.gmra.mxu0 %v594
      %v633 = vpop.f32.mrf.mxu0
      %v634 = vadd.f32 %v355, %v633
      %v635 = vpop.f32.mrf.mxu0
      %v636 = vpop.f32.mrf.mxu0
      %v637 = vpop.f32.mrf.mxu0
      %638 = vdwg.mxu0
      %v639 = vsel %vm358, %v634, -inf
      %640 = vmax.xlane.f32.xlu0 %v639
      %v641 = vpop.xlane.xlu0 %640
      %v642 = vsub.f32 %v634, %v641
      %v643 = vmul.f32 %v642, 1.442695
      %v644 = vpow.pop %v643
      %v645 = vsel %vm358, %v644, 0.0
      %646 = vadd.xlane.f32.xlu0 %v645
      %v647 = vpop.xlane.xlu0 %646
      %v648 = vrcp.pop %v647
      %v649 = vmul.f32 %v644, %v648
      %v650 = vpack.c.bf16 %v649, %v649
      %651 = vrot.lane.b32.xlu0 %v419, 80
      %v652 = vpop.permute.xlu0 %651
      %v654 = vsel %vm358, %v650, 0
      %v657 = vsel %vm425, %v652, 0
      %659 = vmatprep.subr.bf16.mxu0 0
      %660 = vmatpush1.bf16.msra.mxu0 0
      %661 = vmatprep.subr.bf16.mxu0 0
      %662 = vmatpush1.bf16.msra.mxu0 0
      %663 = vmatprep.subr.bf16.mxu0 0
      %664 = vmatpush1.bf16.msra.mxu0 0
      %665 = vmatprep.subr.bf16.mxu0 0
      %666 = vmatpush1.bf16.msra.mxu0 0
      %667 = vmatprep.subr.bf16.mxu0 0
      %668 = vmatpush1.bf16.msra.mxu0 0
      %669 = vmatprep.subr.bf16.mxu0 0
      %670 = vmatpush1.bf16.msra.mxu0 0
      %671 = vmatprep.subr.bf16.mxu0 0
      %672 = vmatpush1.bf16.msra.mxu0 0
      %673 = vmatprep.subr.bf16.mxu0 0
      %674 = vmatpush1.bf16.msra.mxu0 %v657
      %675 = vmatprep.subr.bf16.mxu0 0
      %676 = vmatpush2.bf16.msra.mxu0 0
      %677 = vmatprep.subr.bf16.mxu0 0
      %678 = vmatpush2.bf16.msra.mxu0 0
      %679 = vmatprep.subr.bf16.mxu0 0
      %680 = vmatpush2.bf16.msra.mxu0 0
      %681 = vmatprep.subr.bf16.mxu0 0
      %682 = vmatpush2.bf16.msra.mxu0 0
      %683 = vmatprep.subr.bf16.mxu0 0
      %684 = vmatpush2.bf16.msra.mxu0 0
      %685 = vmatprep.subr.bf16.mxu0 0
      %686 = vmatpush2.bf16.msra.mxu0 0
      %687 = vmatprep.subr.bf16.mxu0 0
      %688 = vmatpush2.bf16.msra.mxu0 0
      %689 = vmatprep.subr.bf16.mxu0 0
      %690 = vmatpush2.bf16.msra.mxu0 0
      %691 = vmatprep.mubr.bf16.mxu0 0
      %692 = vmatmul.mubr.bf16.gmra.mxu0 %v654
      %v693 = vpop.f32.mrf.mxu0
      %v694 = vadd.f32 0.0, %v693
      %v695 = vpop.f32.mrf.mxu0
      %v696 = vpop.f32.mrf.mxu0
      %v697 = vpop.f32.mrf.mxu0
      %698 = vdwg.mxu0
      %700 = vrot.lane.b32.xlu0 %v694, 16
      %v701 = vpop.permute.xlu0 %700
      %vm703 = vcmask 195712
      %704 = vst.msk [vmem:[#allocation2] sm:$0xff] %vm703, %v701
      %705 = vrot.lane.b32.xlu0 %v472, 104
      %v706 = vpop.permute.xlu0 %705
      %707 = vrot.lane.b32.xlu0 %v419, 104
      %v708 = vpop.permute.xlu0 %707
      %v710 = vsel %vm358, %v706, 0
      %v713 = vsel %vm358, %v708, 0
      %715 = vmatprep.subr.bf16.mxu0 0
      %716 = vmatpush1.bf16.xpose.msra.mxu0 0
      %717 = vmatprep.subr.bf16.mxu0 0
      %718 = vmatpush1.bf16.xpose.msra.mxu0 0
      %719 = vmatprep.subr.bf16.mxu0 0
      %720 = vmatpush1.bf16.xpose.msra.mxu0 0
      %721 = vmatprep.subr.bf16.mxu0 0
      %722 = vmatpush1.bf16.xpose.msra.mxu0 0
      %723 = vmatprep.subr.bf16.mxu0 0
      %724 = vmatpush1.bf16.xpose.msra.mxu0 0
      %725 = vmatprep.subr.bf16.mxu0 0
      %726 = vmatpush1.bf16.xpose.msra.mxu0 0
      %727 = vmatprep.subr.bf16.mxu0 0
      %728 = vmatpush1.bf16.xpose.msra.mxu0 0
      %729 = vmatprep.subr.bf16.mxu0 0
      %730 = vmatpush1.bf16.xpose.msra.mxu0 %v713
      %731 = vmatprep.subr.bf16.mxu0 0
      %732 = vmatpush2.bf16.xpose.msra.mxu0 0
      %733 = vmatprep.subr.bf16.mxu0 0
      %734 = vmatpush2.bf16.xpose.msra.mxu0 0
      %735 = vmatprep.subr.bf16.mxu0 0
      %736 = vmatpush2.bf16.xpose.msra.mxu0 0
      %737 = vmatprep.subr.bf16.mxu0 0
      %738 = vmatpush2.bf16.xpose.msra.mxu0 0
      %739 = vmatprep.subr.bf16.mxu0 0
      %740 = vmatpush2.bf16.xpose.msra.mxu0 0
      %741 = vmatprep.subr.bf16.mxu0 0
      %742 = vmatpush2.bf16.xpose.msra.mxu0 0
      %743 = vmatprep.subr.bf16.mxu0 0
      %744 = vmatpush2.bf16.xpose.msra.mxu0 0
      %745 = vmatprep.subr.bf16.mxu0 0
      %746 = vmatpush2.bf16.xpose.msra.mxu0 0
      %747 = vmatprep.mubr.bf16.mxu0 0
      %748 = vmatmul.mubr.bf16.gmra.mxu0 %v710
      %v749 = vpop.f32.mrf.mxu0
      %v750 = vadd.f32 %v355, %v749
      %v751 = vpop.f32.mrf.mxu0
      %v752 = vpop.f32.mrf.mxu0
      %v753 = vpop.f32.mrf.mxu0
      %754 = vdwg.mxu0
      %v755 = vsel %vm358, %v750, -inf
      %756 = vmax.xlane.f32.xlu0 %v755
      %v757 = vpop.xlane.xlu0 %756
      %v758 = vsub.f32 %v750, %v757
      %v759 = vmul.f32 %v758, 1.442695
      %v760 = vpow.pop %v759
      %v761 = vsel %vm358, %v760, 0.0
      %762 = vadd.xlane.f32.xlu0 %v761
      %v763 = vpop.xlane.xlu0 %762
      %v764 = vrcp.pop %v763
      %v765 = vmul.f32 %v760, %v764
      %v766 = vpack.c.bf16 %v765, %v765
      %767 = vrot.lane.b32.xlu0 %v419, 72
      %v768 = vpop.permute.xlu0 %767
      %v770 = vsel %vm358, %v766, 0
      %v773 = vsel %vm425, %v768, 0
      %775 = vmatprep.subr.bf16.mxu0 0
      %776 = vmatpush1.bf16.msra.mxu0 0
      %777 = vmatprep.subr.bf16.mxu0 0
      %778 = vmatpush1.bf16.msra.mxu0 0
      %779 = vmatprep.subr.bf16.mxu0 0
      %780 = vmatpush1.bf16.msra.mxu0 0
      %781 = vmatprep.subr.bf16.mxu0 0
      %782 = vmatpush1.bf16.msra.mxu0 0
      %783 = vmatprep.subr.bf16.mxu0 0
      %784 = vmatpush1.bf16.msra.mxu0 0
      %785 = vmatprep.subr.bf16.mxu0 0
      %786 = vmatpush1.bf16.msra.mxu0 0
      %787 = vmatprep.subr.bf16.mxu0 0
      %788 = vmatpush1.bf16.msra.mxu0 0
      %789 = vmatprep.subr.bf16.mxu0 0
      %790 = vmatpush1.bf16.msra.mxu0 %v773
      %791 = vmatprep.subr.bf16.mxu0 0
      %792 = vmatpush2.bf16.msra.mxu0 0
      %793 = vmatprep.subr.bf16.mxu0 0
      %794 = vmatpush2.bf16.msra.mxu0 0
      %795 = vmatprep.subr.bf16.mxu0 0
      %796 = vmatpush2.bf16.msra.mxu0 0
      %797 = vmatprep.subr.bf16.mxu0 0
      %798 = vmatpush2.bf16.msra.mxu0 0
      %799 = vmatprep.subr.bf16.mxu0 0
      %800 = vmatpush2.bf16.msra.mxu0 0
      %801 = vmatprep.subr.bf16.mxu0 0
      %802 = vmatpush2.bf16.msra.mxu0 0
      %803 = vmatprep.subr.bf16.mxu0 0
      %804 = vmatpush2.bf16.msra.mxu0 0
      %805 = vmatprep.subr.bf16.mxu0 0
      %806 = vmatpush2.bf16.msra.mxu0 0
      %807 = vmatprep.mubr.bf16.mxu0 0
      %808 = vmatmul.mubr.bf16.gmra.mxu0 %v770
      %v809 = vpop.f32.mrf.mxu0
      %v810 = vadd.f32 0.0, %v809
      %v811 = vpop.f32.mrf.mxu0
      %v812 = vpop.f32.mrf.mxu0
      %v813 = vpop.f32.mrf.mxu0
      %814 = vdwg.mxu0
      %816 = vrot.lane.b32.xlu0 %v810, 24
      %v817 = vpop.permute.xlu0 %816
      %vm819 = vcmask 261312
      %820 = vst.msk [vmem:[#allocation2] sm:$0xff] %vm819, %v817
      %v821 = vld [vmem:[#allocation2] sm:$0xff]
      %v822 = vpack.c.bf16 %v821, %v821
      %v823 = vld [vmem:[%s4] sm:$0xf]
      %v824 = vld [vmem:[%s4 + $0x4] sm:$0xf]
      %v825 = vld [vmem:[%s4 + $0x8] sm:$0xf]
      %v826 = vld [vmem:[%s4 + $0xc] sm:$0xf]
      %v827 = vld [vmem:[%s5] sm:$0x1]
      %v829 = vlaneseq
      %v830 = vshrl.u32 %v829, 7
      %v831 = vsub.s32 0, %v830
      %v832 = vrot.slane %v827, %v831
      %v838 = vunpack.c.l.b16 %v823
      %v839 = vunpack.c.l.b16 %v824
      %v840 = vunpack.c.l.b16 %v825
      %v841 = vunpack.c.l.b16 %v826
      %v842 = vpack.c.b16 %v839, %v838
      %v843 = vpack.c.b16 %v841, %v840
      %vm846 = vcmask 261120
      %v848 = vsel %vm846, %v822, 0
      %850 = vmatprep.subr.bf16.mxu0 0
      %851 = vmatpush1.bf16.msra.mxu0 0
      %852 = vmatprep.subr.bf16.mxu0 0
      %853 = vmatpush1.bf16.msra.mxu0 0
      %854 = vmatprep.subr.bf16.mxu0 0
      %855 = vmatpush1.bf16.msra.mxu0 0
      %856 = vmatprep.subr.bf16.mxu0 0
      %857 = vmatpush1.bf16.msra.mxu0 0
      %858 = vmatprep.subr.bf16.mxu0 0
      %859 = vmatpush1.bf16.msra.mxu0 0
      %860 = vmatprep.subr.bf16.mxu0 0
      %861 = vmatpush1.bf16.msra.mxu0 0
      %862 = vmatprep.subr.bf16.mxu0 0
      %863 = vmatpush1.bf16.msra.mxu0 %v843
      %864 = vmatprep.subr.bf16.mxu0 0
      %865 = vmatpush1.bf16.msra.mxu0 %v842
      %866 = vmatprep.subr.bf16.mxu0 0
      %867 = vmatpush2.bf16.msra.mxu0 0
      %868 = vmatprep.subr.bf16.mxu0 0
      %869 = vmatpush2.bf16.msra.mxu0 0
      %870 = vmatprep.subr.bf16.mxu0 0
      %871 = vmatpush2.bf16.msra.mxu0 0
      %872 = vmatprep.subr.bf16.mxu0 0
      %873 = vmatpush2.bf16.msra.mxu0 0
      %874 = vmatprep.subr.bf16.mxu0 0
      %875 = vmatpush2.bf16.msra.mxu0 0
      %876 = vmatprep.subr.bf16.mxu0 0
      %877 = vmatpush2.bf16.msra.mxu0 0
      %878 = vmatprep.subr.bf16.mxu0 0
      %879 = vmatpush2.bf16.msra.mxu0 0
      %880 = vmatprep.subr.bf16.mxu0 0
      %881 = vmatpush2.bf16.msra.mxu0 0
      %882 = vmatprep.mubr.bf16.mxu0 0
      %883 = vmatmul.mubr.bf16.gmra.mxu0 %v848
      %v884 = vpop.f32.mrf.mxu0
      %v885 = vadd.f32 %v832, %v884
      %v886 = vpop.f32.mrf.mxu0
      %v887 = vpop.f32.mrf.mxu0
      %v888 = vpop.f32.mrf.mxu0
      %889 = vdwg.mxu0
      %v890 = vld [vmem:[%s329] sm:$0xff]
      %v891 = vadd.f32 %v885, %v890
      %892 = vst.msk [vmem:[%s336] sm:$0xff] %vm846, %v891
      %p893 = scmp.lt.s32.totalorder %s21, 1
      %s894 = scalar_select %p893, %s21, 1
      %p895 = scmp.lt.s32.totalorder %s22, 0
      %s896 = scalar_select %p895, %s22, 0
      %s897 = sadd.s32 %s896, %s894
      %s898 = smul.addr %s897, 8
      %s899 = scalar_lea.vmem %s6, %s898
      // Predicated region
      $region45: #{transformer_decoder_layer.6} parent=43 // pred_check
        %p900 = pneg %p199
      $region46: #{transformer_decoder_layer.6} parent=43 // pred_check_branch
        %902 = sbr.rel (%p900) target = $region48
      $region47: #{transformer_decoder_layer.6} parent=43 // pred_region
        _
      $region48: #{transformer_decoder_layer.6} parent=43 // pred_fallthru
        _
    $region44: #{transformer_decoder_layer.6} parent=5 // pred_fallthru
      _
    %p903 = scmp.le.s32.totalorder 2, %s12
    // Predicated region
    $region49: #{transformer_decoder_layer.6} parent=5 // pred_check
      %p904 = pneg %p903
    $region50: #{transformer_decoder_layer.6} parent=5 // pred_check_branch
      %906 = sbr.rel (%p904) target = $region52
    $region51: #{transformer_decoder_layer.6} parent=5 // pred_region
      %s907 = ssub.s32 %s12, 2
      // Predicated region
      $region53: #{transformer_decoder_layer.6} parent=51 // pred_check
        %p908 = pneg %p205
      $region54: #{transformer_decoder_layer.6} parent=51 // pred_check_branch
        %910 = sbr.rel (%p908) target = $region56
      $region55: #{transformer_decoder_layer.6} parent=51 // pred_region
        %p911 = scmp.lt.s32.totalorder %s23, 1
        %s912 = scalar_select %p911, %s23, 1
        %p913 = scmp.lt.s32.totalorder %s24, 0
        %s914 = scalar_select %p913, %s24, 0
        %s915 = sadd.s32 %s914, %s912
        %s916 = smul.addr %s915, 8
        %s917 = scalar_lea.vmem %s6, %s916
      $region56: #{transformer_decoder_layer.6} parent=51 // pred_fallthru
        _
    $region52: #{transformer_decoder_layer.6} parent=5 // pred_fallthru
      _
  $region6: #{transformer_decoder_layer.6} parent=0 // loop_footer
    %s16 = sadd.s32 1, %s12
  $region7: #{transformer_decoder_layer.6} parent=0 // loop_footer_branch
    %11 = sbr.rel target = $region3
  $region8: #{transformer_decoder_layer.6} parent=0 // loop_exit
    _

// kernel: transformer_decoder_layer.9
$region0: #{transformer_decoder_layer.9}
  #allocation0 [shape = 'u32[]', space=smem, size = 0x4, offset = 0x4, fixed_abs, tag = 'smem constant byte address 0x4 - core index']
  #allocation1 [shape = 'u32[144,128]{1,0:T(1,128)}', space=vmem, size = 0x12000, scoped, tag = 'internal scratch']
  #allocation2 [shape = 'bf16[16,32]{1,0:T(8,128)(2,1)}', space=vmem, size = 0x1000, scoped, tag = 'scratch operand']
  #allocation3 [shape = 'f32[16,32]{1,0:T(8,128)}', space=vmem, size = 0x2000, scoped, tag = 'scratch operand']
  %s0 = inlined_call_operand.vmem [shape: f32[16,32], index: 0, kind: input, shape index: {}]
  %s1 = inlined_call_operand.vmem [shape: f32[1,32], index: 1, kind: input, shape index: {}]
  %s2 = inlined_call_operand.vmem [shape: f32[1,32], index: 2, kind: input, shape index: {}]
  %s3 = inlined_call_operand.vmem [shape: bf16[32,64], index: 3, kind: input, shape index: {}]
  %s4 = inlined_call_operand.vmem [shape: f32[1,64], index: 4, kind: input, shape index: {}]
  %s5 = inlined_call_operand.vmem [shape: bf16[64,32], index: 5, kind: input, shape index: {}]
  %s6 = inlined_call_operand.vmem [shape: f32[1,32], index: 6, kind: input, shape index: {}]
  %s7 = inlined_call_operand.hbm [shape: f32[16,32], index: 7, kind: output, shape index: {}]
  %s8 = sld [smem:[#allocation0]]
  $region46: #{transformer_decoder_layer.9} parent=0
    _
  %s10 = ssub.s32 1, %s8
  %s11 = scalar_select 0, %s10, %s8
  $region1: #{transformer_decoder_layer.9} parent=0
    #allocation4 [shape = 'u8[8192]{0}', space=vmem, size = 0x2000, scoped, tag = 'output window, operand 0, single buffered']
    #allocation5 [shape = 's32[1]{0}', space=sflag, size = 0x4, scoped, tag = 'scoped memory for transformer_decoder_layer.9']
    %12 = vsyncpa [#allocation5], 0
    // Predicated region
    $region2: #{transformer_decoder_layer.9} parent=1 // pred_check
      _
    $region3: #{transformer_decoder_layer.9} parent=1 // pred_check_branch
      %14 = sbr.rel (0) target = $region5
    $region4: #{transformer_decoder_layer.9} parent=1 // pred_region
      _
    $region5: #{transformer_decoder_layer.9} parent=1 // pred_fallthru
      _
    // Predicated region
    $region6: #{transformer_decoder_layer.9} parent=1 // pred_check
      _
    $region7: #{transformer_decoder_layer.9} parent=1 // pred_check_branch
      %16 = sbr.rel (0) target = $region9
    $region8: #{transformer_decoder_layer.9} parent=1 // pred_region
      _
    $region9: #{transformer_decoder_layer.9} parent=1 // pred_fallthru
      _
    // Predicated region
    $region10: #{transformer_decoder_layer.9} parent=1 // pred_check
      _
    $region11: #{transformer_decoder_layer.9} parent=1 // pred_check_branch
      %18 = sbr.rel (0) target = $region13
    $region12: #{transformer_decoder_layer.9} parent=1 // pred_region
      _
    $region13: #{transformer_decoder_layer.9} parent=1 // pred_fallthru
      _
    // Predicated region
    $region14: #{transformer_decoder_layer.9} parent=1 // pred_check
      _
    $region15: #{transformer_decoder_layer.9} parent=1 // pred_check_branch
      %20 = sbr.rel (0) target = $region17
    $region16: #{transformer_decoder_layer.9} parent=1 // pred_region
      _
    $region17: #{transformer_decoder_layer.9} parent=1 // pred_fallthru
      _
    // Predicated region
    $region18: #{transformer_decoder_layer.9} parent=1 // pred_check
      _
    $region19: #{transformer_decoder_layer.9} parent=1 // pred_check_branch
      %22 = sbr.rel (0) target = $region21
    $region20: #{transformer_decoder_layer.9} parent=1 // pred_region
      _
    $region21: #{transformer_decoder_layer.9} parent=1 // pred_fallthru
      _
    // Predicated region
    $region22: #{transformer_decoder_layer.9} parent=1 // pred_check
      _
    $region23: #{transformer_decoder_layer.9} parent=1 // pred_check_branch
      %24 = sbr.rel (0) target = $region25
    $region24: #{transformer_decoder_layer.9} parent=1 // pred_region
      _
    $region25: #{transformer_decoder_layer.9} parent=1 // pred_fallthru
      _
    // Predicated region
    $region26: #{transformer_decoder_layer.9} parent=1 // pred_check
      _
    $region27: #{transformer_decoder_layer.9} parent=1 // pred_check_branch
      %26 = sbr.rel (0) target = $region29
    $region28: #{transformer_decoder_layer.9} parent=1 // pred_region
      _
    $region29: #{transformer_decoder_layer.9} parent=1 // pred_fallthru
      _
    %p28 = scmp.eq.s32.totalorder 0, 0
    // Predicated region
    $region30: #{transformer_decoder_layer.9} parent=1 // pred_check
      %p29 = pneg %p28
    $region31: #{transformer_decoder_layer.9} parent=1 // pred_check_branch
      %31 = sbr.rel (%p29) target = $region33
    $region32: #{transformer_decoder_layer.9} parent=1 // pred_region
      %v32 = vld [vmem:[%s0] sm:$0xff]
      %v33 = vld [vmem:[%s0 + $0x8] sm:$0xff]
      %v34 = vld [vmem:[%s1] sm:$0x1]
      %v35 = vld [vmem:[%s2] sm:$0x1]
      %vm36 = vcmask 261120
      %v37 = vsel %vm36, %v32, 0.0
      %38 = vadd.xlane.f32.xlu0 %v37
      %v39 = vpop.xlane.xlu0 %38
      %v40 = vsel %vm36, %v33, 0.0
      %41 = vadd.xlane.f32.xlu0 %v40
      %v42 = vpop.xlane.xlu0 %41
      %v43 = vrcp.pop 32.0
      %v44 = vmul.f32 %v39, %v43
      %v45 = vmul.f32 %v42, %v43
      %v46 = vsub.f32 %v32, %v44
      %v47 = vsub.f32 %v33, %v45
      %v48 = vmul.f32 %v46, %v46
      %v49 = vmul.f32 %v47, %v47
      %v50 = vsel %vm36, %v48, 0.0
      %51 = vadd.xlane.f32.xlu0 %v50
      %v52 = vpop.xlane.xlu0 %51
      %v53 = vsel %vm36, %v49, 0.0
      %54 = vadd.xlane.f32.xlu0 %v53
      %v55 = vpop.xlane.xlu0 %54
      %v56 = vmul.f32 %v52, %v43
      %v57 = vmul.f32 %v55, %v43
      %v58 = vadd.f32 %v56, 1e-06
      %v59 = vadd.f32 %v57, 1e-06
      %v60 = vrsqrt.pop %v58
      %v61 = vrsqrt.pop %v59
      %v62 = vmul.f32 %v46, %v60
      %v63 = vmul.f32 %v47, %v61
      %v65 = vlaneseq
      %v66 = vshrl.u32 %v65, 7
      %v67 = vsub.s32 0, %v66
      %v68 = vrot.slane %v34, %v67
      %v70 = vmul.f32 %v62, %v68
      %v71 = vmul.f32 %v63, %v68
      %v73 = vlaneseq
      %v74 = vshrl.u32 %v73, 7
      %v75 = vsub.s32 0, %v74
      %v76 = vrot.slane %v35, %v75
      %v78 = vadd.f32 %v70, %v76
      %v79 = vadd.f32 %v71, %v76
      %v80 = vpack.c.bf16 %v79, %v78
      %v82 = vunpack.c.l.b16 %v80
      %v83 = vunpack.c.h.b16 %v80
      %v84 = vpack.c.b16 %v82, %v82
      %v85 = vpack.c.b16 %v83, %v83
      %vm88 = vcmask 257024
      %89 = vst.msk [vmem:[#allocation2] sm:$0xf] %vm88, %v84
      %90 = vst.msk [vmem:[#allocation2 + $0x4] sm:$0xf] %vm88, %v85
      %v91 = vld [vmem:[%s6] sm:$0x1]
      %v93 = vlaneseq
      %v94 = vshrl.u32 %v93, 7
      %v95 = vsub.s32 0, %v94
      %v96 = vrot.slane %v91, %v95
      %v98 = vadd.f32 %v32, %v96
      %v99 = vadd.f32 %v33, %v96
      %100 = vst.msk [vmem:[#allocation3] sm:$0xff] %vm36, %v98
      %101 = vst.msk [vmem:[#allocation3 + $0x8] sm:$0xff] %vm36, %v99
    $region33: #{transformer_decoder_layer.9} parent=1 // pred_fallthru
      _
    %v102 = vld [vmem:[#allocation2] sm:$0xf]
    %v103 = vld [vmem:[#allocation2 + $0x4] sm:$0xf]
    %v104 = vld [vmem:[%s3] sm:$0xf]
    %v105 = vld [vmem:[%s3 + $0x4] sm:$0xf]
    %v106 = vld [vmem:[%s3 + $0x8] sm:$0xf]
    %v107 = vld [vmem:[%s3 + $0xc] sm:$0xf]
    %v108 = vld [vmem:[%s4] sm:$0x1]
    %v110 = vlaneseq
    %v111 = vshrl.u32 %v110, 7
    %v112 = vsub.s32 0, %v111
    %v113 = vrot.slane %v108, %v112
    %v117 = vunpack.c.l.b16 %v102
    %v118 = vunpack.c.l.b16 %v103
    %v119 = vpack.c.b16 %v118, %v117
    %v124 = vunpack.c.l.b16 %v104
    %v125 = vunpack.c.l.b16 %v105
    %v126 = vunpack.c.l.b16 %v106
    %v127 = vunpack.c.l.b16 %v107
    %v128 = vpack.c.b16 %v125, %v124
    %v129 = vpack.c.b16 %v127, %v126
    %vm132 = vcmask 261120
    %v134 = vsel %vm132, %v119, 0
    %136 = vmatprep.subr.bf16.mxu0 0
    %137 = vmatpush1.bf16.msra.mxu0 0
    %138 = vmatprep.subr.bf16.mxu0 0
    %139 = vmatpush1.bf16.msra.mxu0 0
    %140 = vmatprep.subr.bf16.mxu0 0
    %141 = vmatpush1.bf16.msra.mxu0 0
    %142 = vmatprep.subr.bf16.mxu0 0
    %143 = vmatpush1.bf16.msra.mxu0 0
    %144 = vmatprep.subr.bf16.mxu0 0
    %145 = vmatpush1.bf16.msra.mxu0 0
    %146 = vmatprep.subr.bf16.mxu0 0
    %147 = vmatpush1.bf16.msra.mxu0 0
    %148 = vmatprep.subr.bf16.mxu0 0
    %149 = vmatpush1.bf16.msra.mxu0 %v129
    %150 = vmatprep.subr.bf16.mxu0 0
    %151 = vmatpush1.bf16.msra.mxu0 %v128
    %152 = vmatprep.subr.bf16.mxu0 0
    %153 = vmatpush2.bf16.msra.mxu0 0
    %154 = vmatprep.subr.bf16.mxu0 0
    %155 = vmatpush2.bf16.msra.mxu0 0
    %156 = vmatprep.subr.bf16.mxu0 0
    %157 = vmatpush2.bf16.msra.mxu0 0
    %158 = vmatprep.subr.bf16.mxu0 0
    %159 = vmatpush2.bf16.msra.mxu0 0
    %160 = vmatprep.subr.bf16.mxu0 0
    %161 = vmatpush2.bf16.msra.mxu0 0
    %162 = vmatprep.subr.bf16.mxu0 0
    %163 = vmatpush2.bf16.msra.mxu0 0
    %164 = vmatprep.subr.bf16.mxu0 0
    %165 = vmatpush2.bf16.msra.mxu0 0
    %166 = vmatprep.subr.bf16.mxu0 0
    %167 = vmatpush2.bf16.msra.mxu0 0
    %168 = vmatprep.mubr.bf16.mxu0 0
    %169 = vmatmul.mubr.bf16.gmra.mxu0 %v134
    %v170 = vpop.f32.mrf.mxu0
    %v171 = vadd.f32 %v113, %v170
    %v172 = vpop.f32.mrf.mxu0
    %v173 = vpop.f32.mrf.mxu0
    %v174 = vadd.f32 %v113, %v173
    %v175 = vpop.f32.mrf.mxu0
    %176 = vdwg.mxu0
    %v177 = vmax.f32 %v171, 0.0
    %v178 = vmax.f32 %v174, 0.0
    %v179 = vld [vmem:[#allocation3] sm:$0xff]
    %v180 = vld [vmem:[#allocation3 + $0x8] sm:$0xff]
    %v181 = vpack.c.bf16 %v178, %v177
    %v182 = vld [vmem:[%s5] sm:$0xf]
    %v183 = vld [vmem:[%s5 + $0x4] sm:$0xf]
    %v184 = vld [vmem:[%s5 + $0x8] sm:$0xf]
    %v185 = vld [vmem:[%s5 + $0xc] sm:$0xf]
    %v186 = vld [vmem:[%s5 + $0x10] sm:$0xf]
    %v187 = vld [vmem:[%s5 + $0x14] sm:$0xf]
    %v188 = vld [vmem:[%s5 + $0x18] sm:$0xf]
    %v189 = vld [vmem:[%s5 + $0x1c] sm:$0xf]
    %v198 = vunpack.c.l.b16 %v182
    %v199 = vunpack.c.l.b16 %v183
    %v200 = vunpack.c.l.b16 %v184
    %v201 = vunpack.c.l.b16 %v185
    %v202 = vunpack.c.l.b16 %v186
    %v203 = vunpack.c.l.b16 %v187
    %v204 = vunpack.c.l.b16 %v188
    %v205 = vunpack.c.l.b16 %v189
    %v206 = vpack.c.b16 %v199, %v198
    %v207 = vpack.c.b16 %v201, %v200
    %v208 = vpack.c.b16 %v203, %v202
    %v209 = vpack.c.b16 %v205, %v204
    %vm214 = vcmask 523264
    %v216 = vsel %vm214, %v181, 0
    %218 = vmatprep.subr.bf16.mxu0 0
    %219 = vmatpush1.bf16.msra.mxu0 0
    %220 = vmatprep.subr.bf16.mxu0 0
    %221 = vmatpush1.bf16.msra.mxu0 0
    %222 = vmatprep.subr.bf16.mxu0 0
    %223 = vmatpush1.bf16.msra.mxu0 0
    %224 = vmatprep.subr.bf16.mxu0 0
    %225 = vmatpush1.bf16.msra.mxu0 0
    %226 = vmatprep.subr.bf16.mxu0 0
    %227 = vmatpush1.bf16.msra.mxu0 %v209
    %228 = vmatprep.subr.bf16.mxu0 0
    %229 = vmatpush1.bf16.msra.mxu0 %v208
    %230 = vmatprep.subr.bf16.mxu0 0
    %231 = vmatpush1.bf16.msra.mxu0 %v207
    %232 = vmatprep.subr.bf16.mxu0 0
    %233 = vmatpush1.bf16.msra.mxu0 %v206
    %234 = vmatprep.subr.bf16.mxu0 0
    %235 = vmatpush2.bf16.msra.mxu0 0
    %236 = vmatprep.subr.bf16.mxu0 0
    %237 = vmatpush2.bf16.msra.mxu0 0
    %238 = vmatprep.subr.bf16.mxu0 0
    %239 = vmatpush2.bf16.msra.mxu0 0
    %240 = vmatprep.subr.bf16.mxu0 0
    %241 = vmatpush2.bf16.msra.mxu0 0
    %242 = vmatprep.subr.bf16.mxu0 0
    %243 = vmatpush2.bf16.msra.mxu0 0
    %244 = vmatprep.subr.bf16.mxu0 0
    %245 = vmatpush2.bf16.msra.mxu0 0
    %246 = vmatprep.subr.bf16.mxu0 0
    %247 = vmatpush2.bf16.msra.mxu0 0
    %248 = vmatprep.subr.bf16.mxu0 0
    %249 = vmatpush2.bf16.msra.mxu0 0
    %250 = vmatprep.mubr.bf16.mxu0 0
    %251 = vmatmul.mubr.bf16.gmra.mxu0 %v216
    %v252 = vpop.f32.mrf.mxu0
    %v253 = vadd.f32 0.0, %v252
    %v254 = vpop.f32.mrf.mxu0
    %v255 = vpop.f32.mrf.mxu0
    %v256 = vadd.f32 0.0, %v255
    %v257 = vpop.f32.mrf.mxu0
    %258 = vdwg.mxu0
    %v259 = vadd.f32 %v179, %v253
    %v260 = vadd.f32 %v180, %v256
    %261 = vst.msk [vmem:[#allocation3] sm:$0xff] %vm132, %v259
    %262 = vst.msk [vmem:[#allocation3 + $0x8] sm:$0xff] %vm132, %v260
    // Predicated region
    $region34: #{transformer_decoder_layer.9} parent=1 // pred_check
      %p263 = pneg %p28
    $region35: #{transformer_decoder_layer.9} parent=1 // pred_check_branch
      %265 = sbr.rel (%p263) target = $region37
    $region36: #{transformer_decoder_layer.9} parent=1 // pred_region
      %v266 = vld [vmem:[#allocation3] sm:$0xff]
      %v267 = vld [vmem:[#allocation3 + $0x8] sm:$0xff]
      %268 = vst.msk [vmem:[#allocation4] sm:$0xff] %vm132, %v266
      %269 = vst.msk [vmem:[#allocation4 + $0x8] sm:$0xff] %vm132, %v267
    $region37: #{transformer_decoder_layer.9} parent=1 // pred_fallthru
      _
    // Predicated region
    $region38: #{transformer_decoder_layer.9} parent=1 // pred_check
      _
    $region39: #{transformer_decoder_layer.9} parent=1 // pred_check_branch
      %271 = sbr.rel (0) target = $region41
    $region40: #{transformer_decoder_layer.9} parent=1 // pred_region
      %s273 = ssub.s32 256, 256
      %274 = vsyncadd [#allocation5], %s273
      %s275 = sshll.u32 [#allocation4], 4
      %s276 = int_to_ptr.vmem [resolvable:$true] %s275
      %281 = dma.vmem_to_hbm [thread:$0]  %s276, 256, %s7, [#allocation5], 128, 128, 8
    $region41: #{transformer_decoder_layer.9} parent=1 // pred_fallthru
      _
    // Predicated region
    $region42: #{transformer_decoder_layer.9} parent=1 // pred_check
      _
    $region43: #{transformer_decoder_layer.9} parent=1 // pred_check_branch
      %283 = sbr.rel (0) target = $region45
    $region44: #{transformer_decoder_layer.9} parent=1 // pred_region
      %284 = dma.done [#allocation5], 256
    $region45: #{transformer_decoder_layer.9} parent=1 // pred_fallthru
      _
    %285 = vsyncpa [#allocation5], 1

// kernel: transformer_decoder_layer.8
$region0: #{transformer_decoder_layer.8}
  #allocation0 [shape = 'u32[]', space=smem, size = 0x4, offset = 0x4, fixed_abs, tag = 'smem constant byte address 0x4 - core index']
  #allocation1 [shape = 'u32[144,128]{1,0:T(1,128)}', space=vmem, size = 0x12000, scoped, tag = 'internal scratch']
  #allocation2 [shape = 'f32[8,32]{1,0:T(8,128)}', space=vmem, size = 0x1000, scoped, tag = 'scratch operand']
  %s0 = inlined_call_operand.vmem [shape: bf16[2,8,32], index: 0, kind: input, shape index: {}]
  %s1 = inlined_call_operand.vmem [shape: f32[2,16,32], index: 1, kind: input, shape index: {}]
  %s2 = inlined_call_operand.vmem [shape: f32[2,8,32], index: 2, kind: input, shape index: {}]
  %s3 = inlined_call_operand.vmem [shape: s32[2,1,16], index: 3, kind: input, shape index: {}]
  %s4 = inlined_call_operand.vmem [shape: s32[2,1,8], index: 4, kind: input, shape index: {}]
  %s5 = inlined_call_operand.vmem [shape: f32[2,8,32], index: 5, kind: input, shape index: {}]
  %s6 = inlined_call_operand.vmem [shape: bf16[32,64], index: 6, kind: input, shape index: {}]
  %s7 = inlined_call_operand.vmem [shape: f32[1,64], index: 7, kind: input, shape index: {}]
  %s8 = inlined_call_operand.vmem [shape: bf16[32,32], index: 8, kind: input, shape index: {}]
  %s9 = inlined_call_operand.vmem [shape: f32[1,32], index: 9, kind: input, shape index: {}]
  %s10 = inlined_call_operand.vmem [shape: bf16[32,32], index: 10, kind: input, shape index: {}]
  %s11 = inlined_call_operand.vmem [shape: bf16[32,32], index: 11, kind: input, shape index: {}]
  %s12 = inlined_call_operand.vmem [shape: f32[1,32], index: 12, kind: input, shape index: {}]
  %s13 = inlined_call_operand.hbm [shape: f32[2,8,32], index: 13, kind: output, shape index: {0}]
  %s14 = inlined_call_operand.hbm [shape: f32[2,8,32], index: 14, kind: output, shape index: {1}]
  %s15 = inlined_call_operand.vmem [shape: f32[2,8,32], index: 15, kind: output, shape index: {2}]
  %16 = xla_tuple %s13, %s14, %s15
  %s17 = sld [smem:[#allocation0]]
  $region101: #{transformer_decoder_layer.8} parent=0
    _
  %s19 = ssub.s32 1, %s17
  %s20 = scalar_select 0, %s19, %s17
  $region1: #{transformer_decoder_layer.8} parent=0
    #allocation3 [shape = 'u8[8192]{0}', space=vmem, size = 0x2000, scoped, tag = 'output window, operand 0']
    #allocation4 [shape = 's32[2]{0}', space=sflag, size = 0x8, scoped, tag = 'scoped memory for transformer_decoder_layer.8']
    #allocation5 [shape = 'u8[8192]{0}', space=vmem, size = 0x2000, scoped, tag = 'output window, operand 1']
    #allocation6 [shape = 's32[2]{0}', space=sflag, size = 0x8, scoped, tag = 'scoped memory for transformer_decoder_layer.8']
    %21 = vsyncpa [#allocation4], 0
    %s22 = scalar_lea.sflag [#allocation4], 1
    %23 = vsyncpa %s22, 0
    %24 = vsyncpa [#allocation6], 0
    %s25 = scalar_lea.sflag [#allocation6], 1
    %26 = vsyncpa %s25, 0
    loop: start=0, step=1, limit=4
    $region2: #{transformer_decoder_layer.8} parent=1 // loop_pre_header
      _
    $region3: #{transformer_decoder_layer.8} parent=1 // loop_header
      %s28 = sphi 0, %s32
      %p29 = scmp.ge.s32.totalorder %s28, 4
      %s38 = sphi 0, %s40
      %s41 = sphi 0, %s38
      %s42 = sphi 0, %s41
      %s58 = sphi 0, %s42
      %s64 = sphi 0, %s66
      %s67 = sphi 0, %s64
      %s68 = sphi 0, %s67
      %s84 = sphi 0, %s68
      %s90 = sphi 0, %s92
      %s93 = sphi 0, %s90
      %s94 = sphi 0, %s93
      %s110 = sphi 0, %s94
      %s116 = sphi 0, %s118
      %s119 = sphi 0, %s116
      %s120 = sphi 0, %s119
      %s136 = sphi 0, %s120
      %s142 = sphi 0, %s144
      %s145 = sphi 0, %s142
      %s146 = sphi 0, %s145
      %s162 = sphi 0, %s146
      %s168 = sphi 0, %s170
      %s171 = sphi 0, %s168
      %s172 = sphi 0, %s171
      %s188 = sphi 0, %s172
      %s192 = sphi 0, %s192
      %s194 = sphi 0, %s192
      %s195 = sphi 0, %s194
      %s209 = sphi 0, %s195
      %s213 = sphi 0, %s213
      %s215 = sphi 0, %s213
      %s216 = sphi 0, %s215
      %s230 = sphi 0, %s216
      %s234 = sphi 0, %s234
      %s236 = sphi 0, %s234
      %s237 = sphi 0, %s236
      %s251 = sphi 0, %s237
      %s255 = sphi 0, %s255
      %s257 = sphi 0, %s255
      %s258 = sphi 0, %s257
      %s272 = sphi 0, %s258
      %s276 = sphi 0, %s276
      %s278 = sphi 0, %s276
      %s279 = sphi 0, %s278
      %s293 = sphi 0, %s279
      %s297 = sphi 0, %s297
      %s299 = sphi 0, %s297
      %s300 = sphi 0, %s299
      %s314 = sphi 0, %s300
      %s318 = sphi 0, %s318
      %s320 = sphi 0, %s318
      %s321 = sphi 0, %s320
      %s335 = sphi 0, %s321
      %s341 = sphi 0, %s343
      %s344 = sphi 0, %s341
      %s345 = sphi 0, %s344
      %s361 = sphi 0, %s345
      %s367 = sphi 0, %s369
      %s370 = sphi 0, %s367
      %s371 = sphi 0, %s370
      %s387 = sphi 0, %s371
      %s393 = sphi 0, %s395
      %s396 = sphi 0, %s393
      %s397 = sphi 0, %s396
      %s413 = sphi 0, %s397
    $region4: #{transformer_decoder_layer.8} parent=1 // loop_header_branch
      %31 = sbr.rel (%p29) target = $region8
    $region5: #{transformer_decoder_layer.8} parent=1 // loop_body
      %s33 = ssub.s32 %s28, 1
      %s34 = ssub.s32 %s28, 2
      %s35 = sadd.s32 %s28, 1
      %s36 = ssub.s32 %s28, %s35
      %p37 = scmp.eq.s32.totalorder %s36, 0
      %s39 = sadd.s32 %s38, 1
      %s40 = scalar_select %p37, %s38, %s39
      %p43 = pneg %p37
      %p44 = scmp.eq.s32.totalorder %s28, 1
      %p45 = por %p43, %p44
      %p46 = scmp.ne.s32.totalorder %s38, %s41
      %p47 = scmp.eq.s32.totalorder %s28, 0
      %p48 = por %p46, %p47
      %p49 = scmp.ne.s32.totalorder %s38, %s41
      %p50 = scmp.eq.s32.totalorder %s33, 1
      %p51 = por %p49, %p50
      %p52 = scmp.ne.s32.totalorder %s41, %s42
      %p53 = scmp.eq.s32.totalorder %s33, 0
      %p54 = por %p52, %p53
      %p55 = scmp.ne.s32.totalorder %s41, %s42
      %p56 = scmp.eq.s32.totalorder %s34, 1
      %p57 = por %p55, %p56
      %p59 = scmp.ne.s32.totalorder %s42, %s58
      %p60 = scmp.eq.s32.totalorder %s34, 0
      %p61 = por %p59, %p60
      %s62 = ssub.s32 %s28, %s35
      %p63 = scmp.eq.s32.totalorder %s62, 0
      %s65 = sadd.s32 %s64, 1
      %s66 = scalar_select %p63, %s64, %s65
      %p69 = pneg %p63
      %p70 = scmp.eq.s32.totalorder %s28, 1
      %p71 = por %p69, %p70
      %p72 = scmp.ne.s32.totalorder %s64, %s67
      %p73 = scmp.eq.s32.totalorder %s28, 0
      %p74 = por %p72, %p73
      %p75 = scmp.ne.s32.totalorder %s64, %s67
      %p76 = scmp.eq.s32.totalorder %s33, 1
      %p77 = por %p75, %p76
      %p78 = scmp.ne.s32.totalorder %s67, %s68
      %p79 = scmp.eq.s32.totalorder %s33, 0
      %p80 = por %p78, %p79
      %p81 = scmp.ne.s32.totalorder %s67, %s68
      %p82 = scmp.eq.s32.totalorder %s34, 1
      %p83 = por %p81, %p82
      %p85 = scmp.ne.s32.totalorder %s68, %s84
      %p86 = scmp.eq.s32.totalorder %s34, 0
      %p87 = por %p85, %p86
      %s88 = ssub.s32 %s28, %s35
      %p89 = scmp.eq.s32.totalorder %s88, 0
      %s91 = sadd.s32 %s90, 1
      %s92 = scalar_select %p89, %s90, %s91
      %p95 = pneg %p89
      %p96 = scmp.eq.s32.totalorder %s28, 1
      %p97 = por %p95, %p96
      %p98 = scmp.ne.s32.totalorder %s90, %s93
      %p99 = scmp.eq.s32.totalorder %s28, 0
      %p100 = por %p98, %p99
      %p101 = scmp.ne.s32.totalorder %s90, %s93
      %p102 = scmp.eq.s32.totalorder %s33, 1
      %p103 = por %p101, %p102
      %p104 = scmp.ne.s32.totalorder %s93, %s94
      %p105 = scmp.eq.s32.totalorder %s33, 0
      %p106 = por %p104, %p105
      %p107 = scmp.ne.s32.totalorder %s93, %s94
      %p108 = scmp.eq.s32.totalorder %s34, 1
      %p109 = por %p107, %p108
      %p111 = scmp.ne.s32.totalorder %s94, %s110
      %p112 = scmp.eq.s32.totalorder %s34, 0
      %p113 = por %p111, %p112
      %s114 = ssub.s32 %s28, %s35
      %p115 = scmp.eq.s32.totalorder %s114, 0
      %s117 = sadd.s32 %s116, 1
      %s118 = scalar_select %p115, %s116, %s117
      %p121 = pneg %p115
      %p122 = scmp.eq.s32.totalorder %s28, 1
      %p123 = por %p121, %p122
      %p124 = scmp.ne.s32.totalorder %s116, %s119
      %p125 = scmp.eq.s32.totalorder %s28, 0
      %p126 = por %p124, %p125
      %p127 = scmp.ne.s32.totalorder %s116, %s119
      %p128 = scmp.eq.s32.totalorder %s33, 1
      %p129 = por %p127, %p128
      %p130 = scmp.ne.s32.totalorder %s119, %s120
      %p131 = scmp.eq.s32.totalorder %s33, 0
      %p132 = por %p130, %p131
      %p133 = scmp.ne.s32.totalorder %s119, %s120
      %p134 = scmp.eq.s32.totalorder %s34, 1
      %p135 = por %p133, %p134
      %p137 = scmp.ne.s32.totalorder %s120, %s136
      %p138 = scmp.eq.s32.totalorder %s34, 0
      %p139 = por %p137, %p138
      %s140 = ssub.s32 %s28, %s35
      %p141 = scmp.eq.s32.totalorder %s140, 0
      %s143 = sadd.s32 %s142, 1
      %s144 = scalar_select %p141, %s142, %s143
      %p147 = pneg %p141
      %p148 = scmp.eq.s32.totalorder %s28, 1
      %p149 = por %p147, %p148
      %p150 = scmp.ne.s32.totalorder %s142, %s145
      %p151 = scmp.eq.s32.totalorder %s28, 0
      %p152 = por %p150, %p151
      %p153 = scmp.ne.s32.totalorder %s142, %s145
      %p154 = scmp.eq.s32.totalorder %s33, 1
      %p155 = por %p153, %p154
      %p156 = scmp.ne.s32.totalorder %s145, %s146
      %p157 = scmp.eq.s32.totalorder %s33, 0
      %p158 = por %p156, %p157
      %p159 = scmp.ne.s32.totalorder %s145, %s146
      %p160 = scmp.eq.s32.totalorder %s34, 1
      %p161 = por %p159, %p160
      %p163 = scmp.ne.s32.totalorder %s146, %s162
      %p164 = scmp.eq.s32.totalorder %s34, 0
      %p165 = por %p163, %p164
      %s166 = ssub.s32 %s28, %s35
      %p167 = scmp.eq.s32.totalorder %s166, 0
      %s169 = sadd.s32 %s168, 1
      %s170 = scalar_select %p167, %s168, %s169
      %p173 = pneg %p167
      %p174 = scmp.eq.s32.totalorder %s28, 1
      %p175 = por %p173, %p174
      %p176 = scmp.ne.s32.totalorder %s168, %s171
      %p177 = scmp.eq.s32.totalorder %s28, 0
      %p178 = por %p176, %p177
      %p179 = scmp.ne.s32.totalorder %s168, %s171
      %p180 = scmp.eq.s32.totalorder %s33, 1
      %p181 = por %p179, %p180
      %p182 = scmp.ne.s32.totalorder %s171, %s172
      %p183 = scmp.eq.s32.totalorder %s33, 0
      %p184 = por %p182, %p183
      %p185 = scmp.ne.s32.totalorder %s171, %s172
      %p186 = scmp.eq.s32.totalorder %s34, 1
      %p187 = por %p185, %p186
      %p189 = scmp.ne.s32.totalorder %s172, %s188
      %p190 = scmp.eq.s32.totalorder %s34, 0
      %p191 = por %p189, %p190
      %s193 = sadd.s32 %s192, 1
      %p196 = scmp.eq.s32.totalorder %s28, 1
      %p197 = scmp.ne.s32.totalorder %s192, %s194
      %p198 = scmp.eq.s32.totalorder %s28, 0
      %p199 = por %p197, %p198
      %p200 = scmp.ne.s32.totalorder %s192, %s194
      %p201 = scmp.eq.s32.totalorder %s33, 1
      %p202 = por %p200, %p201
      %p203 = scmp.ne.s32.totalorder %s194, %s195
      %p204 = scmp.eq.s32.totalorder %s33, 0
      %p205 = por %p203, %p204
      %p206 = scmp.ne.s32.totalorder %s194, %s195
      %p207 = scmp.eq.s32.totalorder %s34, 1
      %p208 = por %p206, %p207
      %p210 = scmp.ne.s32.totalorder %s195, %s209
      %p211 = scmp.eq.s32.totalorder %s34, 0
      %p212 = por %p210, %p211
      %s214 = sadd.s32 %s213, 1
      %p217 = scmp.eq.s32.totalorder %s28, 1
      %p218 = scmp.ne.s32.totalorder %s213, %s215
      %p219 = scmp.eq.s32.totalorder %s28, 0
      %p220 = por %p218, %p219
      %p221 = scmp.ne.s32.totalorder %s213, %s215
      %p222 = scmp.eq.s32.totalorder %s33, 1
      %p223 = por %p221, %p222
      %p224 = scmp.ne.s32.totalorder %s215, %s216
      %p225 = scmp.eq.s32.totalorder %s33, 0
      %p226 = por %p224, %p225
      %p227 = scmp.ne.s32.totalorder %s215, %s216
      %p228 = scmp.eq.s32.totalorder %s34, 1
      %p229 = por %p227, %p228
      %p231 = scmp.ne.s32.totalorder %s216, %s230
      %p232 = scmp.eq.s32.totalorder %s34, 0
      %p233 = por %p231, %p232
      %s235 = sadd.s32 %s234, 1
      %p238 = scmp.eq.s32.totalorder %s28, 1
      %p239 = scmp.ne.s32.totalorder %s234, %s236
      %p240 = scmp.eq.s32.totalorder %s28, 0
      %p241 = por %p239, %p240
      %p242 = scmp.ne.s32.totalorder %s234, %s236
      %p243 = scmp.eq.s32.totalorder %s33, 1
      %p244 = por %p242, %p243
      %p245 = scmp.ne.s32.totalorder %s236, %s237
      %p246 = scmp.eq.s32.totalorder %s33, 0
      %p247 = por %p245, %p246
      %p248 = scmp.ne.s32.totalorder %s236, %s237
      %p249 = scmp.eq.s32.totalorder %s34, 1
      %p250 = por %p248, %p249
      %p252 = scmp.ne.s32.totalorder %s237, %s251
      %p253 = scmp.eq.s32.totalorder %s34, 0
      %p254 = por %p252, %p253
      %s256 = sadd.s32 %s255, 1
      %p259 = scmp.eq.s32.totalorder %s28, 1
      %p260 = scmp.ne.s32.totalorder %s255, %s257
      %p261 = scmp.eq.s32.totalorder %s28, 0
      %p262 = por %p260, %p261
      %p263 = scmp.ne.s32.totalorder %s255, %s257
      %p264 = scmp.eq.s32.totalorder %s33, 1
      %p265 = por %p263, %p264
      %p266 = scmp.ne.s32.totalorder %s257, %s258
      %p267 = scmp.eq.s32.totalorder %s33, 0
      %p268 = por %p266, %p267
      %p269 = scmp.ne.s32.totalorder %s257, %s258
      %p270 = scmp.eq.s32.totalorder %s34, 1
      %p271 = por %p269, %p270
      %p273 = scmp.ne.s32.totalorder %s258, %s272
      %p274 = scmp.eq.s32.totalorder %s34, 0
      %p275 = por %p273, %p274
      %s277 = sadd.s32 %s276, 1
      %p280 = scmp.eq.s32.totalorder %s28, 1
      %p281 = scmp.ne.s32.totalorder %s276, %s278
      %p282 = scmp.eq.s32.totalorder %s28, 0
      %p283 = por %p281, %p282
      %p284 = scmp.ne.s32.totalorder %s276, %s278
      %p285 = scmp.eq.s32.totalorder %s33, 1
      %p286 = por %p284, %p285
      %p287 = scmp.ne.s32.totalorder %s278, %s279
      %p288 = scmp.eq.s32.totalorder %s33, 0
      %p289 = por %p287, %p288
      %p290 = scmp.ne.s32.totalorder %s278, %s279
      %p291 = scmp.eq.s32.totalorder %s34, 1
      %p292 = por %p290, %p291
      %p294 = scmp.ne.s32.totalorder %s279, %s293
      %p295 = scmp.eq.s32.totalorder %s34, 0
      %p296 = por %p294, %p295
      %s298 = sadd.s32 %s297, 1
      %p301 = scmp.eq.s32.totalorder %s28, 1
      %p302 = scmp.ne.s32.totalorder %s297, %s299
      %p303 = scmp.eq.s32.totalorder %s28, 0
      %p304 = por %p302, %p303
      %p305 = scmp.ne.s32.totalorder %s297, %s299
      %p306 = scmp.eq.s32.totalorder %s33, 1
      %p307 = por %p305, %p306
      %p308 = scmp.ne.s32.totalorder %s299, %s300
      %p309 = scmp.eq.s32.totalorder %s33, 0
      %p310 = por %p308, %p309
      %p311 = scmp.ne.s32.totalorder %s299, %s300
      %p312 = scmp.eq.s32.totalorder %s34, 1
      %p313 = por %p311, %p312
      %p315 = scmp.ne.s32.totalorder %s300, %s314
      %p316 = scmp.eq.s32.totalorder %s34, 0
      %p317 = por %p315, %p316
      %s319 = sadd.s32 %s318, 1
      %p322 = scmp.eq.s32.totalorder %s28, 1
      %p323 = scmp.ne.s32.totalorder %s318, %s320
      %p324 = scmp.eq.s32.totalorder %s28, 0
      %p325 = por %p323, %p324
      %p326 = scmp.ne.s32.totalorder %s318, %s320
      %p327 = scmp.eq.s32.totalorder %s33, 1
      %p328 = por %p326, %p327
      %p329 = scmp.ne.s32.totalorder %s320, %s321
      %p330 = scmp.eq.s32.totalorder %s33, 0
      %p331 = por %p329, %p330
      %p332 = scmp.ne.s32.totalorder %s320, %s321
      %p333 = scmp.eq.s32.totalorder %s34, 1
      %p334 = por %p332, %p333
      %p336 = scmp.ne.s32.totalorder %s321, %s335
      %p337 = scmp.eq.s32.totalorder %s34, 0
      %p338 = por %p336, %p337
      %s339 = ssub.s32 %s28, %s35
      %p340 = scmp.eq.s32.totalorder %s339, 0
      %s342 = sadd.s32 %s341, 1
      %s343 = scalar_select %p340, %s341, %s342
      %p346 = pneg %p340
      %p347 = scmp.eq.s32.totalorder %s28, 1
      %p348 = por %p346, %p347
      %p349 = scmp.ne.s32.totalorder %s341, %s344
      %p350 = scmp.eq.s32.totalorder %s28, 0
      %p351 = por %p349, %p350
      %p352 = scmp.ne.s32.totalorder %s341, %s344
      %p353 = scmp.eq.s32.totalorder %s33, 1
      %p354 = por %p352, %p353
      %p355 = scmp.ne.s32.totalorder %s344, %s345
      %p356 = scmp.eq.s32.totalorder %s33, 0
      %p357 = por %p355, %p356
      %p358 = scmp.ne.s32.totalorder %s344, %s345
      %p359 = scmp.eq.s32.totalorder %s34, 1
      %p360 = por %p358, %p359
      %p362 = scmp.ne.s32.totalorder %s345, %s361
      %p363 = scmp.eq.s32.totalorder %s34, 0
      %p364 = por %p362, %p363
      %s365 = ssub.s32 %s28, %s35
      %p366 = scmp.eq.s32.totalorder %s365, 0
      %s368 = sadd.s32 %s367, 1
      %s369 = scalar_select %p366, %s367, %s368
      %p372 = pneg %p366
      %p373 = scmp.eq.s32.totalorder %s28, 1
      %p374 = por %p372, %p373
      %p375 = scmp.ne.s32.totalorder %s367, %s370
      %p376 = scmp.eq.s32.totalorder %s28, 0
      %p377 = por %p375, %p376
      %p378 = scmp.ne.s32.totalorder %s367, %s370
      %p379 = scmp.eq.s32.totalorder %s33, 1
      %p380 = por %p378, %p379
      %p381 = scmp.ne.s32.totalorder %s370, %s371
      %p382 = scmp.eq.s32.totalorder %s33, 0
      %p383 = por %p381, %p382
      %p384 = scmp.ne.s32.totalorder %s370, %s371
      %p385 = scmp.eq.s32.totalorder %s34, 1
      %p386 = por %p384, %p385
      %p388 = scmp.ne.s32.totalorder %s371, %s387
      %p389 = scmp.eq.s32.totalorder %s34, 0
      %p390 = por %p388, %p389
      %s391 = ssub.s32 %s28, %s35
      %p392 = scmp.eq.s32.totalorder %s391, 0
      %s394 = sadd.s32 %s393, 1
      %s395 = scalar_select %p392, %s393, %s394
      %p398 = pneg %p392
      %p399 = scmp.eq.s32.totalorder %s28, 1
      %p400 = por %p398, %p399
      %p401 = scmp.ne.s32.totalorder %s393, %s396
      %p402 = scmp.eq.s32.totalorder %s28, 0
      %p403 = por %p401, %p402
      %p404 = scmp.ne.s32.totalorder %s393, %s396
      %p405 = scmp.eq.s32.totalorder %s33, 1
      %p406 = por %p404, %p405
      %p407 = scmp.ne.s32.totalorder %s396, %s397
      %p408 = scmp.eq.s32.totalorder %s33, 0
      %p409 = por %p407, %p408
      %p410 = scmp.ne.s32.totalorder %s396, %s397
      %p411 = scmp.eq.s32.totalorder %s34, 1
      %p412 = por %p410, %p411
      %p414 = scmp.ne.s32.totalorder %s397, %s413
      %p415 = scmp.eq.s32.totalorder %s34, 0
      %p416 = por %p414, %p415
      %p417 = scmp.le.s32.totalorder 1, %s28
      %p418 = scmp.lt.s32.totalorder %s28, 3
      %p419 = pnand %p417, %p418
      %p420 = pneg %p419
      // Predicated region
      $region9: #{transformer_decoder_layer.8} parent=5 // pred_check
        _
      $region10: #{transformer_decoder_layer.8} parent=5 // pred_check_branch
        %422 = sbr.rel (%p419) target = $region12
      $region11: #{transformer_decoder_layer.8} parent=5 // pred_region
        %s423 = ssub.s32 %s28, 1
        // Predicated region
        $region13: #{transformer_decoder_layer.8} parent=11 // pred_check
          %p424 = pneg %p205
        $region14: #{transformer_decoder_layer.8} parent=11 // pred_check_branch
          %426 = sbr.rel (%p424) target = $region16
        $region15: #{transformer_decoder_layer.8} parent=11 // pred_region
          _
        $region16: #{transformer_decoder_layer.8} parent=11 // pred_fallthru
          _
        // Predicated region
        $region17: #{transformer_decoder_layer.8} parent=11 // pred_check
          %p427 = pneg %p226
        $region18: #{transformer_decoder_layer.8} parent=11 // pred_check_branch
          %429 = sbr.rel (%p427) target = $region20
        $region19: #{transformer_decoder_layer.8} parent=11 // pred_region
          _
        $region20: #{transformer_decoder_layer.8} parent=11 // pred_fallthru
          _
        // Predicated region
        $region21: #{transformer_decoder_layer.8} parent=11 // pred_check
          %p430 = pneg %p247
        $region22: #{transformer_decoder_layer.8} parent=11 // pred_check_branch
          %432 = sbr.rel (%p430) target = $region24
        $region23: #{transformer_decoder_layer.8} parent=11 // pred_region
          _
        $region24: #{transformer_decoder_layer.8} parent=11 // pred_fallthru
          _
        // Predicated region
        $region25: #{transformer_decoder_layer.8} parent=11 // pred_check
          %p433 = pneg %p268
        $region26: #{transformer_decoder_layer.8} parent=11 // pred_check_branch
          %435 = sbr.rel (%p433) target = $region28
        $region27: #{transformer_decoder_layer.8} parent=11 // pred_region
          _
        $region28: #{transformer_decoder_layer.8} parent=11 // pred_fallthru
          _
        // Predicated region
        $region29: #{transformer_decoder_layer.8} parent=11 // pred_check
          %p436 = pneg %p289
        $region30: #{transformer_decoder_layer.8} parent=11 // pred_check_branch
          %438 = sbr.rel (%p436) target = $region32
        $region31: #{transformer_decoder_layer.8} parent=11 // pred_region
          _
        $region32: #{transformer_decoder_layer.8} parent=11 // pred_fallthru
          _
        // Predicated region
        $region33: #{transformer_decoder_layer.8} parent=11 // pred_check
          %p439 = pneg %p310
        $region34: #{transformer_decoder_layer.8} parent=11 // pred_check_branch
          %441 = sbr.rel (%p439) target = $region36
        $region35: #{transformer_decoder_layer.8} parent=11 // pred_region
          _
        $region36: #{transformer_decoder_layer.8} parent=11 // pred_fallthru
          _
        // Predicated region
        $region37: #{transformer_decoder_layer.8} parent=11 // pred_check
          %p442 = pneg %p331
        $region38: #{transformer_decoder_layer.8} parent=11 // pred_check_branch
          %444 = sbr.rel (%p442) target = $region40
        $region39: #{transformer_decoder_layer.8} parent=11 // pred_region
          _
        $region40: #{transformer_decoder_layer.8} parent=11 // pred_fallthru
          _
      $region12: #{transformer_decoder_layer.8} parent=5 // pred_fallthru
        _
      %p445 = scmp.lt.s32.totalorder %s28, 2
      // Predicated region
      $region41: #{transformer_decoder_layer.8} parent=5 // pred_check
        %p446 = pneg %p445
      $region42: #{transformer_decoder_layer.8} parent=5 // pred_check_branch
        %448 = sbr.rel (%p446) target = $region44
      $region43: #{transformer_decoder_layer.8} parent=5 // pred_region
        // Predicated region
        $region45: #{transformer_decoder_layer.8} parent=43 // pred_check
          %p449 = pneg %p48
        $region46: #{transformer_decoder_layer.8} parent=43 // pred_check_branch
          %451 = sbr.rel (%p449) target = $region48
        $region47: #{transformer_decoder_layer.8} parent=43 // pred_region
          %p452 = scmp.lt.s32.totalorder %s28, 1
          %s453 = scalar_select %p452, %s28, 1
          %s454 = smul.addr %s453, 4
          %s455 = scalar_lea.vmem %s0, %s454
        $region48: #{transformer_decoder_layer.8} parent=43 // pred_fallthru
          _
        // Predicated region
        $region49: #{transformer_decoder_layer.8} parent=43 // pred_check
          %p456 = pneg %p74
        $region50: #{transformer_decoder_layer.8} parent=43 // pred_check_branch
          %458 = sbr.rel (%p456) target = $region52
        $region51: #{transformer_decoder_layer.8} parent=43 // pred_region
          %p459 = scmp.lt.s32.totalorder %s28, 1
          %s460 = scalar_select %p459, %s28, 1
          %s461 = smul.addr %s460, 2
          %s462 = smul.addr %s461, 8
          %s463 = scalar_lea.vmem %s1, %s462
        $region52: #{transformer_decoder_layer.8} parent=43 // pred_fallthru
          _
        // Predicated region
        $region53: #{transformer_decoder_layer.8} parent=43 // pred_check
          %p464 = pneg %p100
        $region54: #{transformer_decoder_layer.8} parent=43 // pred_check_branch
          %466 = sbr.rel (%p464) target = $region56
        $region55: #{transformer_decoder_layer.8} parent=43 // pred_region
          %p467 = scmp.lt.s32.totalorder %s28, 1
          %s468 = scalar_select %p467, %s28, 1
          %s469 = smul.addr %s468, 8
          %s470 = scalar_lea.vmem %s2, %s469
        $region56: #{transformer_decoder_layer.8} parent=43 // pred_fallthru
          _
        // Predicated region
        $region57: #{transformer_decoder_layer.8} parent=43 // pred_check
          %p471 = pneg %p126
        $region58: #{transformer_decoder_layer.8} parent=43 // pred_check_branch
          %473 = sbr.rel (%p471) target = $region60
        $region59: #{transformer_decoder_layer.8} parent=43 // pred_region
          %p474 = scmp.lt.s32.totalorder %s28, 1
          %s475 = scalar_select %p474, %s28, 1
          %s476 = scalar_lea.vmem %s3, %s475
        $region60: #{transformer_decoder_layer.8} parent=43 // pred_fallthru
          _
        // Predicated region
        $region61: #{transformer_decoder_layer.8} parent=43 // pred_check
          %p477 = pneg %p152
        $region62: #{transformer_decoder_layer.8} parent=43 // pred_check_branch
          %479 = sbr.rel (%p477) target = $region64
        $region63: #{transformer_decoder_layer.8} parent=43 // pred_region
          %p480 = scmp.lt.s32.totalorder %s28, 1
          %s481 = scalar_select %p480, %s28, 1
          %s482 = scalar_lea.vmem %s4, %s481
        $region64: #{transformer_decoder_layer.8} parent=43 // pred_fallthru
          _
        // Predicated region
        $region65: #{transformer_decoder_layer.8} parent=43 // pred_check
          %p483 = pneg %p178
        $region66: #{transformer_decoder_layer.8} parent=43 // pred_check_branch
          %485 = sbr.rel (%p483) target = $region68
        $region67: #{transformer_decoder_layer.8} parent=43 // pred_region
          %p486 = scmp.lt.s32.totalorder %s28, 1
          %s487 = scalar_select %p486, %s28, 1
          %s488 = smul.addr %s487, 8
          %s489 = scalar_lea.vmem %s5, %s488
        $region68: #{transformer_decoder_layer.8} parent=43 // pred_fallthru
          _
      $region44: #{transformer_decoder_layer.8} parent=5 // pred_fallthru
        _
      %p490 = scmp.le.s32.totalorder 1, %s28
      %p491 = scmp.lt.s32.totalorder %s28, 3
      %p492 = pnand %p490, %p491
      %p493 = pneg %p492
      // Predicated region
      $region69: #{transformer_decoder_layer.8} parent=5 // pred_check
        _
      $region70: #{transformer_decoder_layer.8} parent=5 // pred_check_branch
        %495 = sbr.rel (%p492) target = $region72
      $region71: #{transformer_decoder_layer.8} parent=5 // pred_region
        %s496 = ssub.s32 %s28, 1
        %p497 = scmp.lt.s32.totalorder %s33, 1
        %s498 = scalar_select %p497, %s33, 1
        %s499 = smul.addr %s498, 4
        %s500 = scalar_lea.vmem %s0, %s499
        %p501 = pneg %p54
        %p502 = pneg %p51
        %p503 = scmp.lt.s32.totalorder %s33, 1
        %s504 = scalar_select %p503, %s33, 1
        %s505 = smul.addr %s504, 2
        %s506 = smul.addr %s505, 8
        %s507 = scalar_lea.vmem %s1, %s506
        %p508 = pneg %p80
        %p509 = pneg %p77
        %p510 = scmp.lt.s32.totalorder %s33, 1
        %s511 = scalar_select %p510, %s33, 1
        %s512 = smul.addr %s511, 8
        %s513 = scalar_lea.vmem %s2, %s512
        %p514 = pneg %p106
        %p515 = pneg %p103
        %p516 = scmp.lt.s32.totalorder %s33, 1
        %s517 = scalar_select %p516, %s33, 1
        %s518 = scalar_lea.vmem %s3, %s517
        %p519 = pneg %p132
        %p520 = pneg %p129
        %p521 = scmp.lt.s32.totalorder %s33, 1
        %s522 = scalar_select %p521, %s33, 1
        %s523 = scalar_lea.vmem %s4, %s522
        %p524 = pneg %p158
        %p525 = pneg %p155
        %p526 = scmp.lt.s32.totalorder %s33, 1
        %s527 = scalar_select %p526, %s33, 1
        %s528 = smul.addr %s527, 8
        %s529 = scalar_lea.vmem %s5, %s528
        %p530 = pneg %p184
        %p531 = pneg %p181
        %p532 = pneg %p205
        %p533 = pneg %p202
        %p534 = pneg %p226
        %p535 = pneg %p223
        %p536 = pneg %p247
        %p537 = pneg %p244
        %p538 = pneg %p268
        %p539 = pneg %p265
        %p540 = pneg %p289
        %p541 = pneg %p286
        %p542 = pneg %p310
        %p543 = pneg %p307
        %p544 = pneg %p331
        %p545 = pneg %p328
        %p546 = pneg %p357
        %p547 = pneg %p354
        %s548 = sand.u32 %s344, 1
        %s549 = scalar_lea.sflag [#allocation4], %s548
        %s550 = sand.u32 %s344, 1
        %s551 = smul.addr %s550, 8
        %s552 = scalar_lea.vmem [#allocation3], %s551
        %p553 = pneg %p383
        %p554 = pneg %p380
        %s555 = sand.u32 %s370, 1
        %s556 = scalar_lea.sflag [#allocation6], %s555
        %s557 = sand.u32 %s370, 1
        %s558 = smul.addr %s557, 8
        %s559 = scalar_lea.vmem [#allocation5], %s558
        %p560 = pneg %p409
        %p561 = pneg %p406
        %p562 = scmp.lt.s32.totalorder %s33, 1
        %s563 = scalar_select %p562, %s33, 1
        %s564 = smul.addr %s563, 8
        %s565 = scalar_lea.vmem %s15, %s564
        %p566 = scmp.lt.s32.totalorder %s33, 1
        %s567 = scalar_select %p566, %s33, 1
        %s568 = smul.addr %s567, 4
        %s569 = scalar_lea.vmem %s0, %s568
        %p570 = scmp.lt.s32.totalorder %s33, 1
        %s571 = scalar_select %p570, %s33, 1
        %s572 = smul.addr %s571, 2
        %s573 = smul.addr %s572, 8
        %s574 = scalar_lea.vmem %s1, %s573
        %p575 = scmp.lt.s32.totalorder %s33, 1
        %s576 = scalar_select %p575, %s33, 1
        %s577 = smul.addr %s576, 8
        %s578 = scalar_lea.vmem %s2, %s577
        %p579 = scmp.lt.s32.totalorder %s33, 1
        %s580 = scalar_select %p579, %s33, 1
        %s581 = scalar_lea.vmem %s3, %s580
        %p582 = scmp.lt.s32.totalorder %s33, 1
        %s583 = scalar_select %p582, %s33, 1
        %s584 = scalar_lea.vmem %s4, %s583
        %p585 = scmp.lt.s32.totalorder %s33, 1
        %s586 = scalar_select %p585, %s33, 1
        %s587 = smul.addr %s586, 8
        %s588 = scalar_lea.vmem %s5, %s587
        %p589 = scmp.lt.s32.totalorder %s33, 1
        %s590 = scalar_select %p589, %s33, 1
        %s591 = smul.addr %s590, 8
        %s592 = scalar_lea.vmem %s15, %s591
        %v594 = vld [vmem:[%s569] sm:$0xf]
        %v595 = vld [vmem:[%s6] sm:$0xf]
        %v596 = vld [vmem:[%s6 + $0x4] sm:$0xf]
        %v597 = vld [vmem:[%s6 + $0x8] sm:$0xf]
        %v598 = vld [vmem:[%s6 + $0xc] sm:$0xf]
        %v599 = vld [vmem:[%s7] sm:$0x1]
        %v600 = vld [vmem:[%s8] sm:$0xf]
        %v601 = vld [vmem:[%s8 + $0x4] sm:$0xf]
        %v602 = vld [vmem:[%s8 + $0x8] sm:$0xf]
        %v603 = vld [vmem:[%s8 + $0xc] sm:$0xf]
        %v604 = vld [vmem:[%s9] sm:$0x1]
        %v605 = vld [vmem:[%s574] sm:$0xff]
        %v606 = vld [vmem:[%s574 + $0x8] sm:$0xff]
        %v607 = vpack.c.bf16 %v606, %v605
        %v609 = vlaneseq
        %v610 = vshrl.u32 %v609, 7
        %v611 = vsub.s32 0, %v610
        %v612 = vrot.slane %v599, %v611
        %v618 = vunpack.c.l.b16 %v595
        %v619 = vunpack.c.l.b16 %v596
        %v620 = vunpack.c.l.b16 %v597
        %v621 = vunpack.c.l.b16 %v598
        %v622 = vpack.c.b16 %v619, %v618
        %v623 = vpack.c.b16 %v621, %v620
        %vm626 = vcmask 261120
        %v628 = vsel %vm626, %v607, 0
        %630 = vmatprep.subr.bf16.mxu0 0
        %631 = vmatpush1.bf16.msra.mxu0 0
        %632 = vmatprep.subr.bf16.mxu0 0
        %633 = vmatpush1.bf16.msra.mxu0 0
        %634 = vmatprep.subr.bf16.mxu0 0
        %635 = vmatpush1.bf16.msra.mxu0 0
        %636 = vmatprep.subr.bf16.mxu0 0
        %637 = vmatpush1.bf16.msra.mxu0 0
        %638 = vmatprep.subr.bf16.mxu0 0
        %639 = vmatpush1.bf16.msra.mxu0 0
        %640 = vmatprep.subr.bf16.mxu0 0
        %641 = vmatpush1.bf16.msra.mxu0 0
        %642 = vmatprep.subr.bf16.mxu0 0
        %643 = vmatpush1.bf16.msra.mxu0 %v623
        %644 = vmatprep.subr.bf16.mxu0 0
        %645 = vmatpush1.bf16.msra.mxu0 %v622
        %646 = vmatprep.subr.bf16.mxu0 0
        %647 = vmatpush2.bf16.msra.mxu0 0
        %648 = vmatprep.subr.bf16.mxu0 0
        %649 = vmatpush2.bf16.msra.mxu0 0
        %650 = vmatprep.subr.bf16.mxu0 0
        %651 = vmatpush2.bf16.msra.mxu0 0
        %652 = vmatprep.subr.bf16.mxu0 0
        %653 = vmatpush2.bf16.msra.mxu0 0
        %654 = vmatprep.subr.bf16.mxu0 0
        %655 = vmatpush2.bf16.msra.mxu0 0
        %656 = vmatprep.subr.bf16.mxu0 0
        %657 = vmatpush2.bf16.msra.mxu0 0
        %658 = vmatprep.subr.bf16.mxu0 0
        %659 = vmatpush2.bf16.msra.mxu0 0
        %660 = vmatprep.subr.bf16.mxu0 0
        %661 = vmatpush2.bf16.msra.mxu0 0
        %662 = vmatprep.mubr.bf16.mxu0 0
        %663 = vmatmul.mubr.bf16.gmra.mxu0 %v628
        %v664 = vpop.f32.mrf.mxu0
        %v665 = vadd.f32 %v612, %v664
        %v666 = vpop.f32.mrf.mxu0
        %v667 = vpop.f32.mrf.mxu0
        %v668 = vadd.f32 %v612, %v667
        %v669 = vpop.f32.mrf.mxu0
        %670 = vdwg.mxu0
        %v671 = vpack.c.bf16 %v668, %v665
        %v672 = vld [vmem:[%s581] sm:$0x1]
        %vm673 = vcmp.gt.s32.totalorder %v672, 0
        %v674 = vsel %vm673, -1e+18, 0.0
        %v676 = vlaneseq
        %v677 = vshrl.u32 %v676, 7
        %v678 = vsub.s32 0, %v677
        %v679 = vrot.slane %v674, %v678
        %vm681 = vcmask 64512
        %v683 = vsel %vm681, %v594, 0
        %v686 = vsel %vm681, %v671, 0
        %688 = vmatprep.subr.bf16.mxu0 0
        %689 = vmatpush1.bf16.xpose.msra.mxu0 0
        %690 = vmatprep.subr.bf16.mxu0 0
        %691 = vmatpush1.bf16.xpose.msra.mxu0 0
        %692 = vmatprep.subr.bf16.mxu0 0
        %693 = vmatpush1.bf16.xpose.msra.mxu0 0
        %694 = vmatprep.subr.bf16.mxu0 0
        %695 = vmatpush1.bf16.xpose.msra.mxu0 0
        %696 = vmatprep.subr.bf16.mxu0 0
        %697 = vmatpush1.bf16.xpose.msra.mxu0 0
        %698 = vmatprep.subr.bf16.mxu0 0
        %699 = vmatpush1.bf16.xpose.msra.mxu0 0
        %700 = vmatprep.subr.bf16.mxu0 0
        %701 = vmatpush1.bf16.xpose.msra.mxu0 0
        %702 = vmatprep.subr.bf16.mxu0 0
        %703 = vmatpush1.bf16.xpose.msra.mxu0 %v686
        %704 = vmatprep.subr.bf16.mxu0 0
        %705 = vmatpush2.bf16.xpose.msra.mxu0 0
        %706 = vmatprep.subr.bf16.mxu0 0
        %707 = vmatpush2.bf16.xpose.msra.mxu0 0
        %708 = vmatprep.subr.bf16.mxu0 0
        %709 = vmatpush2.bf16.xpose.msra.mxu0 0
        %710 = vmatprep.subr.bf16.mxu0 0
        %711 = vmatpush2.bf16.xpose.msra.mxu0 0
        %712 = vmatprep.subr.bf16.mxu0 0
        %713 = vmatpush2.bf16.xpose.msra.mxu0 0
        %714 = vmatprep.subr.bf16.mxu0 0
        %715 = vmatpush2.bf16.xpose.msra.mxu0 0
        %716 = vmatprep.subr.bf16.mxu0 0
        %717 = vmatpush2.bf16.xpose.msra.mxu0 0
        %718 = vmatprep.subr.bf16.mxu0 0
        %719 = vmatpush2.bf16.xpose.msra.mxu0 0
        %720 = vmatprep.mubr.bf16.mxu0 0
        %721 = vmatmul.mubr.bf16.gmra.mxu0 %v683
        %v722 = vpop.f32.mrf.mxu0
        %v723 = vadd.f32 %v679, %v722
        %v724 = vpop.f32.mrf.mxu0
        %v725 = vpop.f32.mrf.mxu0
        %v726 = vpop.f32.mrf.mxu0
        %727 = vdwg.mxu0
        %vm728 = vcmask 130048
        %v729 = vsel %vm728, %v723, -inf
        %730 = vmax.xlane.f32.xlu0 %v729
        %v731 = vpop.xlane.xlu0 %730
        %v732 = vsub.f32 %v723, %v731
        %v733 = vmul.f32 %v732, 1.442695
        %v734 = vpow.pop %v733
        %v735 = vsel %vm728, %v734, 0.0
        %736 = vadd.xlane.f32.xlu0 %v735
        %v737 = vpop.xlane.xlu0 %736
        %v738 = vrcp.pop %v737
        %v739 = vmul.f32 %v734, %v738
        %v740 = vpack.c.bf16 %v739, %v739
        %742 = vrot.lane.b32.xlu0 %v671, 96
        %v743 = vpop.permute.xlu0 %742
        %v746 = vsel %vm728, %v740, 0
        %748 = vmatprep.subr.bf16.mxu0 0
        %749 = vmatpush1.bf16.msra.mxu0 0
        %750 = vmatprep.subr.bf16.mxu0 0
        %751 = vmatpush1.bf16.msra.mxu0 0
        %752 = vmatprep.subr.bf16.mxu0 0
        %753 = vmatpush1.bf16.msra.mxu0 0
        %754 = vmatprep.subr.bf16.mxu0 0
        %755 = vmatpush1.bf16.msra.mxu0 0
        %756 = vmatprep.subr.bf16.mxu0 0
        %757 = vmatpush1.bf16.msra.mxu0 0
        %758 = vmatprep.subr.bf16.mxu0 0
        %759 = vmatpush1.bf16.msra.mxu0 0
        %760 = vmatprep.subr.bf16.mxu0 0
        %761 = vmatpush1.bf16.msra.mxu0 0
        %762 = vmatprep.subr.bf16.mxu0 0
        %763 = vmatpush1.bf16.msra.mxu0 %v743
        %764 = vmatprep.subr.bf16.mxu0 0
        %765 = vmatpush2.bf16.msra.mxu0 0
        %766 = vmatprep.subr.bf16.mxu0 0
        %767 = vmatpush2.bf16.msra.mxu0 0
        %768 = vmatprep.subr.bf16.mxu0 0
        %769 = vmatpush2.bf16.msra.mxu0 0
        %770 = vmatprep.subr.bf16.mxu0 0
        %771 = vmatpush2.bf16.msra.mxu0 0
        %772 = vmatprep.subr.bf16.mxu0 0
        %773 = vmatpush2.bf16.msra.mxu0 0
        %774 = vmatprep.subr.bf16.mxu0 0
        %775 = vmatpush2.bf16.msra.mxu0 0
        %776 = vmatprep.subr.bf16.mxu0 0
        %777 = vmatpush2.bf16.msra.mxu0 0
        %778 = vmatprep.subr.bf16.mxu0 0
        %779 = vmatpush2.bf16.msra.mxu0 0
        %780 = vmatprep.mubr.bf16.mxu0 0
        %781 = vmatmul.mubr.bf16.gmra.mxu0 %v746
        %v782 = vpop.f32.mrf.mxu0
        %v783 = vadd.f32 0.0, %v782
        %v784 = vpop.f32.mrf.mxu0
        %v785 = vpop.f32.mrf.mxu0
        %v786 = vpop.f32.mrf.mxu0
        %787 = vdwg.mxu0
        %788 = vst.msk [vmem:[#allocation2] sm:$0xff] %vm681, %v783
        %v790 = vunpack.c.l.b16 %v594
        %v791 = vpack.c.b16 %v790, %v790
        %792 = vrot.lane.b32.xlu0 %v791, 120
        %v793 = vpop.permute.xlu0 %792
        %794 = vrot.lane.b32.xlu0 %v671, 120
        %v795 = vpop.permute.xlu0 %794
        %v797 = vsel %vm681, %v793, 0
        %v800 = vsel %vm681, %v795, 0
        %802 = vmatprep.subr.bf16.mxu0 0
        %803 = vmatpush1.bf16.xpose.msra.mxu0 0
        %804 = vmatprep.subr.bf16.mxu0 0
        %805 = vmatpush1.bf16.xpose.msra.mxu0 0
        %806 = vmatprep.subr.bf16.mxu0 0
        %807 = vmatpush1.bf16.xpose.msra.mxu0 0
        %808 = vmatprep.subr.bf16.mxu0 0
        %809 = vmatpush1.bf16.xpose.msra.mxu0 0
        %810 = vmatprep.subr.bf16.mxu0 0
        %811 = vmatpush1.bf16.xpose.msra.mxu0 0
        %812 = vmatprep.subr.bf16.mxu0 0
        %813 = vmatpush1.bf16.xpose.msra.mxu0 0
        %814 = vmatprep.subr.bf16.mxu0 0
        %815 = vmatpush1.bf16.xpose.msra.mxu0 0
        %816 = vmatprep.subr.bf16.mxu0 0
        %817 = vmatpush1.bf16.xpose.msra.mxu0 %v800
        %818 = vmatprep.subr.bf16.mxu0 0
        %819 = vmatpush2.bf16.xpose.msra.mxu0 0
        %820 = vmatprep.subr.bf16.mxu0 0
        %821 = vmatpush2.bf16.xpose.msra.mxu0 0
        %822 = vmatprep.subr.bf16.mxu0 0
        %823 = vmatpush2.bf16.xpose.msra.mxu0 0
        %824 = vmatprep.subr.bf16.mxu0 0
        %825 = vmatpush2.bf16.xpose.msra.mxu0 0
        %826 = vmatprep.subr.bf16.mxu0 0
        %827 = vmatpush2.bf16.xpose.msra.mxu0 0
        %828 = vmatprep.subr.bf16.mxu0 0
        %829 = vmatpush2.bf16.xpose.msra.mxu0 0
        %830 = vmatprep.subr.bf16.mxu0 0
        %831 = vmatpush2.bf16.xpose.msra.mxu0 0
        %832 = vmatprep.subr.bf16.mxu0 0
        %833 = vmatpush2.bf16.xpose.msra.mxu0 0
        %834 = vmatprep.mubr.bf16.mxu0 0
        %835 = vmatmul.mubr.bf16.gmra.mxu0 %v797
        %v836 = vpop.f32.mrf.mxu0
        %v837 = vadd.f32 %v679, %v836
        %v838 = vpop.f32.mrf.mxu0
        %v839 = vpop.f32.mrf.mxu0
        %v840 = vpop.f32.mrf.mxu0
        %841 = vdwg.mxu0
        %v842 = vsel %vm728, %v837, -inf
        %843 = vmax.xlane.f32.xlu0 %v842
        %v844 = vpop.xlane.xlu0 %843
        %v845 = vsub.f32 %v837, %v844
        %v846 = vmul.f32 %v845, 1.442695
        %v847 = vpow.pop %v846
        %v848 = vsel %vm728, %v847, 0.0
        %849 = vadd.xlane.f32.xlu0 %v848
        %v850 = vpop.xlane.xlu0 %849
        %v851 = vrcp.pop %v850
        %v852 = vmul.f32 %v847, %v851
        %v853 = vpack.c.bf16 %v852, %v852
        %854 = vrot.lane.b32.xlu0 %v671, 88
        %v855 = vpop.permute.xlu0 %854
        %v858 = vsel %vm728, %v853, 0
        %860 = vmatprep.subr.bf16.mxu0 0
        %861 = vmatpush1.bf16.msra.mxu0 0
        %862 = vmatprep.subr.bf16.mxu0 0
        %863 = vmatpush1.bf16.msra.mxu0 0
        %864 = vmatprep.subr.bf16.mxu0 0
        %865 = vmatpush1.bf16.msra.mxu0 0
        %866 = vmatprep.subr.bf16.mxu0 0
        %867 = vmatpush1.bf16.msra.mxu0 0
        %868 = vmatprep.subr.bf16.mxu0 0
        %869 = vmatpush1.bf16.msra.mxu0 0
        %870 = vmatprep.subr.bf16.mxu0 0
        %871 = vmatpush1.bf16.msra.mxu0 0
        %872 = vmatprep.subr.bf16.mxu0 0
        %873 = vmatpush1.bf16.msra.mxu0 0
        %874 = vmatprep.subr.bf16.mxu0 0
        %875 = vmatpush1.bf16.msra.mxu0 %v855
        %876 = vmatprep.subr.bf16.mxu0 0
        %877 = vmatpush2.bf16.msra.mxu0 0
        %878 = vmatprep.subr.bf16.mxu0 0
        %879 = vmatpush2.bf16.msra.mxu0 0
        %880 = vmatprep.subr.bf16.mxu0 0
        %881 = vmatpush2.bf16.msra.mxu0 0
        %882 = vmatprep.subr.bf16.mxu0 0
        %883 = vmatpush2.bf16.msra.mxu0 0
        %884 = vmatprep.subr.bf16.mxu0 0
        %885 = vmatpush2.bf16.msra.mxu0 0
        %886 = vmatprep.subr.bf16.mxu0 0
        %887 = vmatpush2.bf16.msra.mxu0 0
        %888 = vmatprep.subr.bf16.mxu0 0
        %889 = vmatpush2.bf16.msra.mxu0 0
        %890 = vmatprep.subr.bf16.mxu0 0
        %891 = vmatpush2.bf16.msra.mxu0 0
        %892 = vmatprep.mubr.bf16.mxu0 0
        %893 = vmatmul.mubr.bf16.gmra.mxu0 %v858
        %v894 = vpop.f32.mrf.mxu0
        %v895 = vadd.f32 0.0, %v894
        %v896 = vpop.f32.mrf.mxu0
        %v897 = vpop.f32.mrf.mxu0
        %v898 = vpop.f32.mrf.mxu0
        %899 = vdwg.mxu0
        %901 = vrot.lane.b32.xlu0 %v895, 8
        %v902 = vpop.permute.xlu0 %901
        %vm904 = vcmask 130112
        %905 = vst.msk [vmem:[#allocation2] sm:$0xff] %vm904, %v902
        %906 = vrot.lane.b32.xlu0 %v791, 112
        %v907 = vpop.permute.xlu0 %906
        %908 = vrot.lane.b32.xlu0 %v671, 112
        %v909 = vpop.permute.xlu0 %908
        %v911 = vsel %vm681, %v907, 0
        %v914 = vsel %vm681, %v909, 0
        %916 = vmatprep.subr.bf16.mxu0 0
        %917 = vmatpush1.bf16.xpose.msra.mxu0 0
        %918 = vmatprep.subr.bf16.mxu0 0
        %919 = vmatpush1.bf16.xpose.msra.mxu0 0
        %920 = vmatprep.subr.bf16.mxu0 0
        %921 = vmatpush1.bf16.xpose.msra.mxu0 0
        %922 = vmatprep.subr.bf16.mxu0 0
        %923 = vmatpush1.bf16.xpose.msra.mxu0 0
        %924 = vmatprep.subr.bf16.mxu0 0
        %925 = vmatpush1.bf16.xpose.msra.mxu0 0
        %926 = vmatprep.subr.bf16.mxu0 0
        %927 = vmatpush1.bf16.xpose.msra.mxu0 0
        %928 = vmatprep.subr.bf16.mxu0 0
        %929 = vmatpush1.bf16.xpose.msra.mxu0 0
        %930 = vmatprep.subr.bf16.mxu0 0
        %931 = vmatpush1.bf16.xpose.msra.mxu0 %v914
        %932 = vmatprep.subr.bf16.mxu0 0
        %933 = vmatpush2.bf16.xpose.msra.mxu0 0
        %934 = vmatprep.subr.bf16.mxu0 0
        %935 = vmatpush2.bf16.xpose.msra.mxu0 0
        %936 = vmatprep.subr.bf16.mxu0 0
        %937 = vmatpush2.bf16.xpose.msra.mxu0 0
        %938 = vmatprep.subr.bf16.mxu0 0
        %939 = vmatpush2.bf16.xpose.msra.mxu0 0
        %940 = vmatprep.subr.bf16.mxu0 0
        %941 = vmatpush2.bf16.xpose.msra.mxu0 0
        %942 = vmatprep.subr.bf16.mxu0 0
        %943 = vmatpush2.bf16.xpose.msra.mxu0 0
        %944 = vmatprep.subr.bf16.mxu0 0
        %945 = vmatpush2.bf16.xpose.msra.mxu0 0
        %946 = vmatprep.subr.bf16.mxu0 0
        %947 = vmatpush2.bf16.xpose.msra.mxu0 0
        %948 = vmatprep.mubr.bf16.mxu0 0
        %949 = vmatmul.mubr.bf16.gmra.mxu0 %v911
        %v950 = vpop.f32.mrf.mxu0
        %v951 = vadd.f32 %v679, %v950
        %v952 = vpop.f32.mrf.mxu0
        %v953 = vpop.f32.mrf.mxu0
        %v954 = vpop.f32.mrf.mxu0
        %955 = vdwg.mxu0
        %v956 = vsel %vm728, %v951, -inf
        %957 = vmax.xlane.f32.xlu0 %v956
        %v958 = vpop.xlane.xlu0 %957
        %v959 = vsub.f32 %v951, %v958
        %v960 = vmul.f32 %v959, 1.442695
        %v961 = vpow.pop %v960
        %v962 = vsel %vm728, %v961, 0.0
        %963 = vadd.xlane.f32.xlu0 %v962
        %v964 = vpop.xlane.xlu0 %963
        %v965 = vrcp.pop %v964
        %v966 = vmul.f32 %v961, %v965
        %v967 = vpack.c.bf16 %v966, %v966
        %968 = vrot.lane.b32.xlu0 %v671, 80
        %v969 = vpop.permute.xlu0 %968
        %v972 = vsel %vm728, %v967, 0
        %974 = vmatprep.subr.bf16.mxu0 0
        %975 = vmatpush1.bf16.msra.mxu0 0
        %976 = vmatprep.subr.bf16.mxu0 0
        %977 = vmatpush1.bf16.msra.mxu0 0
        %978 = vmatprep.subr.bf16.mxu0 0
        %979 = vmatpush1.bf16.msra.mxu0 0
        %980 = vmatprep.subr.bf16.mxu0 0
        %981 = vmatpush1.bf16.msra.mxu0 0
        %982 = vmatprep.subr.bf16.mxu0 0
        %983 = vmatpush1.bf16.msra.mxu0 0
        %984 = vmatprep.subr.bf16.mxu0 0
        %985 = vmatpush1.bf16.msra.mxu0 0
        %986 = vmatprep.subr.bf16.mxu0 0
        %987 = vmatpush1.bf16.msra.mxu0 0
        %988 = vmatprep.subr.bf16.mxu0 0
        %989 = vmatpush1.bf16.msra.mxu0 %v969
        %990 = vmatprep.subr.bf16.mxu0 0
        %991 = vmatpush2.bf16.msra.mxu0 0
        %992 = vmatprep.subr.bf16.mxu0 0
        %993 = vmatpush2.bf16.msra.mxu0 0
        %994 = vmatprep.subr.bf16.mxu0 0
        %995 = vmatpush2.bf16.msra.mxu0 0
        %996 = vmatprep.subr.bf16.mxu0 0
        %997 = vmatpush2.bf16.msra.mxu0 0
        %998 = vmatprep.subr.bf16.mxu0 0
        %999 = vmatpush2.bf16.msra.mxu0 0
        %1000 = vmatprep.subr.bf16.mxu0 0
        %1001 = vmatpush2.bf16.msra.mxu0 0
        %1002 = vmatprep.subr.bf16.mxu0 0
        %1003 = vmatpush2.bf16.msra.mxu0 0
        %1004 = vmatprep.subr.bf16.mxu0 0
        %1005 = vmatpush2.bf16.msra.mxu0 0
        %1006 = vmatprep.mubr.bf16.mxu0 0
        %1007 = vmatmul.mubr.bf16.gmra.mxu0 %v972
        %v1008 = vpop.f32.mrf.mxu0
        %v1009 = vadd.f32 0.0, %v1008
        %v1010 = vpop.f32.mrf.mxu0
        %v1011 = vpop.f32.mrf.mxu0
        %v1012 = vpop.f32.mrf.mxu0
        %1013 = vdwg.mxu0
        %1015 = vrot.lane.b32.xlu0 %v1009, 16
        %v1016 = vpop.permute.xlu0 %1015
        %vm1018 = vcmask 195712
        %1019 = vst.msk [vmem:[#allocation2] sm:$0xff] %vm1018, %v1016
        %1020 = vrot.lane.b32.xlu0 %v791, 104
        %v1021 = vpop.permute.xlu0 %1020
        %1022 = vrot.lane.b32.xlu0 %v671, 104
        %v1023 = vpop.permute.xlu0 %1022
        %v1025 = vsel %vm681, %v1021, 0
        %v1028 = vsel %vm681, %v1023, 0
        %1030 = vmatprep.subr.bf16.mxu0 0
        %1031 = vmatpush1.bf16.xpose.msra.mxu0 0
        %1032 = vmatprep.subr.bf16.mxu0 0
        %1033 = vmatpush1.bf16.xpose.msra.mxu0 0
        %1034 = vmatprep.subr.bf16.mxu0 0
        %1035 = vmatpush1.bf16.xpose.msra.mxu0 0
        %1036 = vmatprep.subr.bf16.mxu0 0
        %1037 = vmatpush1.bf16.xpose.msra.mxu0 0
        %1038 = vmatprep.subr.bf16.mxu0 0
        %1039 = vmatpush1.bf16.xpose.msra.mxu0 0
        %1040 = vmatprep.subr.bf16.mxu0 0
        %1041 = vmatpush1.bf16.xpose.msra.mxu0 0
        %1042 = vmatprep.subr.bf16.mxu0 0
        %1043 = vmatpush1.bf16.xpose.msra.mxu0 0
        %1044 = vmatprep.subr.bf16.mxu0 0
        %1045 = vmatpush1.bf16.xpose.msra.mxu0 %v1028
        %1046 = vmatprep.subr.bf16.mxu0 0
        %1047 = vmatpush2.bf16.xpose.msra.mxu0 0
        %1048 = vmatprep.subr.bf16.mxu0 0
        %1049 = vmatpush2.bf16.xpose.msra.mxu0 0
        %1050 = vmatprep.subr.bf16.mxu0 0
        %1051 = vmatpush2.bf16.xpose.msra.mxu0 0
        %1052 = vmatprep.subr.bf16.mxu0 0
        %1053 = vmatpush2.bf16.xpose.msra.mxu0 0
        %1054 = vmatprep.subr.bf16.mxu0 0
        %1055 = vmatpush2.bf16.xpose.msra.mxu0 0
        %1056 = vmatprep.subr.bf16.mxu0 0
        %1057 = vmatpush2.bf16.xpose.msra.mxu0 0
        %1058 = vmatprep.subr.bf16.mxu0 0
        %1059 = vmatpush2.bf16.xpose.msra.mxu0 0
        %1060 = vmatprep.subr.bf16.mxu0 0
        %1061 = vmatpush2.bf16.xpose.msra.mxu0 0
        %1062 = vmatprep.mubr.bf16.mxu0 0
        %1063 = vmatmul.mubr.bf16.gmra.mxu0 %v1025
        %v1064 = vpop.f32.mrf.mxu0
        %v1065 = vadd.f32 %v679, %v1064
        %v1066 = vpop.f32.mrf.mxu0
        %v1067 = vpop.f32.mrf.mxu0
        %v1068 = vpop.f32.mrf.mxu0
        %1069 = vdwg.mxu0
        %v1070 = vsel %vm728, %v1065, -inf
        %1071 = vmax.xlane.f32.xlu0 %v1070
        %v1072 = vpop.xlane.xlu0 %1071
        %v1073 = vsub.f32 %v1065, %v1072
        %v1074 = vmul.f32 %v1073, 1.442695
        %v1075 = vpow.pop %v1074
        %v1076 = vsel %vm728, %v1075, 0.0
        %1077 = vadd.xlane.f32.xlu0 %v1076
        %v1078 = vpop.xlane.xlu0 %1077
        %v1079 = vrcp.pop %v1078
        %v1080 = vmul.f32 %v1075, %v1079
        %v1081 = vpack.c.bf16 %v1080, %v1080
        %1082 = vrot.lane.b32.xlu0 %v671, 72
        %v1083 = vpop.permute.xlu0 %1082
        %v1086 = vsel %vm728, %v1081, 0
        %1088 = vmatprep.subr.bf16.mxu0 0
        %1089 = vmatpush1.bf16.msra.mxu0 0
        %1090 = vmatprep.subr.bf16.mxu0 0
        %1091 = vmatpush1.bf16.msra.mxu0 0
        %1092 = vmatprep.subr.bf16.mxu0 0
        %1093 = vmatpush1.bf16.msra.mxu0 0
        %1094 = vmatprep.subr.bf16.mxu0 0
        %1095 = vmatpush1.bf16.msra.mxu0 0
        %1096 = vmatprep.subr.bf16.mxu0 0
        %1097 = vmatpush1.bf16.msra.mxu0 0
        %1098 = vmatprep.subr.bf16.mxu0 0
        %1099 = vmatpush1.bf16.msra.mxu0 0
        %1100 = vmatprep.subr.bf16.mxu0 0
        %1101 = vmatpush1.bf16.msra.mxu0 0
        %1102 = vmatprep.subr.bf16.mxu0 0
        %1103 = vmatpush1.bf16.msra.mxu0 %v1083
        %1104 = vmatprep.subr.bf16.mxu0 0
        %1105 = vmatpush2.bf16.msra.mxu0 0
        %1106 = vmatprep.subr.bf16.mxu0 0
        %1107 = vmatpush2.bf16.msra.mxu0 0
        %1108 = vmatprep.subr.bf16.mxu0 0
        %1109 = vmatpush2.bf16.msra.mxu0 0
        %1110 = vmatprep.subr.bf16.mxu0 0
        %1111 = vmatpush2.bf16.msra.mxu0 0
        %1112 = vmatprep.subr.bf16.mxu0 0
        %1113 = vmatpush2.bf16.msra.mxu0 0
        %1114 = vmatprep.subr.bf16.mxu0 0
        %1115 = vmatpush2.bf16.msra.mxu0 0
        %1116 = vmatprep.subr.bf16.mxu0 0
        %1117 = vmatpush2.bf16.msra.mxu0 0
        %1118 = vmatprep.subr.bf16.mxu0 0
        %1119 = vmatpush2.bf16.msra.mxu0 0
        %1120 = vmatprep.mubr.bf16.mxu0 0
        %1121 = vmatmul.mubr.bf16.gmra.mxu0 %v1086
        %v1122 = vpop.f32.mrf.mxu0
        %v1123 = vadd.f32 0.0, %v1122
        %v1124 = vpop.f32.mrf.mxu0
        %v1125 = vpop.f32.mrf.mxu0
        %v1126 = vpop.f32.mrf.mxu0
        %1127 = vdwg.mxu0
        %1129 = vrot.lane.b32.xlu0 %v1123, 24
        %v1130 = vpop.permute.xlu0 %1129
        %vm1132 = vcmask 261312
        %1133 = vst.msk [vmem:[#allocation2] sm:$0xff] %vm1132, %v1130
        %v1134 = vld [vmem:[#allocation2] sm:$0xff]
        %v1135 = vpack.c.bf16 %v1134, %v1134
        %v1137 = vlaneseq
        %v1138 = vshrl.u32 %v1137, 7
        %v1139 = vsub.s32 0, %v1138
        %v1140 = vrot.slane %v604, %v1139
        %v1146 = vunpack.c.l.b16 %v600
        %v1147 = vunpack.c.l.b16 %v601
        %v1148 = vunpack.c.l.b16 %v602
        %v1149 = vunpack.c.l.b16 %v603
        %v1150 = vpack.c.b16 %v1147, %v1146
        %v1151 = vpack.c.b16 %v1149, %v1148
        %v1155 = vsel %vm626, %v1135, 0
        %1157 = vmatprep.subr.bf16.mxu0 0
        %1158 = vmatpush1.bf16.msra.mxu0 0
        %1159 = vmatprep.subr.bf16.mxu0 0
        %1160 = vmatpush1.bf16.msra.mxu0 0
        %1161 = vmatprep.subr.bf16.mxu0 0
        %1162 = vmatpush1.bf16.msra.mxu0 0
        %1163 = vmatprep.subr.bf16.mxu0 0
        %1164 = vmatpush1.bf16.msra.mxu0 0
        %1165 = vmatprep.subr.bf16.mxu0 0
        %1166 = vmatpush1.bf16.msra.mxu0 0
        %1167 = vmatprep.subr.bf16.mxu0 0
        %1168 = vmatpush1.bf16.msra.mxu0 0
        %1169 = vmatprep.subr.bf16.mxu0 0
        %1170 = vmatpush1.bf16.msra.mxu0 %v1151
        %1171 = vmatprep.subr.bf16.mxu0 0
        %1172 = vmatpush1.bf16.msra.mxu0 %v1150
        %1173 = vmatprep.subr.bf16.mxu0 0
        %1174 = vmatpush2.bf16.msra.mxu0 0
        %1175 = vmatprep.subr.bf16.mxu0 0
        %1176 = vmatpush2.bf16.msra.mxu0 0
        %1177 = vmatprep.subr.bf16.mxu0 0
        %1178 = vmatpush2.bf16.msra.mxu0 0
        %1179 = vmatprep.subr.bf16.mxu0 0
        %1180 = vmatpush2.bf16.msra.mxu0 0
        %1181 = vmatprep.subr.bf16.mxu0 0
        %1182 = vmatpush2.bf16.msra.mxu0 0
        %1183 = vmatprep.subr.bf16.mxu0 0
        %1184 = vmatpush2.bf16.msra.mxu0 0
        %1185 = vmatprep.subr.bf16.mxu0 0
        %1186 = vmatpush2.bf16.msra.mxu0 0
        %1187 = vmatprep.subr.bf16.mxu0 0
        %1188 = vmatpush2.bf16.msra.mxu0 0
        %1189 = vmatprep.mubr.bf16.mxu0 0
        %1190 = vmatmul.mubr.bf16.gmra.mxu0 %v1155
        %v1191 = vpop.f32.mrf.mxu0
        %v1192 = vadd.f32 %v1140, %v1191
        %v1193 = vpop.f32.mrf.mxu0
        %v1194 = vpop.f32.mrf.mxu0
        %v1195 = vpop.f32.mrf.mxu0
        %1196 = vdwg.mxu0
        %1197 = vst.msk [vmem:[%s552] sm:$0xff] %vm626, %v1192
        %v1198 = vld [vmem:[%s578] sm:$0xff]
        %v1199 = vpack.c.bf16 %v1198, %v1198
        %v1201 = vsel %vm626, %v1199, 0
        %1203 = vmatprep.subr.bf16.mxu0 0
        %1204 = vmatpush1.bf16.msra.mxu0 0
        %1205 = vmatprep.subr.bf16.mxu0 0
        %1206 = vmatpush1.bf16.msra.mxu0 0
        %1207 = vmatprep.subr.bf16.mxu0 0
        %1208 = vmatpush1.bf16.msra.mxu0 0
        %1209 = vmatprep.subr.bf16.mxu0 0
        %1210 = vmatpush1.bf16.msra.mxu0 0
        %1211 = vmatprep.subr.bf16.mxu0 0
        %1212 = vmatpush1.bf16.msra.mxu0 0
        %1213 = vmatprep.subr.bf16.mxu0 0
        %1214 = vmatpush1.bf16.msra.mxu0 0
        %1215 = vmatprep.subr.bf16.mxu0 0
        %1216 = vmatpush1.bf16.msra.mxu0 %v623
        %1217 = vmatprep.subr.bf16.mxu0 0
        %1218 = vmatpush1.bf16.msra.mxu0 %v622
        %1219 = vmatprep.subr.bf16.mxu0 0
        %1220 = vmatpush2.bf16.msra.mxu0 0
        %1221 = vmatprep.subr.bf16.mxu0 0
        %1222 = vmatpush2.bf16.msra.mxu0 0
        %1223 = vmatprep.subr.bf16.mxu0 0
        %1224 = vmatpush2.bf16.msra.mxu0 0
        %1225 = vmatprep.subr.bf16.mxu0 0
        %1226 = vmatpush2.bf16.msra.mxu0 0
        %1227 = vmatprep.subr.bf16.mxu0 0
        %1228 = vmatpush2.bf16.msra.mxu0 0
        %1229 = vmatprep.subr.bf16.mxu0 0
        %1230 = vmatpush2.bf16.msra.mxu0 0
        %1231 = vmatprep.subr.bf16.mxu0 0
        %1232 = vmatpush2.bf16.msra.mxu0 0
        %1233 = vmatprep.subr.bf16.mxu0 0
        %1234 = vmatpush2.bf16.msra.mxu0 0
        %1235 = vmatprep.mubr.bf16.mxu0 0
        %1236 = vmatmul.mubr.bf16.gmra.mxu0 %v1201
        %v1237 = vpop.f32.mrf.mxu0
        %v1238 = vadd.f32 %v612, %v1237
        %v1239 = vpop.f32.mrf.mxu0
        %v1240 = vpop.f32.mrf.mxu0
        %v1241 = vpop.f32.mrf.mxu0
        %1242 = vdwg.mxu0
        %v1243 = vpack.c.bf16 %v1238, %v1238
        %v1244 = vld [vmem:[%s584] sm:$0x1]
        %vm1245 = vcmp.gt.s32.totalorder %v1244, 0
        %v1246 = vsel %vm1245, -1e+18, 0.0
        %v1248 = vlaneseq
        %v1249 = vshrl.u32 %v1248, 7
        %v1250 = vsub.s32 0, %v1249
        %v1251 = vrot.slane %v1246, %v1250
        %v1254 = vsel %vm681, %v1243, 0
        %1256 = vmatprep.subr.bf16.mxu0 0
        %1257 = vmatpush1.bf16.xpose.msra.mxu0 0
        %1258 = vmatprep.subr.bf16.mxu0 0
        %1259 = vmatpush1.bf16.xpose.msra.mxu0 0
        %1260 = vmatprep.subr.bf16.mxu0 0
        %1261 = vmatpush1.bf16.xpose.msra.mxu0 0
        %1262 = vmatprep.subr.bf16.mxu0 0
        %1263 = vmatpush1.bf16.xpose.msra.mxu0 0
        %1264 = vmatprep.subr.bf16.mxu0 0
        %1265 = vmatpush1.bf16.xpose.msra.mxu0 0
        %1266 = vmatprep.subr.bf16.mxu0 0
        %1267 = vmatpush1.bf16.xpose.msra.mxu0 0
        %1268 = vmatprep.subr.bf16.mxu0 0
        %1269 = vmatpush1.bf16.xpose.msra.mxu0 0
        %1270 = vmatprep.subr.bf16.mxu0 0
        %1271 = vmatpush1.bf16.xpose.msra.mxu0 %v1254
        %1272 = vmatprep.subr.bf16.mxu0 0
        %1273 = vmatpush2.bf16.xpose.msra.mxu0 0
        %1274 = vmatprep.subr.bf16.mxu0 0
        %1275 = vmatpush2.bf16.xpose.msra.mxu0 0
        %1276 = vmatprep.subr.bf16.mxu0 0
        %1277 = vmatpush2.bf16.xpose.msra.mxu0 0
        %1278 = vmatprep.subr.bf16.mxu0 0
        %1279 = vmatpush2.bf16.xpose.msra.mxu0 0
        %1280 = vmatprep.subr.bf16.mxu0 0
        %1281 = vmatpush2.bf16.xpose.msra.mxu0 0
        %1282 = vmatprep.subr.bf16.mxu0 0
        %1283 = vmatpush2.bf16.xpose.msra.mxu0 0
        %1284 = vmatprep.subr.bf16.mxu0 0
        %1285 = vmatpush2.bf16.xpose.msra.mxu0 0
        %1286 = vmatprep.subr.bf16.mxu0 0
        %1287 = vmatpush2.bf16.xpose.msra.mxu0 0
        %1288 = vmatprep.mubr.bf16.mxu0 0
        %1289 = vmatmul.mubr.bf16.gmra.mxu0 %v683
        %v1290 = vpop.f32.mrf.mxu0
        %v1291 = vadd.f32 %v1251, %v1290
        %v1292 = vpop.f32.mrf.mxu0
        %v1293 = vpop.f32.mrf.mxu0
        %v1294 = vpop.f32.mrf.mxu0
        %1295 = vdwg.mxu0
        %v1296 = vsel %vm681, %v1291, -inf
        %1297 = vmax.xlane.f32.xlu0 %v1296
        %v1298 = vpop.xlane.xlu0 %1297
        %v1299 = vsub.f32 %v1291, %v1298
        %v1300 = vmul.f32 %v1299, 1.442695
        %v1301 = vpow.pop %v1300
        %v1302 = vsel %vm681, %v1301, 0.0
        %1303 = vadd.xlane.f32.xlu0 %v1302
        %v1304 = vpop.xlane.xlu0 %1303
        %v1305 = vrcp.pop %v1304
        %v1306 = vmul.f32 %v1301, %v1305
        %v1307 = vpack.c.bf16 %v1306, %v1306
        %1309 = vrot.lane.b32.xlu0 %v1243, 96
        %v1310 = vpop.permute.xlu0 %1309
        %v1312 = vsel %vm681, %v1307, 0
        %vm1314 = vcmask 1043456
        %v1316 = vsel %vm1314, %v1310, 0
        %1318 = vmatprep.subr.bf16.mxu0 0
        %1319 = vmatpush1.bf16.msra.mxu0 0
        %1320 = vmatprep.subr.bf16.mxu0 0
        %1321 = vmatpush1.bf16.msra.mxu0 0
        %1322 = vmatprep.subr.bf16.mxu0 0
        %1323 = vmatpush1.bf16.msra.mxu0 0
        %1324 = vmatprep.subr.bf16.mxu0 0
        %1325 = vmatpush1.bf16.msra.mxu0 0
        %1326 = vmatprep.subr.bf16.mxu0 0
        %1327 = vmatpush1.bf16.msra.mxu0 0
        %1328 = vmatprep.subr.bf16.mxu0 0
        %1329 = vmatpush1.bf16.msra.mxu0 0
        %1330 = vmatprep.subr.bf16.mxu0 0
        %1331 = vmatpush1.bf16.msra.mxu0 0
        %1332 = vmatprep.subr.bf16.mxu0 0
        %1333 = vmatpush1.bf16.msra.mxu0 %v1316
        %1334 = vmatprep.subr.bf16.mxu0 0
        %1335 = vmatpush2.bf16.msra.mxu0 0
        %1336 = vmatprep.subr.bf16.mxu0 0
        %1337 = vmatpush2.bf16.msra.mxu0 0
        %1338 = vmatprep.subr.bf16.mxu0 0
        %1339 = vmatpush2.bf16.msra.mxu0 0
        %1340 = vmatprep.subr.bf16.mxu0 0
        %1341 = vmatpush2.bf16.msra.mxu0 0
        %1342 = vmatprep.subr.bf16.mxu0 0
        %1343 = vmatpush2.bf16.msra.mxu0 0
        %1344 = vmatprep.subr.bf16.mxu0 0
        %1345 = vmatpush2.bf16.msra.mxu0 0
        %1346 = vmatprep.subr.bf16.mxu0 0
        %1347 = vmatpush2.bf16.msra.mxu0 0
        %1348 = vmatprep.subr.bf16.mxu0 0
        %1349 = vmatpush2.bf16.msra.mxu0 0
        %1350 = vmatprep.mubr.bf16.mxu0 0
        %1351 = vmatmul.mubr.bf16.gmra.mxu0 %v1312
        %v1352 = vpop.f32.mrf.mxu0
        %v1353 = vadd.f32 0.0, %v1352
        %v1354 = vpop.f32.mrf.mxu0
        %v1355 = vpop.f32.mrf.mxu0
        %v1356 = vpop.f32.mrf.mxu0
        %1357 = vdwg.mxu0
        %1358 = vst.msk [vmem:[#allocation2] sm:$0xff] %vm681, %v1353
        %1359 = vrot.lane.b32.xlu0 %v1243, 120
        %v1360 = vpop.permute.xlu0 %1359
        %v1362 = vsel %vm681, %v1360, 0
        %1364 = vmatprep.subr.bf16.mxu0 0
        %1365 = vmatpush1.bf16.xpose.msra.mxu0 0
        %1366 = vmatprep.subr.bf16.mxu0 0
        %1367 = vmatpush1.bf16.xpose.msra.mxu0 0
        %1368 = vmatprep.subr.bf16.mxu0 0
        %1369 = vmatpush1.bf16.xpose.msra.mxu0 0
        %1370 = vmatprep.subr.bf16.mxu0 0
        %1371 = vmatpush1.bf16.xpose.msra.mxu0 0
        %1372 = vmatprep.subr.bf16.mxu0 0
        %1373 = vmatpush1.bf16.xpose.msra.mxu0 0
        %1374 = vmatprep.subr.bf16.mxu0 0
        %1375 = vmatpush1.bf16.xpose.msra.mxu0 0
        %1376 = vmatprep.subr.bf16.mxu0 0
        %1377 = vmatpush1.bf16.xpose.msra.mxu0 0
        %1378 = vmatprep.subr.bf16.mxu0 0
        %1379 = vmatpush1.bf16.xpose.msra.mxu0 %v1362
        %1380 = vmatprep.subr.bf16.mxu0 0
        %1381 = vmatpush2.bf16.xpose.msra.mxu0 0
        %1382 = vmatprep.subr.bf16.mxu0 0
        %1383 = vmatpush2.bf16.xpose.msra.mxu0 0
        %1384 = vmatprep.subr.bf16.mxu0 0
        %1385 = vmatpush2.bf16.xpose.msra.mxu0 0
        %1386 = vmatprep.subr.bf16.mxu0 0
        %1387 = vmatpush2.bf16.xpose.msra.mxu0 0
        %1388 = vmatprep.subr.bf16.mxu0 0
        %1389 = vmatpush2.bf16.xpose.msra.mxu0 0
        %1390 = vmatprep.subr.bf16.mxu0 0
        %1391 = vmatpush2.bf16.xpose.msra.mxu0 0
        %1392 = vmatprep.subr.bf16.mxu0 0
        %1393 = vmatpush2.bf16.xpose.msra.mxu0 0
        %1394 = vmatprep.subr.bf16.mxu0 0
        %1395 = vmatpush2.bf16.xpose.msra.mxu0 0
        %1396 = vmatprep.mubr.bf16.mxu0 0
        %1397 = vmatmul.mubr.bf16.gmra.mxu0 %v797
        %v1398 = vpop.f32.mrf.mxu0
        %v1399 = vadd.f32 %v1251, %v1398
        %v1400 = vpop.f32.mrf.mxu0
        %v1401 = vpop.f32.mrf.mxu0
        %v1402 = vpop.f32.mrf.mxu0
        %1403 = vdwg.mxu0
        %v1404 = vsel %vm681, %v1399, -inf
        %1405 = vmax.xlane.f32.xlu0 %v1404
        %v1406 = vpop.xlane.xlu0 %1405
        %v1407 = vsub.f32 %v1399, %v1406
        %v1408 = vmul.f32 %v1407, 1.442695
        %v1409 = vpow.pop %v1408
        %v1410 = vsel %vm681, %v1409, 0.0
        %1411 = vadd.xlane.f32.xlu0 %v1410
        %v1412 = vpop.xlane.xlu0 %1411
        %v1413 = vrcp.pop %v1412
        %v1414 = vmul.f32 %v1409, %v1413
        %v1415 = vpack.c.bf16 %v1414, %v1414
        %1416 = vrot.lane.b32.xlu0 %v1243, 88
        %v1417 = vpop.permute.xlu0 %1416
        %v1419 = vsel %vm681, %v1415, 0
        %v1422 = vsel %vm1314, %v1417, 0
        %1424 = vmatprep.subr.bf16.mxu0 0
        %1425 = vmatpush1.bf16.msra.mxu0 0
        %1426 = vmatprep.subr.bf16.mxu0 0
        %1427 = vmatpush1.bf16.msra.mxu0 0
        %1428 = vmatprep.subr.bf16.mxu0 0
        %1429 = vmatpush1.bf16.msra.mxu0 0
        %1430 = vmatprep.subr.bf16.mxu0 0
        %1431 = vmatpush1.bf16.msra.mxu0 0
        %1432 = vmatprep.subr.bf16.mxu0 0
        %1433 = vmatpush1.bf16.msra.mxu0 0
        %1434 = vmatprep.subr.bf16.mxu0 0
        %1435 = vmatpush1.bf16.msra.mxu0 0
        %1436 = vmatprep.subr.bf16.mxu0 0
        %1437 = vmatpush1.bf16.msra.mxu0 0
        %1438 = vmatprep.subr.bf16.mxu0 0
        %1439 = vmatpush1.bf16.msra.mxu0 %v1422
        %1440 = vmatprep.subr.bf16.mxu0 0
        %1441 = vmatpush2.bf16.msra.mxu0 0
        %1442 = vmatprep.subr.bf16.mxu0 0
        %1443 = vmatpush2.bf16.msra.mxu0 0
        %1444 = vmatprep.subr.bf16.mxu0 0
        %1445 = vmatpush2.bf16.msra.mxu0 0
        %1446 = vmatprep.subr.bf16.mxu0 0
        %1447 = vmatpush2.bf16.msra.mxu0 0
        %1448 = vmatprep.subr.bf16.mxu0 0
        %1449 = vmatpush2.bf16.msra.mxu0 0
        %1450 = vmatprep.subr.bf16.mxu0 0
        %1451 = vmatpush2.bf16.msra.mxu0 0
        %1452 = vmatprep.subr.bf16.mxu0 0
        %1453 = vmatpush2.bf16.msra.mxu0 0
        %1454 = vmatprep.subr.bf16.mxu0 0
        %1455 = vmatpush2.bf16.msra.mxu0 0
        %1456 = vmatprep.mubr.bf16.mxu0 0
        %1457 = vmatmul.mubr.bf16.gmra.mxu0 %v1419
        %v1458 = vpop.f32.mrf.mxu0
        %v1459 = vadd.f32 0.0, %v1458
        %v1460 = vpop.f32.mrf.mxu0
        %v1461 = vpop.f32.mrf.mxu0
        %v1462 = vpop.f32.mrf.mxu0
        %1463 = vdwg.mxu0
        %1465 = vrot.lane.b32.xlu0 %v1459, 8
        %v1466 = vpop.permute.xlu0 %1465
        %1468 = vst.msk [vmem:[#allocation2] sm:$0xff] %vm904, %v1466
        %1469 = vrot.lane.b32.xlu0 %v1243, 112
        %v1470 = vpop.permute.xlu0 %1469
        %v1472 = vsel %vm681, %v1470, 0
        %1474 = vmatprep.subr.bf16.mxu0 0
        %1475 = vmatpush1.bf16.xpose.msra.mxu0 0
        %1476 = vmatprep.subr.bf16.mxu0 0
        %1477 = vmatpush1.bf16.xpose.msra.mxu0 0
        %1478 = vmatprep.subr.bf16.mxu0 0
        %1479 = vmatpush1.bf16.xpose.msra.mxu0 0
        %1480 = vmatprep.subr.bf16.mxu0 0
        %1481 = vmatpush1.bf16.xpose.msra.mxu0 0
        %1482 = vmatprep.subr.bf16.mxu0 0
        %1483 = vmatpush1.bf16.xpose.msra.mxu0 0
        %1484 = vmatprep.subr.bf16.mxu0 0
        %1485 = vmatpush1.bf16.xpose.msra.mxu0 0
        %1486 = vmatprep.subr.bf16.mxu0 0
        %1487 = vmatpush1.bf16.xpose.msra.mxu0 0
        %1488 = vmatprep.subr.bf16.mxu0 0
        %1489 = vmatpush1.bf16.xpose.msra.mxu0 %v1472
        %1490 = vmatprep.subr.bf16.mxu0 0
        %1491 = vmatpush2.bf16.xpose.msra.mxu0 0
        %1492 = vmatprep.subr.bf16.mxu0 0
        %1493 = vmatpush2.bf16.xpose.msra.mxu0 0
        %1494 = vmatprep.subr.bf16.mxu0 0
        %1495 = vmatpush2.bf16.xpose.msra.mxu0 0
        %1496 = vmatprep.subr.bf16.mxu0 0
        %1497 = vmatpush2.bf16.xpose.msra.mxu0 0
        %1498 = vmatprep.subr.bf16.mxu0 0
        %1499 = vmatpush2.bf16.xpose.msra.mxu0 0
        %1500 = vmatprep.subr.bf16.mxu0 0
        %1501 = vmatpush2.bf16.xpose.msra.mxu0 0
        %1502 = vmatprep.subr.bf16.mxu0 0
        %1503 = vmatpush2.bf16.xpose.msra.mxu0 0
        %1504 = vmatprep.subr.bf16.mxu0 0
        %1505 = vmatpush2.bf16.xpose.msra.mxu0 0
        %1506 = vmatprep.mubr.bf16.mxu0 0
        %1507 = vmatmul.mubr.bf16.gmra.mxu0 %v911
        %v1508 = vpop.f32.mrf.mxu0
        %v1509 = vadd.f32 %v1251, %v1508
        %v1510 = vpop.f32.mrf.mxu0
        %v1511 = vpop.f32.mrf.mxu0
        %v1512 = vpop.f32.mrf.mxu0
        %1513 = vdwg.mxu0
        %v1514 = vsel %vm681, %v1509, -inf
        %1515 = vmax.xlane.f32.xlu0 %v1514
        %v1516 = vpop.xlane.xlu0 %1515
        %v1517 = vsub.f32 %v1509, %v1516
        %v1518 = vmul.f32 %v1517, 1.442695
        %v1519 = vpow.pop %v1518
        %v1520 = vsel %vm681, %v1519, 0.0
        %1521 = vadd.xlane.f32.xlu0 %v1520
        %v1522 = vpop.xlane.xlu0 %1521
        %v1523 = vrcp.pop %v1522
        %v1524 = vmul.f32 %v1519, %v1523
        %v1525 = vpack.c.bf16 %v1524, %v1524
        %1526 = vrot.lane.b32.xlu0 %v1243, 80
        %v1527 = vpop.permute.xlu0 %1526
        %v1529 = vsel %vm681, %v1525, 0
        %v1532 = vsel %vm1314, %v1527, 0
        %1534 = vmatprep.subr.bf16.mxu0 0
        %1535 = vmatpush1.bf16.msra.mxu0 0
        %1536 = vmatprep.subr.bf16.mxu0 0
        %1537 = vmatpush1.bf16.msra.mxu0 0
        %1538 = vmatprep.subr.bf16.mxu0 0
        %1539 = vmatpush1.bf16.msra.mxu0 0
        %1540 = vmatprep.subr.bf16.mxu0 0
        %1541 = vmatpush1.bf16.msra.mxu0 0
        %1542 = vmatprep.subr.bf16.mxu0 0
        %1543 = vmatpush1.bf16.msra.mxu0 0
        %1544 = vmatprep.subr.bf16.mxu0 0
        %1545 = vmatpush1.bf16.msra.mxu0 0
        %1546 = vmatprep.subr.bf16.mxu0 0
        %1547 = vmatpush1.bf16.msra.mxu0 0
        %1548 = vmatprep.subr.bf16.mxu0 0
        %1549 = vmatpush1.bf16.msra.mxu0 %v1532
        %1550 = vmatprep.subr.bf16.mxu0 0
        %1551 = vmatpush2.bf16.msra.mxu0 0
        %1552 = vmatprep.subr.bf16.mxu0 0
        %1553 = vmatpush2.bf16.msra.mxu0 0
        %1554 = vmatprep.subr.bf16.mxu0 0
        %1555 = vmatpush2.bf16.msra.mxu0 0
        %1556 = vmatprep.subr.bf16.mxu0 0
        %1557 = vmatpush2.bf16.msra.mxu0 0
        %1558 = vmatprep.subr.bf16.mxu0 0
        %1559 = vmatpush2.bf16.msra.mxu0 0
        %1560 = vmatprep.subr.bf16.mxu0 0
        %1561 = vmatpush2.bf16.msra.mxu0 0
        %1562 = vmatprep.subr.bf16.mxu0 0
        %1563 = vmatpush2.bf16.msra.mxu0 0
        %1564 = vmatprep.subr.bf16.mxu0 0
        %1565 = vmatpush2.bf16.msra.mxu0 0
        %1566 = vmatprep.mubr.bf16.mxu0 0
        %1567 = vmatmul.mubr.bf16.gmra.mxu0 %v1529
        %v1568 = vpop.f32.mrf.mxu0
        %v1569 = vadd.f32 0.0, %v1568
        %v1570 = vpop.f32.mrf.mxu0
        %v1571 = vpop.f32.mrf.mxu0
        %v1572 = vpop.f32.mrf.mxu0
        %1573 = vdwg.mxu0
        %1575 = vrot.lane.b32.xlu0 %v1569, 16
        %v1576 = vpop.permute.xlu0 %1575
        %1578 = vst.msk [vmem:[#allocation2] sm:$0xff] %vm1018, %v1576
        %1579 = vrot.lane.b32.xlu0 %v1243, 104
        %v1580 = vpop.permute.xlu0 %1579
        %v1582 = vsel %vm681, %v1580, 0
        %1584 = vmatprep.subr.bf16.mxu0 0
        %1585 = vmatpush1.bf16.xpose.msra.mxu0 0
        %1586 = vmatprep.subr.bf16.mxu0 0
        %1587 = vmatpush1.bf16.xpose.msra.mxu0 0
        %1588 = vmatprep.subr.bf16.mxu0 0
        %1589 = vmatpush1.bf16.xpose.msra.mxu0 0
        %1590 = vmatprep.subr.bf16.mxu0 0
        %1591 = vmatpush1.bf16.xpose.msra.mxu0 0
        %1592 = vmatprep.subr.bf16.mxu0 0
        %1593 = vmatpush1.bf16.xpose.msra.mxu0 0
        %1594 = vmatprep.subr.bf16.mxu0 0
        %1595 = vmatpush1.bf16.xpose.msra.mxu0 0
        %1596 = vmatprep.subr.bf16.mxu0 0
        %1597 = vmatpush1.bf16.xpose.msra.mxu0 0
        %1598 = vmatprep.subr.bf16.mxu0 0
        %1599 = vmatpush1.bf16.xpose.msra.mxu0 %v1582
        %1600 = vmatprep.subr.bf16.mxu0 0
        %1601 = vmatpush2.bf16.xpose.msra.mxu0 0
        %1602 = vmatprep.subr.bf16.mxu0 0
        %1603 = vmatpush2.bf16.xpose.msra.mxu0 0
        %1604 = vmatprep.subr.bf16.mxu0 0
        %1605 = vmatpush2.bf16.xpose.msra.mxu0 0
        %1606 = vmatprep.subr.bf16.mxu0 0
        %1607 = vmatpush2.bf16.xpose.msra.mxu0 0
        %1608 = vmatprep.subr.bf16.mxu0 0
        %1609 = vmatpush2.bf16.xpose.msra.mxu0 0
        %1610 = vmatprep.subr.bf16.mxu0 0
        %1611 = vmatpush2.bf16.xpose.msra.mxu0 0
        %1612 = vmatprep.subr.bf16.mxu0 0
        %1613 = vmatpush2.bf16.xpose.msra.mxu0 0
        %1614 = vmatprep.subr.bf16.mxu0 0
        %1615 = vmatpush2.bf16.xpose.msra.mxu0 0
        %1616 = vmatprep.mubr.bf16.mxu0 0
        %1617 = vmatmul.mubr.bf16.gmra.mxu0 %v1025
        %v1618 = vpop.f32.mrf.mxu0
        %v1619 = vadd.f32 %v1251, %v1618
        %v1620 = vpop.f32.mrf.mxu0
        %v1621 = vpop.f32.mrf.mxu0
        %v1622 = vpop.f32.mrf.mxu0
        %1623 = vdwg.mxu0
        %v1624 = vsel %vm681, %v1619, -inf
        %1625 = vmax.xlane.f32.xlu0 %v1624
        %v1626 = vpop.xlane.xlu0 %1625
        %v1627 = vsub.f32 %v1619, %v1626
        %v1628 = vmul.f32 %v1627, 1.442695
        %v1629 = vpow.pop %v1628
        %v1630 = vsel %vm681, %v1629, 0.0
        %1631 = vadd.xlane.f32.xlu0 %v1630
        %v1632 = vpop.xlane.xlu0 %1631
        %v1633 = vrcp.pop %v1632
        %v1634 = vmul.f32 %v1629, %v1633
        %v1635 = vpack.c.bf16 %v1634, %v1634
        %1636 = vrot.lane.b32.xlu0 %v1243, 72
        %v1637 = vpop.permute.xlu0 %1636
        %v1639 = vsel %vm681, %v1635, 0
        %v1642 = vsel %vm1314, %v1637, 0
        %1644 = vmatprep.subr.bf16.mxu0 0
        %1645 = vmatpush1.bf16.msra.mxu0 0
        %1646 = vmatprep.subr.bf16.mxu0 0
        %1647 = vmatpush1.bf16.msra.mxu0 0
        %1648 = vmatprep.subr.bf16.mxu0 0
        %1649 = vmatpush1.bf16.msra.mxu0 0
        %1650 = vmatprep.subr.bf16.mxu0 0
        %1651 = vmatpush1.bf16.msra.mxu0 0
        %1652 = vmatprep.subr.bf16.mxu0 0
        %1653 = vmatpush1.bf16.msra.mxu0 0
        %1654 = vmatprep.subr.bf16.mxu0 0
        %1655 = vmatpush1.bf16.msra.mxu0 0
        %1656 = vmatprep.subr.bf16.mxu0 0
        %1657 = vmatpush1.bf16.msra.mxu0 0
        %1658 = vmatprep.subr.bf16.mxu0 0
        %1659 = vmatpush1.bf16.msra.mxu0 %v1642
        %1660 = vmatprep.subr.bf16.mxu0 0
        %1661 = vmatpush2.bf16.msra.mxu0 0
        %1662 = vmatprep.subr.bf16.mxu0 0
        %1663 = vmatpush2.bf16.msra.mxu0 0
        %1664 = vmatprep.subr.bf16.mxu0 0
        %1665 = vmatpush2.bf16.msra.mxu0 0
        %1666 = vmatprep.subr.bf16.mxu0 0
        %1667 = vmatpush2.bf16.msra.mxu0 0
        %1668 = vmatprep.subr.bf16.mxu0 0
        %1669 = vmatpush2.bf16.msra.mxu0 0
        %1670 = vmatprep.subr.bf16.mxu0 0
        %1671 = vmatpush2.bf16.msra.mxu0 0
        %1672 = vmatprep.subr.bf16.mxu0 0
        %1673 = vmatpush2.bf16.msra.mxu0 0
        %1674 = vmatprep.subr.bf16.mxu0 0
        %1675 = vmatpush2.bf16.msra.mxu0 0
        %1676 = vmatprep.mubr.bf16.mxu0 0
        %1677 = vmatmul.mubr.bf16.gmra.mxu0 %v1639
        %v1678 = vpop.f32.mrf.mxu0
        %v1679 = vadd.f32 0.0, %v1678
        %v1680 = vpop.f32.mrf.mxu0
        %v1681 = vpop.f32.mrf.mxu0
        %v1682 = vpop.f32.mrf.mxu0
        %1683 = vdwg.mxu0
        %1685 = vrot.lane.b32.xlu0 %v1679, 24
        %v1686 = vpop.permute.xlu0 %1685
        %1688 = vst.msk [vmem:[#allocation2] sm:$0xff] %vm1132, %v1686
        %v1689 = vld [vmem:[#allocation2] sm:$0xff]
        %v1690 = vpack.c.bf16 %v1689, %v1689
        %v1692 = vsel %vm626, %v1690, 0
        %1694 = vmatprep.subr.bf16.mxu0 0
        %1695 = vmatpush1.bf16.msra.mxu0 0
        %1696 = vmatprep.subr.bf16.mxu0 0
        %1697 = vmatpush1.bf16.msra.mxu0 0
        %1698 = vmatprep.subr.bf16.mxu0 0
        %1699 = vmatpush1.bf16.msra.mxu0 0
        %1700 = vmatprep.subr.bf16.mxu0 0
        %1701 = vmatpush1.bf16.msra.mxu0 0
        %1702 = vmatprep.subr.bf16.mxu0 0
        %1703 = vmatpush1.bf16.msra.mxu0 0
        %1704 = vmatprep.subr.bf16.mxu0 0
        %1705 = vmatpush1.bf16.msra.mxu0 0
        %1706 = vmatprep.subr.bf16.mxu0 0
        %1707 = vmatpush1.bf16.msra.mxu0 %v1151
        %1708 = vmatprep.subr.bf16.mxu0 0
        %1709 = vmatpush1.bf16.msra.mxu0 %v1150
        %1710 = vmatprep.subr.bf16.mxu0 0
        %1711 = vmatpush2.bf16.msra.mxu0 0
        %1712 = vmatprep.subr.bf16.mxu0 0
        %1713 = vmatpush2.bf16.msra.mxu0 0
        %1714 = vmatprep.subr.bf16.mxu0 0
        %1715 = vmatpush2.bf16.msra.mxu0 0
        %1716 = vmatprep.subr.bf16.mxu0 0
        %1717 = vmatpush2.bf16.msra.mxu0 0
        %1718 = vmatprep.subr.bf16.mxu0 0
        %1719 = vmatpush2.bf16.msra.mxu0 0
        %1720 = vmatprep.subr.bf16.mxu0 0
        %1721 = vmatpush2.bf16.msra.mxu0 0
        %1722 = vmatprep.subr.bf16.mxu0 0
        %1723 = vmatpush2.bf16.msra.mxu0 0
        %1724 = vmatprep.subr.bf16.mxu0 0
        %1725 = vmatpush2.bf16.msra.mxu0 0
        %1726 = vmatprep.mubr.bf16.mxu0 0
        %1727 = vmatmul.mubr.bf16.gmra.mxu0 %v1692
        %v1728 = vpop.f32.mrf.mxu0
        %v1729 = vadd.f32 %v1140, %v1728
        %v1730 = vpop.f32.mrf.mxu0
        %v1731 = vpop.f32.mrf.mxu0
        %v1732 = vpop.f32.mrf.mxu0
        %1733 = vdwg.mxu0
        %1734 = vst.msk [vmem:[%s559] sm:$0xff] %vm626, %v1729
        %v1735 = vpack.c.bf16 %v1192, %v1192
        %v1736 = vld [vmem:[%s10] sm:$0xf]
        %v1737 = vld [vmem:[%s10 + $0x4] sm:$0xf]
        %v1738 = vld [vmem:[%s10 + $0x8] sm:$0xf]
        %v1739 = vld [vmem:[%s10 + $0xc] sm:$0xf]
        %v1740 = vpack.c.bf16 %v1729, %v1729
        %v1741 = vld [vmem:[%s11] sm:$0xf]
        %v1742 = vld [vmem:[%s11 + $0x4] sm:$0xf]
        %v1743 = vld [vmem:[%s11 + $0x8] sm:$0xf]
        %v1744 = vld [vmem:[%s11 + $0xc] sm:$0xf]
        %v1749 = vunpack.c.l.b16 %v1741
        %v1750 = vunpack.c.l.b16 %v1742
        %v1751 = vunpack.c.l.b16 %v1743
        %v1752 = vunpack.c.l.b16 %v1744
        %v1753 = vpack.c.b16 %v1750, %v1749
        %v1754 = vpack.c.b16 %v1752, %v1751
        %v1758 = vsel %vm626, %v1740, 0
        %1760 = vmatprep.subr.bf16.mxu0 0
        %1761 = vmatpush1.bf16.msra.mxu0 0
        %1762 = vmatprep.subr.bf16.mxu0 0
        %1763 = vmatpush1.bf16.msra.mxu0 0
        %1764 = vmatprep.subr.bf16.mxu0 0
        %1765 = vmatpush1.bf16.msra.mxu0 0
        %1766 = vmatprep.subr.bf16.mxu0 0
        %1767 = vmatpush1.bf16.msra.mxu0 0
        %1768 = vmatprep.subr.bf16.mxu0 0
        %1769 = vmatpush1.bf16.msra.mxu0 0
        %1770 = vmatprep.subr.bf16.mxu0 0
        %1771 = vmatpush1.bf16.msra.mxu0 0
        %1772 = vmatprep.subr.bf16.mxu0 0
        %1773 = vmatpush1.bf16.msra.mxu0 %v1754
        %1774 = vmatprep.subr.bf16.mxu0 0
        %1775 = vmatpush1.bf16.msra.mxu0 %v1753
        %1776 = vmatprep.subr.bf16.mxu0 0
        %1777 = vmatpush2.bf16.msra.mxu0 0
        %1778 = vmatprep.subr.bf16.mxu0 0
        %1779 = vmatpush2.bf16.msra.mxu0 0
        %1780 = vmatprep.subr.bf16.mxu0 0
        %1781 = vmatpush2.bf16.msra.mxu0 0
        %1782 = vmatprep.subr.bf16.mxu0 0
        %1783 = vmatpush2.bf16.msra.mxu0 0
        %1784 = vmatprep.subr.bf16.mxu0 0
        %1785 = vmatpush2.bf16.msra.mxu0 0
        %1786 = vmatprep.subr.bf16.mxu0 0
        %1787 = vmatpush2.bf16.msra.mxu0 0
        %1788 = vmatprep.subr.bf16.mxu0 0
        %1789 = vmatpush2.bf16.msra.mxu0 0
        %1790 = vmatprep.subr.bf16.mxu0 0
        %1791 = vmatpush2.bf16.msra.mxu0 0
        %1792 = vmatprep.mubr.bf16.mxu0 0
        %1793 = vmatmul.mubr.bf16.gmra.mxu0 %v1758
        %v1794 = vpop.f32.mrf.mxu0
        %v1795 = vadd.f32 0.0, %v1794
        %v1796 = vpop.f32.mrf.mxu0
        %v1797 = vpop.f32.mrf.mxu0
        %v1798 = vpop.f32.mrf.mxu0
        %1799 = vdwg.mxu0
        %v1804 = vunpack.c.l.b16 %v1736
        %v1805 = vunpack.c.l.b16 %v1737
        %v1806 = vunpack.c.l.b16 %v1738
        %v1807 = vunpack.c.l.b16 %v1739
        %v1808 = vpack.c.b16 %v1805, %v1804
        %v1809 = vpack.c.b16 %v1807, %v1806
        %v1813 = vsel %vm626, %v1735, 0
        %1815 = vmatprep.subr.bf16.mxu0 0
        %1816 = vmatpush1.bf16.msra.mxu0 0
        %1817 = vmatprep.subr.bf16.mxu0 0
        %1818 = vmatpush1.bf16.msra.mxu0 0
        %1819 = vmatprep.subr.bf16.mxu0 0
        %1820 = vmatpush1.bf16.msra.mxu0 0
        %1821 = vmatprep.subr.bf16.mxu0 0
        %1822 = vmatpush1.bf16.msra.mxu0 0
        %1823 = vmatprep.subr.bf16.mxu0 0
        %1824 = vmatpush1.bf16.msra.mxu0 0
        %1825 = vmatprep.subr.bf16.mxu0 0
        %1826 = vmatpush1.bf16.msra.mxu0 0
        %1827 = vmatprep.subr.bf16.mxu0 0
        %1828 = vmatpush1.bf16.msra.mxu0 %v1809
        %1829 = vmatprep.subr.bf16.mxu0 0
        %1830 = vmatpush1.bf16.msra.mxu0 %v1808
        %1831 = vmatprep.subr.bf16.mxu0 0
        %1832 = vmatpush2.bf16.msra.mxu0 0
        %1833 = vmatprep.subr.bf16.mxu0 0
        %1834 = vmatpush2.bf16.msra.mxu0 0
        %1835 = vmatprep.subr.bf16.mxu0 0
        %1836 = vmatpush2.bf16.msra.mxu0 0
        %1837 = vmatprep.subr.bf16.mxu0 0
        %1838 = vmatpush2.bf16.msra.mxu0 0
        %1839 = vmatprep.subr.bf16.mxu0 0
        %1840 = vmatpush2.bf16.msra.mxu0 0
        %1841 = vmatprep.subr.bf16.mxu0 0
        %1842 = vmatpush2.bf16.msra.mxu0 0
        %1843 = vmatprep.subr.bf16.mxu0 0
        %1844 = vmatpush2.bf16.msra.mxu0 0
        %1845 = vmatprep.subr.bf16.mxu0 0
        %1846 = vmatpush2.bf16.msra.mxu0 0
        %1847 = vmatprep.mubr.bf16.mxu0 0
        %1848 = vmatmul.mubr.bf16.gmra.mxu0 %v1813
        %v1849 = vpop.f32.mrf.mxu0
        %v1850 = vadd.f32 %v1795, %v1849
        %v1851 = vpop.f32.mrf.mxu0
        %v1852 = vpop.f32.mrf.mxu0
        %v1853 = vpop.f32.mrf.mxu0
        %1854 = vdwg.mxu0
        %v1855 = vld [vmem:[%s12] sm:$0x1]
        %v1857 = vlaneseq
        %v1858 = vshrl.u32 %v1857, 7
        %v1859 = vsub.s32 0, %v1858
        %v1860 = vrot.slane %v1855, %v1859
        %v1862 = vadd.f32 %v1850, %v1860
        %v1863 = vld [vmem:[%s588] sm:$0xff]
        %v1864 = vadd.f32 %v1862, %v1863
        %1865 = vst.msk [vmem:[%s592] sm:$0xff] %vm626, %v1864
        %s1866 = sand.u32 %s344, 1
        %s1867 = scalar_lea.sflag [#allocation4], %s1866
        %s1868 = sand.u32 %s344, 1
        %s1869 = smul.addr %s1868, 8
        %s1870 = scalar_lea.vmem [#allocation3], %s1869
        %s1871 = sand.u32 %s370, 1
        %s1872 = scalar_lea.sflag [#allocation6], %s1871
        %s1873 = sand.u32 %s370, 1
        %s1874 = smul.addr %s1873, 8
        %s1875 = scalar_lea.vmem [#allocation5], %s1874
        %p1876 = scmp.lt.s32.totalorder %s33, 1
        %s1877 = scalar_select %p1876, %s33, 1
        %s1878 = smul.addr %s1877, 8
        %s1879 = scalar_lea.vmem %s15, %s1878
        // Predicated region
        $region73: #{transformer_decoder_layer.8} parent=71 // pred_check
          %p1880 = pneg %p354
        $region74: #{transformer_decoder_layer.8} parent=71 // pred_check_branch
          %1882 = sbr.rel (%p1880) target = $region76
        $region75: #{transformer_decoder_layer.8} parent=71 // pred_region
          %s1884 = ssub.s32 128, 128
          %1885 = vsyncadd %s1867, %s1884
          %s1886 = smul.addr %s33, 128
          %s1887 = scalar_lea.hbm %s13, %s1886
          %s1889 = sshll.u32 %s1870, 4
          %s1890 = int_to_ptr.vmem [resolvable:$true] %s1889
          %1892 = dma.vmem_to_hbm [thread:$0]  %s1890, 128, %s1887, %s1867
        $region76: #{transformer_decoder_layer.8} parent=71 // pred_fallthru
          _
        // Predicated region
        $region77: #{transformer_decoder_layer.8} parent=71 // pred_check
          %p1893 = pneg %p380
        $region78: #{transformer_decoder_layer.8} parent=71 // pred_check_branch
          %1895 = sbr.rel (%p1893) target = $region80
        $region79: #{transformer_decoder_layer.8} parent=71 // pred_region
          %s1897 = ssub.s32 128, 128
          %1898 = vsyncadd %s1872, %s1897
          %s1899 = smul.addr %s33, 128
          %s1900 = scalar_lea.hbm %s14, %s1899
          %s1902 = sshll.u32 %s1875, 4
          %s1903 = int_to_ptr.vmem [resolvable:$true] %s1902
          %1905 = dma.vmem_to_hbm [thread:$0]  %s1903, 128, %s1900, %s1872
        $region80: #{transformer_decoder_layer.8} parent=71 // pred_fallthru
          _
        // Predicated region
        $region81: #{transformer_decoder_layer.8} parent=71 // pred_check
          %p1906 = pneg %p406
        $region82: #{transformer_decoder_layer.8} parent=71 // pred_check_branch
          %1908 = sbr.rel (%p1906) target = $region84
        $region83: #{transformer_decoder_layer.8} parent=71 // pred_region
          _
        $region84: #{transformer_decoder_layer.8} parent=71 // pred_fallthru
          _
      $region72: #{transformer_decoder_layer.8} parent=5 // pred_fallthru
        _
      %p1909 = scmp.le.s32.totalorder 2, %s28
      // Predicated region
      $region85: #{transformer_decoder_layer.8} parent=5 // pred_check
        %p1910 = pneg %p1909
      $region86: #{transformer_decoder_layer.8} parent=5 // pred_check_branch
        %1912 = sbr.rel (%p1910) target = $region88
      $region87: #{transformer_decoder_layer.8} parent=5 // pred_region
        %s1913 = ssub.s32 %s28, 2
        // Predicated region
        $region89: #{transformer_decoder_layer.8} parent=87 // pred_check
          %p1914 = pneg %p360
        $region90: #{transformer_decoder_layer.8} parent=87 // pred_check_branch
          %1916 = sbr.rel (%p1914) target = $region92
        $region91: #{transformer_decoder_layer.8} parent=87 // pred_region
          %s1917 = sand.u32 %s345, 1
          %s1918 = scalar_lea.sflag [#allocation4], %s1917
          %s1919 = sand.u32 %s345, 1
          %s1920 = smul.addr %s1919, 8
          %s1921 = scalar_lea.vmem [#allocation3], %s1920
          %1922 = dma.done %s1918, 128
        $region92: #{transformer_decoder_layer.8} parent=87 // pred_fallthru
          _
        // Predicated region
        $region93: #{transformer_decoder_layer.8} parent=87 // pred_check
          %p1923 = pneg %p386
        $region94: #{transformer_decoder_layer.8} parent=87 // pred_check_branch
          %1925 = sbr.rel (%p1923) target = $region96
        $region95: #{transformer_decoder_layer.8} parent=87 // pred_region
          %s1926 = sand.u32 %s371, 1
          %s1927 = scalar_lea.sflag [#allocation6], %s1926
          %s1928 = sand.u32 %s371, 1
          %s1929 = smul.addr %s1928, 8
          %s1930 = scalar_lea.vmem [#allocation5], %s1929
          %1931 = dma.done %s1927, 128
        $region96: #{transformer_decoder_layer.8} parent=87 // pred_fallthru
          _
        // Predicated region
        $region97: #{transformer_decoder_layer.8} parent=87 // pred_check
          %p1932 = pneg %p412
        $region98: #{transformer_decoder_layer.8} parent=87 // pred_check_branch
          %1934 = sbr.rel (%p1932) target = $region100
        $region99: #{transformer_decoder_layer.8} parent=87 // pred_region
          %p1935 = scmp.lt.s32.totalorder %s34, 1
          %s1936 = scalar_select %p1935, %s34, 1
          %s1937 = smul.addr %s1936, 8
          %s1938 = scalar_lea.vmem %s15, %s1937
        $region100: #{transformer_decoder_layer.8} parent=87 // pred_fallthru
          _
      $region88: #{transformer_decoder_layer.8} parent=5 // pred_fallthru
        _
    $region6: #{transformer_decoder_layer.8} parent=1 // loop_footer
      %s32 = sadd.s32 1, %s28
    $region7: #{transformer_decoder_layer.8} parent=1 // loop_footer_branch
      %27 = sbr.rel target = $region3
    $region8: #{transformer_decoder_layer.8} parent=1 // loop_exit
      _
    %1939 = vsyncpa [#allocation4], 1
    %s1940 = scalar_lea.sflag [#allocation4], 1
    %1941 = vsyncpa %s1940, 1
    %1942 = vsyncpa [#allocation6], 1
    %s1943 = scalar_lea.sflag [#allocation6], 1
    %1944 = vsyncpa %s1943, 1

</llo_original>
